<compile_context>
chip_gen: v6e
topology: v6e:2x2x1
jax: 0.10.0
libtpu: 0.0.40
codegen_flags: <defaults>
</compile_context>

<pallas_src>
import functools

import jax
import jax.numpy as jnp
from jax.experimental import pallas as pl
from jax.experimental.pallas import tpu as pltpu

REDUCTION = 16
BN_EPS = 1e-5
LANES = 128


# ---------------------------------------------------------------------------
# Fused kernel
# ---------------------------------------------------------------------------

def fused_block_kernel(x_ref, wd_ref, bd_ref, w1_ref, b1_ref, w2_ref, b2_ref,
                       fc1_w_ref, fc1_b_ref, alpha_ref, fc2_w_ref, fc2_b_ref,
                       o_ref, xpad1_ref, xpad2_ref, *, H, W, Cin, C, Cs):
    """Full IceSEBasicBlock for one batch image (all intermediates in VMEM).

    x_ref    : (1, H, W, Cin)   input image (NHWC)
    wd_ref   : (Cin, Cp)        folded 1x1 downsample weight (Cp = pad(C, 128))
    bd_ref   : (1, Cp)
    w1_ref   : (9*Cin, Cp)      folded conv1 weight, im2col layout
    b1_ref   : (1, Cp)
    w2_ref   : (9*C, Cp)        folded conv2 weight, im2col layout
    b2_ref   : (1, Cp)
    fc1_w_ref: (Cp, R)   fc1_b_ref: (1, R)   alpha_ref: (1, 1) SMEM (PReLU)
    fc2_w_ref: (R, Cp)   fc2_b_ref: (1, Cp)
    o_ref    : (1, Cs, H*W)     channel-major, lane-dense (HW) output
    xpad1_ref: (H+2, W+2, Cin)  VMEM scratch: zero-padded conv1 input
    xpad2_ref: (H+2, W+2, C)    VMEM scratch: zero-padded conv2 input
    """
    HW = H * W

    def conv3x3_im2col(xpad_ref, img, cin, w_ref, b_ref):
        # Zero halo + write the image interior into the padded VMEM scratch.
        xpad_ref[...] = jnp.zeros_like(xpad_ref)
        xpad_ref[1:H + 1, 1:W + 1, :] = img
        # im2col: one (HW, 9*cin) patch matrix -> single MXU matmul.
        pieces = []
        for k in range(9):
            ky, kx = k // 3, k % 3
            pieces.append(xpad_ref[ky:ky + H, kx:kx + W, :].reshape(HW, cin))
        patches = jnp.concatenate(pieces, axis=-1)                  # (HW, 9*cin)
        y = jnp.dot(patches, w_ref[...], preferred_element_type=jnp.float32)
        return y + b_ref[...]                                       # (HW, Cp)

    x = x_ref[0].astype(jnp.float32)                                # (H, W, Cin)

    # residual = BN(Conv1x1(x)) -- single matmul, BN folded.
    residual = jnp.dot(x.reshape(HW, Cin), wd_ref[...],
                       preferred_element_type=jnp.float32) + bd_ref[...]

    # out1 = ReLU(BN(Conv3x3(x)))
    out1 = jnp.maximum(conv3x3_im2col(xpad1_ref, x, Cin, w1_ref, b1_ref), 0.0)

    # out2 = BN(Conv3x3(out1))  (only the real C channels feed conv2)
    out2 = conv3x3_im2col(xpad2_ref, out1[:, :C].reshape(H, W, C), C,
                          w2_ref, b2_ref)

    # Squeeze-and-Excite, fused (global average pool on the in-VMEM conv2 out).
    mean = jnp.sum(out2, axis=0, keepdims=True) * (1.0 / HW)        # (1, Cp)
    z1 = jnp.dot(mean, fc1_w_ref[...],
                 preferred_element_type=jnp.float32) + fc1_b_ref[...]
    alpha = alpha_ref[0, 0]
    z1 = jnp.where(z1 >= 0.0, z1, alpha * z1)                       # PReLU
    z2 = jnp.dot(z1, fc2_w_ref[...],
                 preferred_element_type=jnp.float32) + fc2_b_ref[...]
    gate = jax.nn.sigmoid(z2)                                       # (1, Cp)

    y = jnp.maximum(out2 * gate + residual, 0.0)                    # (HW, Cp)

    # Tile-aligned VMEM transpose -> channel-major layout so the HBM store is
    # lane-dense over HW and only the (sublane-rounded) real channels are
    # written back (16x less output traffic than storing the padded slab).
    y_t = jnp.transpose(y)                                          # (Cp, HW)
    o_ref[0] = y_t[:Cs, :].astype(o_ref.dtype)


# ---------------------------------------------------------------------------
# Wrapper (BN folding, channel padding, pallas_call plumbing)
# ---------------------------------------------------------------------------

def fold_bn(w, b, gamma, beta, mean, var, eps=BN_EPS):
    """Fold inference-mode BatchNorm into a conv whose weight has Cout last."""
    scale = gamma / jnp.sqrt(var + eps)
    return w * scale, (b - mean) * scale + beta


def ice_se_basic_block(x_nchw, p):
    """Pallas forward. x_nchw: (B, Cin, H, W) float32 -> (B, Cout, H, W)."""
    x = jnp.transpose(x_nchw, (0, 2, 3, 1)).astype(jnp.float32)     # -> NHWC
    B, H, W, Cin = x.shape
    C = p["w1"].shape[-1]
    R = p["fc1_w"].shape[0]
    Cp = ((C + LANES - 1) // LANES) * LANES      # matmul N-dim (lane) padding
    Cs = ((C + 7) // 8) * 8                      # output channel rows (sublane)
    HW = H * W

    w1f, b1f = fold_bn(p["w1"], p["b1"], p["g1"], p["be1"], p["m1"], p["v1"])
    w2f, b2f = fold_bn(p["w2"], p["b2"], p["g2"], p["be2"], p["m2"], p["v2"])
    wdf, bdf = fold_bn(p["wd"], jnp.zeros_like(p["bed"]),
                       p["gd"], p["bed"], p["md"], p["vd"])

    padc = lambda a: jnp.pad(a, [(0, 0)] * (a.ndim - 1) + [(0, Cp - a.shape[-1])])

    w1m = padc(w1f.reshape(9 * Cin, C))          # (9*Cin, Cp) im2col layout
    w2m = padc(w2f.reshape(9 * C, C))            # (9*C,  Cp)
    wdm = padc(wdf)                              # (Cin,  Cp)
    b1m = padc(b1f.reshape(1, C))
    b2m = padc(b2f.reshape(1, C))
    bdm = padc(bdf.reshape(1, C))
    fc1_wT = jnp.pad(p["fc1_w"].T, ((0, Cp - C), (0, 0)))   # (Cp, R)
    fc1_b = p["fc1_b"].reshape(1, R)
    fc2_wT = padc(p["fc2_w"].T)                  # (R, Cp)
    fc2_b = padc(p["fc2_b"].reshape(1, C))       # (1, Cp)
    alpha = jnp.asarray(p["alpha"], jnp.float32).reshape(1, 1)

    const = lambda b: (0, 0)
    out = pl.pallas_call(
        functools.partial(fused_block_kernel, H=H, W=W, Cin=Cin, C=C, Cs=Cs),
        out_shape=jax.ShapeDtypeStruct((B, Cs, HW), jnp.float32),
        grid=(B,),
        in_specs=[
            pl.BlockSpec((1, H, W, Cin), lambda b: (b, 0, 0, 0)),
            pl.BlockSpec((Cin, Cp), const),
            pl.BlockSpec((1, Cp), const),
            pl.BlockSpec((9 * Cin, Cp), const),
            pl.BlockSpec((1, Cp), const),
            pl.BlockSpec((9 * C, Cp), const),
            pl.BlockSpec((1, Cp), const),
            pl.BlockSpec((Cp, R), const),
            pl.BlockSpec((1, R), const),
            pl.BlockSpec(memory_space=pltpu.MemorySpace.SMEM),
            pl.BlockSpec((R, Cp), const),
            pl.BlockSpec((1, Cp), const),
        ],
        out_specs=pl.BlockSpec((1, Cs, HW), lambda b: (b, 0, 0)),
        scratch_shapes=[
            pltpu.VMEM((H + 2, W + 2, Cin), jnp.float32),
            pltpu.VMEM((H + 2, W + 2, C), jnp.float32),
        ],
        compiler_params=pltpu.CompilerParams(
            dimension_semantics=("parallel",)),
    )(x, wdm, bdm, w1m, b1m, w2m, b2m, fc1_wT, fc1_b, alpha, fc2_wT, fc2_b)

    if Cs != C:                                   # drop sublane rounding
        out = out[:, :C, :]
    return out.reshape(B, C, H, W)                # channel-major == NCHW, free


# ---------------------------------------------------------------------------
# Parameter setup (deterministic) and pure-JAX reference
# ---------------------------------------------------------------------------

def make_params(key, inplanes, planes, reduction=REDUCTION):
    ks = jax.random.split(key, 16)
    n = lambda k, s, sc=0.1: (sc * jax.random.normal(k, s)).astype(jnp.float32)
    u = lambda k, s: jax.random.uniform(k, s, jnp.float32, 0.5, 1.5)
    p = {}
    # conv1 (3x3) + bn1
    p["w1"] = n(ks[0], (3, 3, inplanes, planes))
    p["b1"] = n(ks[1], (planes,))
    p["g1"], p["be1"] = u(ks[2], (planes,)), n(ks[3], (planes,))
    p["m1"], p["v1"] = n(ks[4], (planes,)), u(ks[5], (planes,))
    # conv2 (3x3) + bn2
    p["w2"] = n(ks[6], (3, 3, planes, planes))
    p["b2"] = n(ks[7], (planes,))
    p["g2"], p["be2"] = u(ks[8], (planes,)), n(ks[9], (planes,))
    p["m2"], p["v2"] = n(ks[10], (planes,)), u(ks[11], (planes,))
    # downsample: 1x1 conv (no bias) + bn
    p["wd"] = n(ks[12], (inplanes, planes))
    p["gd"], p["bed"] = u(ks[13], (planes,)), n(ks[14], (planes,))
    kd = jax.random.split(ks[15], 6)
    p["md"], p["vd"] = n(kd[0], (planes,)), u(kd[1], (planes,))
    # SE: Linear(planes, reduction) -> PReLU -> Linear(reduction, planes) -> Sigmoid
    p["fc1_w"] = n(kd[2], (reduction, planes))   # PyTorch Linear layout (out, in)
    p["fc1_b"] = n(kd[3], (reduction,))
    p["fc2_w"] = n(kd[4], (planes, reduction))
    p["fc2_b"] = n(kd[5], (planes,))
    p["alpha"] = jnp.float32(0.25)               # PReLU default init
    return p


def reference_forward(x_nchw, p):
    """Pure-JAX reference (inference-mode BN) for correctness checking."""
    x = jnp.transpose(x_nchw, (0, 2, 3, 1))

    def conv(x, w, b=None):
        y = jax.lax.conv_general_dilated(
            x, w, (1, 1), "SAME", dimension_numbers=("NHWC", "HWIO", "NHWC"))
        return y if b is None else y + b

    def bn(x, g, be, m, v):
        return (x - m) / jnp.sqrt(v + BN_EPS) * g + be

    residual = bn(conv(x, p["wd"][None, None]), p["gd"], p["bed"], p["md"], p["vd"])
    out = jax.nn.relu(bn(conv(x, p["w1"], p["b1"]),
                         p["g1"], p["be1"], p["m1"], p["v1"]))
    out = bn(conv(out, p["w2"], p["b2"]), p["g2"], p["be2"], p["m2"], p["v2"])

    y = jnp.mean(out, axis=(1, 2))                          # (B, C)
    z1 = y @ p["fc1_w"].T + p["fc1_b"]
    z1 = jnp.where(z1 >= 0, z1, p["alpha"] * z1)
    z2 = z1 @ p["fc2_w"].T + p["fc2_b"]
    gate = jax.nn.sigmoid(z2)[:, None, None, :]
    out = jax.nn.relu(out * gate + residual)
    return jnp.transpose(out, (0, 3, 1, 2))


if __name__ == "__main__":
    B, Cin, Cout, H, W = 2, 4, 8, 16, 16
    key = jax.random.PRNGKey(0)
    kx, kp = jax.random.split(key)
    x = jax.random.normal(kx, (B, Cin, H, W), jnp.float32)
    params = make_params(kp, Cin, Cout, REDUCTION)

    out = jax.jit(ice_se_basic_block)(x, params)
    out = jax.block_until_ready(out)

    ref = reference_forward(x, params)
    assert out.shape == (B, Cout, H, W), out.shape
    err = float(jnp.max(jnp.abs(out - ref)))
    assert jnp.allclose(out, ref, atol=1e-4, rtol=1e-4), err
    print("KERNEL_OK")
</pallas_src>

<mosaic_0001>
module attributes {stable_mosaic.version = 11 : i64} {
  func.func @fused_block_kernel(%arg0: i32, %arg1: memref<1x16x16x4xf32, #tpu.memory_space<vmem>>, %arg2: memref<4x128xf32, #tpu.memory_space<vmem>>, %arg3: memref<1x128xf32, #tpu.memory_space<vmem>>, %arg4: memref<36x128xf32, #tpu.memory_space<vmem>>, %arg5: memref<1x128xf32, #tpu.memory_space<vmem>>, %arg6: memref<72x128xf32, #tpu.memory_space<vmem>>, %arg7: memref<1x128xf32, #tpu.memory_space<vmem>>, %arg8: memref<128x16xf32, #tpu.memory_space<vmem>>, %arg9: memref<1x16xf32, #tpu.memory_space<vmem>>, %arg10: memref<1x1xf32, #tpu.memory_space<smem>>, %arg11: memref<16x128xf32, #tpu.memory_space<vmem>>, %arg12: memref<1x128xf32, #tpu.memory_space<vmem>>, %arg13: memref<1x8x256xf32, #tpu.memory_space<vmem>>, %arg14: memref<18x18x4xf32, #tpu.memory_space<vmem>>, %arg15: memref<18x18x8xf32, #tpu.memory_space<vmem>>) attributes {dimension_semantics = [#tpu.dimension_semantics<parallel>], iteration_bounds = array<i64: 2>, scalar_prefetch = 0 : i64, scratch_operands = 2 : i64, tpu.core_type = #tpu.core_type<tc>, window_params = [{transform_indices = @transform_0, window_bounds = array<i64: 1, 16, 16, 4>}, {pipeline_mode = #tpu.pipeline_mode<synchronous>, transform_indices = @transform_1, window_bounds = array<i64: 4, 128>}, {pipeline_mode = #tpu.pipeline_mode<synchronous>, transform_indices = @transform_2, window_bounds = array<i64: 1, 128>}, {pipeline_mode = #tpu.pipeline_mode<synchronous>, transform_indices = @transform_3, window_bounds = array<i64: 36, 128>}, {pipeline_mode = #tpu.pipeline_mode<synchronous>, transform_indices = @transform_4, window_bounds = array<i64: 1, 128>}, {pipeline_mode = #tpu.pipeline_mode<synchronous>, transform_indices = @transform_5, window_bounds = array<i64: 72, 128>}, {pipeline_mode = #tpu.pipeline_mode<synchronous>, transform_indices = @transform_6, window_bounds = array<i64: 1, 128>}, {pipeline_mode = #tpu.pipeline_mode<synchronous>, transform_indices = @transform_7, window_bounds = array<i64: 128, 16>}, {pipeline_mode = #tpu.pipeline_mode<synchronous>, transform_indices = @transform_8, window_bounds = array<i64: 1, 16>}, {transform_indices = @transform_9, window_bounds = array<i64: 1, 1>}, {pipeline_mode = #tpu.pipeline_mode<synchronous>, transform_indices = @transform_10, window_bounds = array<i64: 16, 128>}, {pipeline_mode = #tpu.pipeline_mode<synchronous>, transform_indices = @transform_11, window_bounds = array<i64: 1, 128>}, {transform_indices = @transform_12, window_bounds = array<i64: 1, 8, 256>}]} {
    %c0 = arith.constant 0 : index
    %c0_0 = arith.constant 0 : index
    %c0_1 = arith.constant 0 : index
    %c0_2 = arith.constant 0 : index
    %0 = vector.load %arg1[%c0, %c0_0, %c0_1, %c0_2] : memref<1x16x16x4xf32, #tpu.memory_space<vmem>>, vector<1x16x16x4xf32>
    %1 = vector.shape_cast %0 : vector<1x16x16x4xf32> to vector<16x16x4xf32>
    %2 = vector.shape_cast %1 : vector<16x16x4xf32> to vector<256x4xf32>
    %c0_3 = arith.constant 0 : index
    %c0_4 = arith.constant 0 : index
    %3 = vector.load %arg2[%c0_3, %c0_4] : memref<4x128xf32, #tpu.memory_space<vmem>>, vector<4x128xf32>
    %cst = arith.constant dense<0.000000e+00> : vector<256x128xf32>
    %4 = tpu.matmul %2, %3, %cst {dimension_numbers = #tpu.dot_dimension_numbers<[1], [0], [0], [1], [0, 0, 1, 1], [], []>} : vector<256x4xf32>, vector<4x128xf32>, vector<256x128xf32> -> vector<256x128xf32>
    %c0_5 = arith.constant 0 : index
    %c0_6 = arith.constant 0 : index
    %5 = vector.load %arg3[%c0_5, %c0_6] : memref<1x128xf32, #tpu.memory_space<vmem>>, vector<1x128xf32>
    %6 = vector.broadcast %5 : vector<1x128xf32> to vector<256x128xf32>
    %7 = arith.addf %4, %6 : vector<256x128xf32>
    %cst_7 = arith.constant 0.000000e+00 : f32
    %8 = vector.broadcast %cst_7 : f32 to vector<18x18x4xf32>
    %c0_8 = arith.constant 0 : index
    %c0_9 = arith.constant 0 : index
    %c0_10 = arith.constant 0 : index
    %9 = vector.load %arg14[%c0_8, %c0_9, %c0_10] : memref<18x18x4xf32, #tpu.memory_space<vmem>>, vector<18x18x4xf32>
    tpu.vector_store %arg14[%c0_8, %c0_9, %c0_10], %8 {strides = array<i32>} : memref<18x18x4xf32, #tpu.memory_space<vmem>>, vector<18x18x4xf32>,
    %c1 = arith.constant 1 : index
    %c1_11 = arith.constant 1 : index
    %c0_12 = arith.constant 0 : index
    %10 = vector.load %arg14[%c1, %c1_11, %c0_12] : memref<18x18x4xf32, #tpu.memory_space<vmem>>, vector<16x16x4xf32>
    tpu.vector_store %arg14[%c1, %c1_11, %c0_12], %1 {strides = array<i32>} : memref<18x18x4xf32, #tpu.memory_space<vmem>>, vector<16x16x4xf32>,
    %c0_13 = arith.constant 0 : index
    %c0_14 = arith.constant 0 : index
    %c0_15 = arith.constant 0 : index
    %11 = vector.load %arg14[%c0_13, %c0_14, %c0_15] : memref<18x18x4xf32, #tpu.memory_space<vmem>>, vector<16x16x4xf32>
    %12 = vector.shape_cast %11 : vector<16x16x4xf32> to vector<256x4xf32>
    %c0_16 = arith.constant 0 : index
    %c1_17 = arith.constant 1 : index
    %c0_18 = arith.constant 0 : index
    %13 = vector.load %arg14[%c0_16, %c1_17, %c0_18] : memref<18x18x4xf32, #tpu.memory_space<vmem>>, vector<16x16x4xf32>
    %14 = vector.shape_cast %13 : vector<16x16x4xf32> to vector<256x4xf32>
    %c0_19 = arith.constant 0 : index
    %c2 = arith.constant 2 : index
    %c0_20 = arith.constant 0 : index
    %15 = vector.load %arg14[%c0_19, %c2, %c0_20] : memref<18x18x4xf32, #tpu.memory_space<vmem>>, vector<16x16x4xf32>
    %16 = vector.shape_cast %15 : vector<16x16x4xf32> to vector<256x4xf32>
    %c1_21 = arith.constant 1 : index
    %c0_22 = arith.constant 0 : index
    %c0_23 = arith.constant 0 : index
    %17 = vector.load %arg14[%c1_21, %c0_22, %c0_23] : memref<18x18x4xf32, #tpu.memory_space<vmem>>, vector<16x16x4xf32>
    %18 = vector.shape_cast %17 : vector<16x16x4xf32> to vector<256x4xf32>
    %c1_24 = arith.constant 1 : index
    %c1_25 = arith.constant 1 : index
    %c0_26 = arith.constant 0 : index
    %19 = vector.load %arg14[%c1_24, %c1_25, %c0_26] : memref<18x18x4xf32, #tpu.memory_space<vmem>>, vector<16x16x4xf32>
    %20 = vector.shape_cast %19 : vector<16x16x4xf32> to vector<256x4xf32>
    %c1_27 = arith.constant 1 : index
    %c2_28 = arith.constant 2 : index
    %c0_29 = arith.constant 0 : index
    %21 = vector.load %arg14[%c1_27, %c2_28, %c0_29] : memref<18x18x4xf32, #tpu.memory_space<vmem>>, vector<16x16x4xf32>
    %22 = vector.shape_cast %21 : vector<16x16x4xf32> to vector<256x4xf32>
    %c2_30 = arith.constant 2 : index
    %c0_31 = arith.constant 0 : index
    %c0_32 = arith.constant 0 : index
    %23 = vector.load %arg14[%c2_30, %c0_31, %c0_32] : memref<18x18x4xf32, #tpu.memory_space<vmem>>, vector<16x16x4xf32>
    %24 = vector.shape_cast %23 : vector<16x16x4xf32> to vector<256x4xf32>
    %c2_33 = arith.constant 2 : index
    %c1_34 = arith.constant 1 : index
    %c0_35 = arith.constant 0 : index
    %25 = vector.load %arg14[%c2_33, %c1_34, %c0_35] : memref<18x18x4xf32, #tpu.memory_space<vmem>>, vector<16x16x4xf32>
    %26 = vector.shape_cast %25 : vector<16x16x4xf32> to vector<256x4xf32>
    %c2_36 = arith.constant 2 : index
    %c2_37 = arith.constant 2 : index
    %c0_38 = arith.constant 0 : index
    %27 = vector.load %arg14[%c2_36, %c2_37, %c0_38] : memref<18x18x4xf32, #tpu.memory_space<vmem>>, vector<16x16x4xf32>
    %28 = vector.shape_cast %27 : vector<16x16x4xf32> to vector<256x4xf32>
    %29 = tpu.concatenate %12, %14, %16, %18, %20, %22, %24, %26, %28 in 1 : vector<256x4xf32>, vector<256x4xf32>, vector<256x4xf32>, vector<256x4xf32>, vector<256x4xf32>, vector<256x4xf32>, vector<256x4xf32>, vector<256x4xf32>, vector<256x4xf32> -> vector<256x36xf32>
    %c0_39 = arith.constant 0 : index
    %c0_40 = arith.constant 0 : index
    %30 = vector.load %arg4[%c0_39, %c0_40] : memref<36x128xf32, #tpu.memory_space<vmem>>, vector<36x128xf32>
    %cst_41 = arith.constant dense<0.000000e+00> : vector<256x128xf32>
    %31 = tpu.matmul %29, %30, %cst_41 {dimension_numbers = #tpu.dot_dimension_numbers<[1], [0], [0], [1], [0, 0, 1, 1], [], []>} : vector<256x36xf32>, vector<36x128xf32>, vector<256x128xf32> -> vector<256x128xf32>
    %c0_42 = arith.constant 0 : index
    %c0_43 = arith.constant 0 : index
    %32 = vector.load %arg5[%c0_42, %c0_43] : memref<1x128xf32, #tpu.memory_space<vmem>>, vector<1x128xf32>
    %33 = vector.broadcast %32 : vector<1x128xf32> to vector<256x128xf32>
    %34 = arith.addf %31, %33 : vector<256x128xf32>
    %cst_44 = arith.constant 0.000000e+00 : f32
    %35 = vector.broadcast %cst_44 : f32 to vector<256x128xf32>
    %36 = arith.maximumf %34, %35 : vector<256x128xf32>
    %37 = vector.extract_strided_slice %36 {offsets = [0, 0], sizes = [256, 8], strides = [1, 1]} : vector<256x128xf32> to vector<256x8xf32>
    %38 = vector.shape_cast %37 : vector<256x8xf32> to vector<16x16x8xf32>
    %cst_45 = arith.constant 0.000000e+00 : f32
    %39 = vector.broadcast %cst_45 : f32 to vector<18x18x8xf32>
    %c0_46 = arith.constant 0 : index
    %c0_47 = arith.constant 0 : index
    %c0_48 = arith.constant 0 : index
    %40 = vector.load %arg15[%c0_46, %c0_47, %c0_48] : memref<18x18x8xf32, #tpu.memory_space<vmem>>, vector<18x18x8xf32>
    tpu.vector_store %arg15[%c0_46, %c0_47, %c0_48], %39 {strides = array<i32>} : memref<18x18x8xf32, #tpu.memory_space<vmem>>, vector<18x18x8xf32>,
    %c1_49 = arith.constant 1 : index
    %c1_50 = arith.constant 1 : index
    %c0_51 = arith.constant 0 : index
    %41 = vector.load %arg15[%c1_49, %c1_50, %c0_51] : memref<18x18x8xf32, #tpu.memory_space<vmem>>, vector<16x16x8xf32>
    tpu.vector_store %arg15[%c1_49, %c1_50, %c0_51], %38 {strides = array<i32>} : memref<18x18x8xf32, #tpu.memory_space<vmem>>, vector<16x16x8xf32>,
    %c0_52 = arith.constant 0 : index
    %c0_53 = arith.constant 0 : index
    %c0_54 = arith.constant 0 : index
    %42 = vector.load %arg15[%c0_52, %c0_53, %c0_54] : memref<18x18x8xf32, #tpu.memory_space<vmem>>, vector<16x16x8xf32>
    %43 = vector.shape_cast %42 : vector<16x16x8xf32> to vector<256x8xf32>
    %c0_55 = arith.constant 0 : index
    %c1_56 = arith.constant 1 : index
    %c0_57 = arith.constant 0 : index
    %44 = vector.load %arg15[%c0_55, %c1_56, %c0_57] : memref<18x18x8xf32, #tpu.memory_space<vmem>>, vector<16x16x8xf32>
    %45 = vector.shape_cast %44 : vector<16x16x8xf32> to vector<256x8xf32>
    %c0_58 = arith.constant 0 : index
    %c2_59 = arith.constant 2 : index
    %c0_60 = arith.constant 0 : index
    %46 = vector.load %arg15[%c0_58, %c2_59, %c0_60] : memref<18x18x8xf32, #tpu.memory_space<vmem>>, vector<16x16x8xf32>
    %47 = vector.shape_cast %46 : vector<16x16x8xf32> to vector<256x8xf32>
    %c1_61 = arith.constant 1 : index
    %c0_62 = arith.constant 0 : index
    %c0_63 = arith.constant 0 : index
    %48 = vector.load %arg15[%c1_61, %c0_62, %c0_63] : memref<18x18x8xf32, #tpu.memory_space<vmem>>, vector<16x16x8xf32>
    %49 = vector.shape_cast %48 : vector<16x16x8xf32> to vector<256x8xf32>
    %c1_64 = arith.constant 1 : index
    %c1_65 = arith.constant 1 : index
    %c0_66 = arith.constant 0 : index
    %50 = vector.load %arg15[%c1_64, %c1_65, %c0_66] : memref<18x18x8xf32, #tpu.memory_space<vmem>>, vector<16x16x8xf32>
    %51 = vector.shape_cast %50 : vector<16x16x8xf32> to vector<256x8xf32>
    %c1_67 = arith.constant 1 : index
    %c2_68 = arith.constant 2 : index
    %c0_69 = arith.constant 0 : index
    %52 = vector.load %arg15[%c1_67, %c2_68, %c0_69] : memref<18x18x8xf32, #tpu.memory_space<vmem>>, vector<16x16x8xf32>
    %53 = vector.shape_cast %52 : vector<16x16x8xf32> to vector<256x8xf32>
    %c2_70 = arith.constant 2 : index
    %c0_71 = arith.constant 0 : index
    %c0_72 = arith.constant 0 : index
    %54 = vector.load %arg15[%c2_70, %c0_71, %c0_72] : memref<18x18x8xf32, #tpu.memory_space<vmem>>, vector<16x16x8xf32>
    %55 = vector.shape_cast %54 : vector<16x16x8xf32> to vector<256x8xf32>
    %c2_73 = arith.constant 2 : index
    %c1_74 = arith.constant 1 : index
    %c0_75 = arith.constant 0 : index
    %56 = vector.load %arg15[%c2_73, %c1_74, %c0_75] : memref<18x18x8xf32, #tpu.memory_space<vmem>>, vector<16x16x8xf32>
    %57 = vector.shape_cast %56 : vector<16x16x8xf32> to vector<256x8xf32>
    %c2_76 = arith.constant 2 : index
    %c2_77 = arith.constant 2 : index
    %c0_78 = arith.constant 0 : index
    %58 = vector.load %arg15[%c2_76, %c2_77, %c0_78] : memref<18x18x8xf32, #tpu.memory_space<vmem>>, vector<16x16x8xf32>
    %59 = vector.shape_cast %58 : vector<16x16x8xf32> to vector<256x8xf32>
    %60 = tpu.concatenate %43, %45, %47, %49, %51, %53, %55, %57, %59 in 1 : vector<256x8xf32>, vector<256x8xf32>, vector<256x8xf32>, vector<256x8xf32>, vector<256x8xf32>, vector<256x8xf32>, vector<256x8xf32>, vector<256x8xf32>, vector<256x8xf32> -> vector<256x72xf32>
    %c0_79 = arith.constant 0 : index
    %c0_80 = arith.constant 0 : index
    %61 = vector.load %arg6[%c0_79, %c0_80] : memref<72x128xf32, #tpu.memory_space<vmem>>, vector<72x128xf32>
    %cst_81 = arith.constant dense<0.000000e+00> : vector<256x128xf32>
    %62 = tpu.matmul %60, %61, %cst_81 {dimension_numbers = #tpu.dot_dimension_numbers<[1], [0], [0], [1], [0, 0, 1, 1], [], []>} : vector<256x72xf32>, vector<72x128xf32>, vector<256x128xf32> -> vector<256x128xf32>
    %c0_82 = arith.constant 0 : index
    %c0_83 = arith.constant 0 : index
    %63 = vector.load %arg7[%c0_82, %c0_83] : memref<1x128xf32, #tpu.memory_space<vmem>>, vector<1x128xf32>
    %64 = vector.broadcast %63 : vector<1x128xf32> to vector<256x128xf32>
    %65 = arith.addf %62, %64 : vector<256x128xf32>
    %cst_84 = arith.constant dense<0.000000e+00> : vector<128xf32>
    %66 = vector.multi_reduction <add>, %65, %cst_84 [0] : vector<256x128xf32> to vector<128xf32>
    %67 = vector.shape_cast %66 : vector<128xf32> to vector<1x128xf32>
    %cst_85 = arith.constant 3.906250e-03 : f32
    %68 = vector.broadcast %cst_85 : f32 to vector<1x128xf32>
    %69 = arith.mulf %67, %68 : vector<1x128xf32>
    %c0_86 = arith.constant 0 : index
    %c0_87 = arith.constant 0 : index
    %70 = vector.load %arg8[%c0_86, %c0_87] : memref<128x16xf32, #tpu.memory_space<vmem>>, vector<128x16xf32>
    %cst_88 = arith.constant dense<0.000000e+00> : vector<1x16xf32>
    %71 = tpu.matmul %69, %70, %cst_88 {dimension_numbers = #tpu.dot_dimension_numbers<[1], [0], [0], [1], [0, 0, 1, 1], [], []>} : vector<1x128xf32>, vector<128x16xf32>, vector<1x16xf32> -> vector<1x16xf32>
    %c0_89 = arith.constant 0 : index
    %c0_90 = arith.constant 0 : index
    %72 = vector.load %arg9[%c0_89, %c0_90] : memref<1x16xf32, #tpu.memory_space<vmem>>, vector<1x16xf32>
    %73 = arith.addf %71, %72 : vector<1x16xf32>
    %c0_91 = arith.constant 0 : index
    %c0_92 = arith.constant 0 : index
    %74 = memref.load %arg10[%c0_91, %c0_92] : memref<1x1xf32, #tpu.memory_space<smem>>
    %cst_93 = arith.constant 0.000000e+00 : f32
    %75 = vector.broadcast %cst_93 : f32 to vector<1x16xf32>
    %76 = arith.cmpf oge, %73, %75 : vector<1x16xf32>
    %77 = vector.broadcast %74 : f32 to vector<1x16xf32>
    %78 = arith.mulf %77, %73 : vector<1x16xf32>
    %79 = arith.select %76, %73, %78 : vector<1x16xi1>, vector<1x16xf32>
    %c0_94 = arith.constant 0 : index
    %c0_95 = arith.constant 0 : index
    %80 = vector.load %arg11[%c0_94, %c0_95] : memref<16x128xf32, #tpu.memory_space<vmem>>, vector<16x128xf32>
    %cst_96 = arith.constant dense<0.000000e+00> : vector<1x128xf32>
    %81 = tpu.matmul %79, %80, %cst_96 {dimension_numbers = #tpu.dot_dimension_numbers<[1], [0], [0], [1], [0, 0, 1, 1], [], []>} : vector<1x16xf32>, vector<16x128xf32>, vector<1x128xf32> -> vector<1x128xf32>
    %c0_97 = arith.constant 0 : index
    %c0_98 = arith.constant 0 : index
    %82 = vector.load %arg12[%c0_97, %c0_98] : memref<1x128xf32, #tpu.memory_space<vmem>>, vector<1x128xf32>
    %83 = arith.addf %81, %82 : vector<1x128xf32>
    %84 = arith.negf %83 : vector<1x128xf32>
    %85 = math.exp %84 : vector<1x128xf32>
    %cst_99 = arith.constant 1.000000e+00 : f32
    %86 = vector.broadcast %cst_99 : f32 to vector<1x128xf32>
    %87 = arith.addf %86, %85 : vector<1x128xf32>
    %88 = arith.divf %86, %87 : vector<1x128xf32>
    %89 = vector.broadcast %88 : vector<1x128xf32> to vector<256x128xf32>
    %90 = arith.mulf %65, %89 : vector<256x128xf32>
    %91 = arith.addf %90, %7 : vector<256x128xf32>
    %cst_100 = arith.constant 0.000000e+00 : f32
    %92 = vector.broadcast %cst_100 : f32 to vector<256x128xf32>
    %93 = arith.maximumf %91, %92 : vector<256x128xf32>
    %94 = tpu.transpose %93, [1, 0] : vector<256x128xf32> -> vector<128x256xf32>
    %95 = vector.extract_strided_slice %94 {offsets = [0, 0], sizes = [8, 256], strides = [1, 1]} : vector<128x256xf32> to vector<8x256xf32>
    %c0_101 = arith.constant 0 : index
    %c0_102 = arith.constant 0 : index
    %c0_103 = arith.constant 0 : index
    %96 = vector.load %arg13[%c0_101, %c0_102, %c0_103] : memref<1x8x256xf32, #tpu.memory_space<vmem>>, vector<1x8x256xf32>
    %97 = vector.shape_cast %96 : vector<1x8x256xf32> to vector<8x256xf32>
    %98 = vector.shape_cast %95 : vector<8x256xf32> to vector<1x8x256xf32>
    tpu.vector_store %arg13[%c0_101, %c0_102, %c0_103], %98 {strides = array<i32>} : memref<1x8x256xf32, #tpu.memory_space<vmem>>, vector<1x8x256xf32>,
    return
  }
  func.func @transform_0(%arg0: i32) -> (i32, i32, i32, i32) {
    %c0_i32 = arith.constant 0 : i32
    %c0_i32_0 = arith.constant 0 : i32
    %c0_i32_1 = arith.constant 0 : i32
    %c0_i32_2 = arith.constant 0 : i32
    return %arg0, %c0_i32, %c0_i32_0, %c0_i32_1 : i32, i32, i32, i32
  }
  func.func @transform_1(%arg0: i32) -> (i32, i32) {
    %c0_i32 = arith.constant 0 : i32
    %c0_i32_0 = arith.constant 0 : i32
    %c0_i32_1 = arith.constant 0 : i32
    return %c0_i32, %c0_i32_0 : i32, i32
  }
  func.func @transform_2(%arg0: i32) -> (i32, i32) {
    %c0_i32 = arith.constant 0 : i32
    %c0_i32_0 = arith.constant 0 : i32
    %c0_i32_1 = arith.constant 0 : i32
    return %c0_i32, %c0_i32_0 : i32, i32
  }
  func.func @transform_3(%arg0: i32) -> (i32, i32) {
    %c0_i32 = arith.constant 0 : i32
    %c0_i32_0 = arith.constant 0 : i32
    %c0_i32_1 = arith.constant 0 : i32
    return %c0_i32, %c0_i32_0 : i32, i32
  }
  func.func @transform_4(%arg0: i32) -> (i32, i32) {
    %c0_i32 = arith.constant 0 : i32
    %c0_i32_0 = arith.constant 0 : i32
    %c0_i32_1 = arith.constant 0 : i32
    return %c0_i32, %c0_i32_0 : i32, i32
  }
  func.func @transform_5(%arg0: i32) -> (i32, i32) {
    %c0_i32 = arith.constant 0 : i32
    %c0_i32_0 = arith.constant 0 : i32
    %c0_i32_1 = arith.constant 0 : i32
    return %c0_i32, %c0_i32_0 : i32, i32
  }
  func.func @transform_6(%arg0: i32) -> (i32, i32) {
    %c0_i32 = arith.constant 0 : i32
    %c0_i32_0 = arith.constant 0 : i32
    %c0_i32_1 = arith.constant 0 : i32
    return %c0_i32, %c0_i32_0 : i32, i32
  }
  func.func @transform_7(%arg0: i32) -> (i32, i32) {
    %c0_i32 = arith.constant 0 : i32
    %c0_i32_0 = arith.constant 0 : i32
    %c0_i32_1 = arith.constant 0 : i32
    return %c0_i32, %c0_i32_0 : i32, i32
  }
  func.func @transform_8(%arg0: i32) -> (i32, i32) {
    %c0_i32 = arith.constant 0 : i32
    %c0_i32_0 = arith.constant 0 : i32
    %c0_i32_1 = arith.constant 0 : i32
    return %c0_i32, %c0_i32_0 : i32, i32
  }
  func.func @transform_9(%arg0: i32) -> (i32, i32) {
    %c0_i32 = arith.constant 0 : i32
    %c0_i32_0 = arith.constant 0 : i32
    %c0_i32_1 = arith.constant 0 : i32
    return %c0_i32, %c0_i32_0 : i32, i32
  }
  func.func @transform_10(%arg0: i32) -> (i32, i32) {
    %c0_i32 = arith.constant 0 : i32
    %c0_i32_0 = arith.constant 0 : i32
    %c0_i32_1 = arith.constant 0 : i32
    return %c0_i32, %c0_i32_0 : i32, i32
  }
  func.func @transform_11(%arg0: i32) -> (i32, i32) {
    %c0_i32 = arith.constant 0 : i32
    %c0_i32_0 = arith.constant 0 : i32
    %c0_i32_1 = arith.constant 0 : i32
    return %c0_i32, %c0_i32_0 : i32, i32
  }
  func.func @transform_12(%arg0: i32) -> (i32, i32, i32) {
    %c0_i32 = arith.constant 0 : i32
    %c0_i32_0 = arith.constant 0 : i32
    %c0_i32_1 = arith.constant 0 : i32
    return %arg0, %c0_i32, %c0_i32_0 : i32, i32, i32
  }
}

</mosaic_0001>

<llo_original>
// kernel: ice_se_basic_block.1
$region0: #{ice_se_basic_block.1}
  #allocation0 [shape = 'u32[]', space=smem, size = 0x4, offset = 0x4, fixed_abs, tag = 'smem constant byte address 0x4 - core index']
  #allocation1 [shape = 'u32[144,128]{1,0:T(1,128)}', space=vmem, size = 0x12000, scoped, tag = 'internal scratch']
  #allocation2 [shape = 'f32[18,18,4]{2,1,0:T(8,128)}', space=vmem, size = 0x36000, scoped, tag = 'scratch operand']
  #allocation3 [shape = 'f32[18,18,8]{2,1,0:T(8,128)}', space=vmem, size = 0x36000, scoped, tag = 'scratch operand']
  #allocation4 [shape = 'f32[1,1]{1,0:T(1,128)S(6)}', space=smem, size = 0x200, scoped, tag = 'scoped memory for ice_se_basic_block.1']
  %s0 = inlined_call_operand.vmem [shape: f32[2,16,16,4], index: 0, kind: input, shape index: {}]
  %s1 = inlined_call_operand.vmem [shape: f32[4,128], index: 1, kind: input, shape index: {}]
  %s2 = inlined_call_operand.vmem [shape: f32[1,128], index: 2, kind: input, shape index: {}]
  %s3 = inlined_call_operand.vmem [shape: f32[36,128], index: 3, kind: input, shape index: {}]
  %s4 = inlined_call_operand.vmem [shape: f32[1,128], index: 4, kind: input, shape index: {}]
  %s5 = inlined_call_operand.vmem [shape: f32[72,128], index: 5, kind: input, shape index: {}]
  %s6 = inlined_call_operand.vmem [shape: f32[1,128], index: 6, kind: input, shape index: {}]
  %s7 = inlined_call_operand.vmem [shape: f32[128,16], index: 7, kind: input, shape index: {}]
  %s8 = inlined_call_operand.vmem [shape: f32[1,16], index: 8, kind: input, shape index: {}]
  %s9 = inlined_call_operand.<no memory space> [shape: f32[1,1], index: 9, kind: input, shape index: {}]
  %s10 = inlined_call_operand.vmem [shape: f32[16,128], index: 10, kind: input, shape index: {}]
  %s11 = inlined_call_operand.vmem [shape: f32[1,128], index: 11, kind: input, shape index: {}]
  %s12 = inlined_call_operand.vmem [shape: f32[2,8,256], index: 12, kind: output, shape index: {}]
  %s13 = sld [smem:[#allocation0]]
  $region81: #{ice_se_basic_block.1} parent=0
    _
  %s15 = ssub.s32 1, %s13
  %s16 = scalar_select 0, %s15, %s13
  %17 = sst [smem:[#allocation4]] %s9
  loop: start=0, step=1, limit=4
  $region2: #{ice_se_basic_block.1} parent=0 // loop_pre_header
    _
  $region3: #{ice_se_basic_block.1} parent=0 // loop_header
    %s19 = sphi 0, %s23
    %p20 = scmp.ge.s32.totalorder %s19, 4
    %s29 = sphi 0, %s31
    %s32 = sphi 0, %s29
    %s33 = sphi 0, %s32
    %s49 = sphi 0, %s33
    %s53 = sphi 0, %s53
    %s55 = sphi 0, %s53
    %s56 = sphi 0, %s55
    %s70 = sphi 0, %s56
    %s74 = sphi 0, %s74
    %s76 = sphi 0, %s74
    %s77 = sphi 0, %s76
    %s91 = sphi 0, %s77
    %s95 = sphi 0, %s95
    %s97 = sphi 0, %s95
    %s98 = sphi 0, %s97
    %s112 = sphi 0, %s98
    %s116 = sphi 0, %s116
    %s118 = sphi 0, %s116
    %s119 = sphi 0, %s118
    %s133 = sphi 0, %s119
    %s137 = sphi 0, %s137
    %s139 = sphi 0, %s137
    %s140 = sphi 0, %s139
    %s154 = sphi 0, %s140
    %s158 = sphi 0, %s158
    %s160 = sphi 0, %s158
    %s161 = sphi 0, %s160
    %s175 = sphi 0, %s161
    %s179 = sphi 0, %s179
    %s181 = sphi 0, %s179
    %s182 = sphi 0, %s181
    %s196 = sphi 0, %s182
    %s200 = sphi 0, %s200
    %s202 = sphi 0, %s200
    %s203 = sphi 0, %s202
    %s217 = sphi 0, %s203
    %s221 = sphi 0, %s221
    %s223 = sphi 0, %s221
    %s224 = sphi 0, %s223
    %s238 = sphi 0, %s224
    %s242 = sphi 0, %s242
    %s244 = sphi 0, %s242
    %s245 = sphi 0, %s244
    %s259 = sphi 0, %s245
    %s263 = sphi 0, %s263
    %s265 = sphi 0, %s263
    %s266 = sphi 0, %s265
    %s280 = sphi 0, %s266
    %s286 = sphi 0, %s288
    %s289 = sphi 0, %s286
    %s290 = sphi 0, %s289
    %s306 = sphi 0, %s290
  $region4: #{ice_se_basic_block.1} parent=0 // loop_header_branch
    %22 = sbr.rel (%p20) target = $region8
  $region5: #{ice_se_basic_block.1} parent=0 // loop_body
    %s24 = ssub.s32 %s19, 1
    %s25 = ssub.s32 %s19, 2
    %s26 = sadd.s32 %s19, 1
    %s27 = ssub.s32 %s19, %s26
    %p28 = scmp.eq.s32.totalorder %s27, 0
    %s30 = sadd.s32 %s29, 1
    %s31 = scalar_select %p28, %s29, %s30
    %p34 = pneg %p28
    %p35 = scmp.eq.s32.totalorder %s19, 1
    %p36 = por %p34, %p35
    %p37 = scmp.ne.s32.totalorder %s29, %s32
    %p38 = scmp.eq.s32.totalorder %s19, 0
    %p39 = por %p37, %p38
    %p40 = scmp.ne.s32.totalorder %s29, %s32
    %p41 = scmp.eq.s32.totalorder %s24, 1
    %p42 = por %p40, %p41
    %p43 = scmp.ne.s32.totalorder %s32, %s33
    %p44 = scmp.eq.s32.totalorder %s24, 0
    %p45 = por %p43, %p44
    %p46 = scmp.ne.s32.totalorder %s32, %s33
    %p47 = scmp.eq.s32.totalorder %s25, 1
    %p48 = por %p46, %p47
    %p50 = scmp.ne.s32.totalorder %s33, %s49
    %p51 = scmp.eq.s32.totalorder %s25, 0
    %p52 = por %p50, %p51
    %s54 = sadd.s32 %s53, 1
    %p57 = scmp.eq.s32.totalorder %s19, 1
    %p58 = scmp.ne.s32.totalorder %s53, %s55
    %p59 = scmp.eq.s32.totalorder %s19, 0
    %p60 = por %p58, %p59
    %p61 = scmp.ne.s32.totalorder %s53, %s55
    %p62 = scmp.eq.s32.totalorder %s24, 1
    %p63 = por %p61, %p62
    %p64 = scmp.ne.s32.totalorder %s55, %s56
    %p65 = scmp.eq.s32.totalorder %s24, 0
    %p66 = por %p64, %p65
    %p67 = scmp.ne.s32.totalorder %s55, %s56
    %p68 = scmp.eq.s32.totalorder %s25, 1
    %p69 = por %p67, %p68
    %p71 = scmp.ne.s32.totalorder %s56, %s70
    %p72 = scmp.eq.s32.totalorder %s25, 0
    %p73 = por %p71, %p72
    %s75 = sadd.s32 %s74, 1
    %p78 = scmp.eq.s32.totalorder %s19, 1
    %p79 = scmp.ne.s32.totalorder %s74, %s76
    %p80 = scmp.eq.s32.totalorder %s19, 0
    %p81 = por %p79, %p80
    %p82 = scmp.ne.s32.totalorder %s74, %s76
    %p83 = scmp.eq.s32.totalorder %s24, 1
    %p84 = por %p82, %p83
    %p85 = scmp.ne.s32.totalorder %s76, %s77
    %p86 = scmp.eq.s32.totalorder %s24, 0
    %p87 = por %p85, %p86
    %p88 = scmp.ne.s32.totalorder %s76, %s77
    %p89 = scmp.eq.s32.totalorder %s25, 1
    %p90 = por %p88, %p89
    %p92 = scmp.ne.s32.totalorder %s77, %s91
    %p93 = scmp.eq.s32.totalorder %s25, 0
    %p94 = por %p92, %p93
    %s96 = sadd.s32 %s95, 1
    %p99 = scmp.eq.s32.totalorder %s19, 1
    %p100 = scmp.ne.s32.totalorder %s95, %s97
    %p101 = scmp.eq.s32.totalorder %s19, 0
    %p102 = por %p100, %p101
    %p103 = scmp.ne.s32.totalorder %s95, %s97
    %p104 = scmp.eq.s32.totalorder %s24, 1
    %p105 = por %p103, %p104
    %p106 = scmp.ne.s32.totalorder %s97, %s98
    %p107 = scmp.eq.s32.totalorder %s24, 0
    %p108 = por %p106, %p107
    %p109 = scmp.ne.s32.totalorder %s97, %s98
    %p110 = scmp.eq.s32.totalorder %s25, 1
    %p111 = por %p109, %p110
    %p113 = scmp.ne.s32.totalorder %s98, %s112
    %p114 = scmp.eq.s32.totalorder %s25, 0
    %p115 = por %p113, %p114
    %s117 = sadd.s32 %s116, 1
    %p120 = scmp.eq.s32.totalorder %s19, 1
    %p121 = scmp.ne.s32.totalorder %s116, %s118
    %p122 = scmp.eq.s32.totalorder %s19, 0
    %p123 = por %p121, %p122
    %p124 = scmp.ne.s32.totalorder %s116, %s118
    %p125 = scmp.eq.s32.totalorder %s24, 1
    %p126 = por %p124, %p125
    %p127 = scmp.ne.s32.totalorder %s118, %s119
    %p128 = scmp.eq.s32.totalorder %s24, 0
    %p129 = por %p127, %p128
    %p130 = scmp.ne.s32.totalorder %s118, %s119
    %p131 = scmp.eq.s32.totalorder %s25, 1
    %p132 = por %p130, %p131
    %p134 = scmp.ne.s32.totalorder %s119, %s133
    %p135 = scmp.eq.s32.totalorder %s25, 0
    %p136 = por %p134, %p135
    %s138 = sadd.s32 %s137, 1
    %p141 = scmp.eq.s32.totalorder %s19, 1
    %p142 = scmp.ne.s32.totalorder %s137, %s139
    %p143 = scmp.eq.s32.totalorder %s19, 0
    %p144 = por %p142, %p143
    %p145 = scmp.ne.s32.totalorder %s137, %s139
    %p146 = scmp.eq.s32.totalorder %s24, 1
    %p147 = por %p145, %p146
    %p148 = scmp.ne.s32.totalorder %s139, %s140
    %p149 = scmp.eq.s32.totalorder %s24, 0
    %p150 = por %p148, %p149
    %p151 = scmp.ne.s32.totalorder %s139, %s140
    %p152 = scmp.eq.s32.totalorder %s25, 1
    %p153 = por %p151, %p152
    %p155 = scmp.ne.s32.totalorder %s140, %s154
    %p156 = scmp.eq.s32.totalorder %s25, 0
    %p157 = por %p155, %p156
    %s159 = sadd.s32 %s158, 1
    %p162 = scmp.eq.s32.totalorder %s19, 1
    %p163 = scmp.ne.s32.totalorder %s158, %s160
    %p164 = scmp.eq.s32.totalorder %s19, 0
    %p165 = por %p163, %p164
    %p166 = scmp.ne.s32.totalorder %s158, %s160
    %p167 = scmp.eq.s32.totalorder %s24, 1
    %p168 = por %p166, %p167
    %p169 = scmp.ne.s32.totalorder %s160, %s161
    %p170 = scmp.eq.s32.totalorder %s24, 0
    %p171 = por %p169, %p170
    %p172 = scmp.ne.s32.totalorder %s160, %s161
    %p173 = scmp.eq.s32.totalorder %s25, 1
    %p174 = por %p172, %p173
    %p176 = scmp.ne.s32.totalorder %s161, %s175
    %p177 = scmp.eq.s32.totalorder %s25, 0
    %p178 = por %p176, %p177
    %s180 = sadd.s32 %s179, 1
    %p183 = scmp.eq.s32.totalorder %s19, 1
    %p184 = scmp.ne.s32.totalorder %s179, %s181
    %p185 = scmp.eq.s32.totalorder %s19, 0
    %p186 = por %p184, %p185
    %p187 = scmp.ne.s32.totalorder %s179, %s181
    %p188 = scmp.eq.s32.totalorder %s24, 1
    %p189 = por %p187, %p188
    %p190 = scmp.ne.s32.totalorder %s181, %s182
    %p191 = scmp.eq.s32.totalorder %s24, 0
    %p192 = por %p190, %p191
    %p193 = scmp.ne.s32.totalorder %s181, %s182
    %p194 = scmp.eq.s32.totalorder %s25, 1
    %p195 = por %p193, %p194
    %p197 = scmp.ne.s32.totalorder %s182, %s196
    %p198 = scmp.eq.s32.totalorder %s25, 0
    %p199 = por %p197, %p198
    %s201 = sadd.s32 %s200, 1
    %p204 = scmp.eq.s32.totalorder %s19, 1
    %p205 = scmp.ne.s32.totalorder %s200, %s202
    %p206 = scmp.eq.s32.totalorder %s19, 0
    %p207 = por %p205, %p206
    %p208 = scmp.ne.s32.totalorder %s200, %s202
    %p209 = scmp.eq.s32.totalorder %s24, 1
    %p210 = por %p208, %p209
    %p211 = scmp.ne.s32.totalorder %s202, %s203
    %p212 = scmp.eq.s32.totalorder %s24, 0
    %p213 = por %p211, %p212
    %p214 = scmp.ne.s32.totalorder %s202, %s203
    %p215 = scmp.eq.s32.totalorder %s25, 1
    %p216 = por %p214, %p215
    %p218 = scmp.ne.s32.totalorder %s203, %s217
    %p219 = scmp.eq.s32.totalorder %s25, 0
    %p220 = por %p218, %p219
    %s222 = sadd.s32 %s221, 1
    %p225 = scmp.eq.s32.totalorder %s19, 1
    %p226 = scmp.ne.s32.totalorder %s221, %s223
    %p227 = scmp.eq.s32.totalorder %s19, 0
    %p228 = por %p226, %p227
    %p229 = scmp.ne.s32.totalorder %s221, %s223
    %p230 = scmp.eq.s32.totalorder %s24, 1
    %p231 = por %p229, %p230
    %p232 = scmp.ne.s32.totalorder %s223, %s224
    %p233 = scmp.eq.s32.totalorder %s24, 0
    %p234 = por %p232, %p233
    %p235 = scmp.ne.s32.totalorder %s223, %s224
    %p236 = scmp.eq.s32.totalorder %s25, 1
    %p237 = por %p235, %p236
    %p239 = scmp.ne.s32.totalorder %s224, %s238
    %p240 = scmp.eq.s32.totalorder %s25, 0
    %p241 = por %p239, %p240
    %s243 = sadd.s32 %s242, 1
    %p246 = scmp.eq.s32.totalorder %s19, 1
    %p247 = scmp.ne.s32.totalorder %s242, %s244
    %p248 = scmp.eq.s32.totalorder %s19, 0
    %p249 = por %p247, %p248
    %p250 = scmp.ne.s32.totalorder %s242, %s244
    %p251 = scmp.eq.s32.totalorder %s24, 1
    %p252 = por %p250, %p251
    %p253 = scmp.ne.s32.totalorder %s244, %s245
    %p254 = scmp.eq.s32.totalorder %s24, 0
    %p255 = por %p253, %p254
    %p256 = scmp.ne.s32.totalorder %s244, %s245
    %p257 = scmp.eq.s32.totalorder %s25, 1
    %p258 = por %p256, %p257
    %p260 = scmp.ne.s32.totalorder %s245, %s259
    %p261 = scmp.eq.s32.totalorder %s25, 0
    %p262 = por %p260, %p261
    %s264 = sadd.s32 %s263, 1
    %p267 = scmp.eq.s32.totalorder %s19, 1
    %p268 = scmp.ne.s32.totalorder %s263, %s265
    %p269 = scmp.eq.s32.totalorder %s19, 0
    %p270 = por %p268, %p269
    %p271 = scmp.ne.s32.totalorder %s263, %s265
    %p272 = scmp.eq.s32.totalorder %s24, 1
    %p273 = por %p271, %p272
    %p274 = scmp.ne.s32.totalorder %s265, %s266
    %p275 = scmp.eq.s32.totalorder %s24, 0
    %p276 = por %p274, %p275
    %p277 = scmp.ne.s32.totalorder %s265, %s266
    %p278 = scmp.eq.s32.totalorder %s25, 1
    %p279 = por %p277, %p278
    %p281 = scmp.ne.s32.totalorder %s266, %s280
    %p282 = scmp.eq.s32.totalorder %s25, 0
    %p283 = por %p281, %p282
    %s284 = ssub.s32 %s19, %s26
    %p285 = scmp.eq.s32.totalorder %s284, 0
    %s287 = sadd.s32 %s286, 1
    %s288 = scalar_select %p285, %s286, %s287
    %p291 = pneg %p285
    %p292 = scmp.eq.s32.totalorder %s19, 1
    %p293 = por %p291, %p292
    %p294 = scmp.ne.s32.totalorder %s286, %s289
    %p295 = scmp.eq.s32.totalorder %s19, 0
    %p296 = por %p294, %p295
    %p297 = scmp.ne.s32.totalorder %s286, %s289
    %p298 = scmp.eq.s32.totalorder %s24, 1
    %p299 = por %p297, %p298
    %p300 = scmp.ne.s32.totalorder %s289, %s290
    %p301 = scmp.eq.s32.totalorder %s24, 0
    %p302 = por %p300, %p301
    %p303 = scmp.ne.s32.totalorder %s289, %s290
    %p304 = scmp.eq.s32.totalorder %s25, 1
    %p305 = por %p303, %p304
    %p307 = scmp.ne.s32.totalorder %s290, %s306
    %p308 = scmp.eq.s32.totalorder %s25, 0
    %p309 = por %p307, %p308
    %p310 = scmp.le.s32.totalorder 1, %s19
    %p311 = scmp.lt.s32.totalorder %s19, 3
    %p312 = pnand %p310, %p311
    %p313 = pneg %p312
    // Predicated region
    $region9: #{ice_se_basic_block.1} parent=5 // pred_check
      _
    $region10: #{ice_se_basic_block.1} parent=5 // pred_check_branch
      %315 = sbr.rel (%p312) target = $region12
    $region11: #{ice_se_basic_block.1} parent=5 // pred_region
      %s316 = ssub.s32 %s19, 1
      // Predicated region
      $region13: #{ice_se_basic_block.1} parent=11 // pred_check
        %p317 = pneg %p66
      $region14: #{ice_se_basic_block.1} parent=11 // pred_check_branch
        %319 = sbr.rel (%p317) target = $region16
      $region15: #{ice_se_basic_block.1} parent=11 // pred_region
        _
      $region16: #{ice_se_basic_block.1} parent=11 // pred_fallthru
        _
      // Predicated region
      $region17: #{ice_se_basic_block.1} parent=11 // pred_check
        %p320 = pneg %p87
      $region18: #{ice_se_basic_block.1} parent=11 // pred_check_branch
        %322 = sbr.rel (%p320) target = $region20
      $region19: #{ice_se_basic_block.1} parent=11 // pred_region
        _
      $region20: #{ice_se_basic_block.1} parent=11 // pred_fallthru
        _
      // Predicated region
      $region21: #{ice_se_basic_block.1} parent=11 // pred_check
        %p323 = pneg %p108
      $region22: #{ice_se_basic_block.1} parent=11 // pred_check_branch
        %325 = sbr.rel (%p323) target = $region24
      $region23: #{ice_se_basic_block.1} parent=11 // pred_region
        _
      $region24: #{ice_se_basic_block.1} parent=11 // pred_fallthru
        _
      // Predicated region
      $region25: #{ice_se_basic_block.1} parent=11 // pred_check
        %p326 = pneg %p129
      $region26: #{ice_se_basic_block.1} parent=11 // pred_check_branch
        %328 = sbr.rel (%p326) target = $region28
      $region27: #{ice_se_basic_block.1} parent=11 // pred_region
        _
      $region28: #{ice_se_basic_block.1} parent=11 // pred_fallthru
        _
      // Predicated region
      $region29: #{ice_se_basic_block.1} parent=11 // pred_check
        %p329 = pneg %p150
      $region30: #{ice_se_basic_block.1} parent=11 // pred_check_branch
        %331 = sbr.rel (%p329) target = $region32
      $region31: #{ice_se_basic_block.1} parent=11 // pred_region
        _
      $region32: #{ice_se_basic_block.1} parent=11 // pred_fallthru
        _
      // Predicated region
      $region33: #{ice_se_basic_block.1} parent=11 // pred_check
        %p332 = pneg %p171
      $region34: #{ice_se_basic_block.1} parent=11 // pred_check_branch
        %334 = sbr.rel (%p332) target = $region36
      $region35: #{ice_se_basic_block.1} parent=11 // pred_region
        _
      $region36: #{ice_se_basic_block.1} parent=11 // pred_fallthru
        _
      // Predicated region
      $region37: #{ice_se_basic_block.1} parent=11 // pred_check
        %p335 = pneg %p192
      $region38: #{ice_se_basic_block.1} parent=11 // pred_check_branch
        %337 = sbr.rel (%p335) target = $region40
      $region39: #{ice_se_basic_block.1} parent=11 // pred_region
        _
      $region40: #{ice_se_basic_block.1} parent=11 // pred_fallthru
        _
      // Predicated region
      $region41: #{ice_se_basic_block.1} parent=11 // pred_check
        %p338 = pneg %p213
      $region42: #{ice_se_basic_block.1} parent=11 // pred_check_branch
        %340 = sbr.rel (%p338) target = $region44
      $region43: #{ice_se_basic_block.1} parent=11 // pred_region
        _
      $region44: #{ice_se_basic_block.1} parent=11 // pred_fallthru
        _
      // Predicated region
      $region45: #{ice_se_basic_block.1} parent=11 // pred_check
        %p341 = pneg %p234
      $region46: #{ice_se_basic_block.1} parent=11 // pred_check_branch
        %343 = sbr.rel (%p341) target = $region48
      $region47: #{ice_se_basic_block.1} parent=11 // pred_region
        _
      $region48: #{ice_se_basic_block.1} parent=11 // pred_fallthru
        _
      // Predicated region
      $region49: #{ice_se_basic_block.1} parent=11 // pred_check
        %p344 = pneg %p255
      $region50: #{ice_se_basic_block.1} parent=11 // pred_check_branch
        %346 = sbr.rel (%p344) target = $region52
      $region51: #{ice_se_basic_block.1} parent=11 // pred_region
        _
      $region52: #{ice_se_basic_block.1} parent=11 // pred_fallthru
        _
      // Predicated region
      $region53: #{ice_se_basic_block.1} parent=11 // pred_check
        %p347 = pneg %p276
      $region54: #{ice_se_basic_block.1} parent=11 // pred_check_branch
        %349 = sbr.rel (%p347) target = $region56
      $region55: #{ice_se_basic_block.1} parent=11 // pred_region
        _
      $region56: #{ice_se_basic_block.1} parent=11 // pred_fallthru
        _
    $region12: #{ice_se_basic_block.1} parent=5 // pred_fallthru
      _
    %p350 = scmp.lt.s32.totalorder %s19, 2
    // Predicated region
    $region57: #{ice_se_basic_block.1} parent=5 // pred_check
      %p351 = pneg %p350
    $region58: #{ice_se_basic_block.1} parent=5 // pred_check_branch
      %353 = sbr.rel (%p351) target = $region60
    $region59: #{ice_se_basic_block.1} parent=5 // pred_region
      // Predicated region
      $region61: #{ice_se_basic_block.1} parent=59 // pred_check
        %p354 = pneg %p39
      $region62: #{ice_se_basic_block.1} parent=59 // pred_check_branch
        %356 = sbr.rel (%p354) target = $region64
      $region63: #{ice_se_basic_block.1} parent=59 // pred_region
        %p357 = scmp.lt.s32.totalorder %s19, 1
        %s358 = scalar_select %p357, %s19, 1
        %s359 = smul.addr %s358, 32
        %s360 = smul.addr %s359, 8
        %s361 = scalar_lea.vmem %s0, %s360
      $region64: #{ice_se_basic_block.1} parent=59 // pred_fallthru
        _
    $region60: #{ice_se_basic_block.1} parent=5 // pred_fallthru
      _
    %p362 = scmp.le.s32.totalorder 1, %s19
    %p363 = scmp.lt.s32.totalorder %s19, 3
    %p364 = pnand %p362, %p363
    %p365 = pneg %p364
    // Predicated region
    $region65: #{ice_se_basic_block.1} parent=5 // pred_check
      _
    $region66: #{ice_se_basic_block.1} parent=5 // pred_check_branch
      %367 = sbr.rel (%p364) target = $region68
    $region67: #{ice_se_basic_block.1} parent=5 // pred_region
      %s368 = ssub.s32 %s19, 1
      %p369 = scmp.lt.s32.totalorder %s24, 1
      %s370 = scalar_select %p369, %s24, 1
      %s371 = smul.addr %s370, 32
      %s372 = smul.addr %s371, 8
      %s373 = scalar_lea.vmem %s0, %s372
      %p374 = pneg %p45
      %p375 = pneg %p42
      %p376 = pneg %p66
      %p377 = pneg %p63
      %p378 = pneg %p87
      %p379 = pneg %p84
      %p380 = pneg %p108
      %p381 = pneg %p105
      %p382 = pneg %p129
      %p383 = pneg %p126
      %p384 = pneg %p150
      %p385 = pneg %p147
      %p386 = pneg %p171
      %p387 = pneg %p168
      %p388 = pneg %p192
      %p389 = pneg %p189
      %p390 = pneg %p213
      %p391 = pneg %p210
      %p392 = pneg %p234
      %p393 = pneg %p231
      %p394 = pneg %p255
      %p395 = pneg %p252
      %p396 = pneg %p276
      %p397 = pneg %p273
      %p398 = pneg %p302
      %p399 = pneg %p299
      %p400 = scmp.lt.s32.totalorder %s24, 1
      %s401 = scalar_select %p400, %s24, 1
      %s402 = smul.addr %s401, 2
      %s403 = smul.addr %s402, 8
      %s404 = scalar_lea.vmem %s12, %s403
      %p405 = scmp.lt.s32.totalorder %s24, 1
      %s406 = scalar_select %p405, %s24, 1
      %s407 = smul.addr %s406, 32
      %s408 = smul.addr %s407, 8
      %s409 = scalar_lea.vmem %s0, %s408
      %p410 = scmp.lt.s32.totalorder %s24, 1
      %s411 = scalar_select %p410, %s24, 1
      %s412 = smul.addr %s411, 2
      %s413 = smul.addr %s412, 8
      %s414 = scalar_lea.vmem %s12, %s413
      %v415 = vld [vmem:[%s409] sm:$0xff]
      %v416 = vld [vmem:[%s409 + $0x8] sm:$0xff]
      %v417 = vld [vmem:[%s409 + $0x10] sm:$0xff]
      %v418 = vld [vmem:[%s409 + $0x18] sm:$0xff]
      %v419 = vld [vmem:[%s409 + $0x20] sm:$0xff]
      %v420 = vld [vmem:[%s409 + $0x28] sm:$0xff]
      %v421 = vld [vmem:[%s409 + $0x30] sm:$0xff]
      %v422 = vld [vmem:[%s409 + $0x38] sm:$0xff]
      %v423 = vld [vmem:[%s409 + $0x40] sm:$0xff]
      %v424 = vld [vmem:[%s409 + $0x48] sm:$0xff]
      %v425 = vld [vmem:[%s409 + $0x50] sm:$0xff]
      %v426 = vld [vmem:[%s409 + $0x58] sm:$0xff]
      %v427 = vld [vmem:[%s409 + $0x60] sm:$0xff]
      %v428 = vld [vmem:[%s409 + $0x68] sm:$0xff]
      %v429 = vld [vmem:[%s409 + $0x70] sm:$0xff]
      %v430 = vld [vmem:[%s409 + $0x78] sm:$0xff]
      %v431 = vld [vmem:[%s409 + $0x80] sm:$0xff]
      %v432 = vld [vmem:[%s409 + $0x88] sm:$0xff]
      %v433 = vld [vmem:[%s409 + $0x90] sm:$0xff]
      %v434 = vld [vmem:[%s409 + $0x98] sm:$0xff]
      %v435 = vld [vmem:[%s409 + $0xa0] sm:$0xff]
      %v436 = vld [vmem:[%s409 + $0xa8] sm:$0xff]
      %v437 = vld [vmem:[%s409 + $0xb0] sm:$0xff]
      %v438 = vld [vmem:[%s409 + $0xb8] sm:$0xff]
      %v439 = vld [vmem:[%s409 + $0xc0] sm:$0xff]
      %v440 = vld [vmem:[%s409 + $0xc8] sm:$0xff]
      %v441 = vld [vmem:[%s409 + $0xd0] sm:$0xff]
      %v442 = vld [vmem:[%s409 + $0xd8] sm:$0xff]
      %v443 = vld [vmem:[%s409 + $0xe0] sm:$0xff]
      %v444 = vld [vmem:[%s409 + $0xe8] sm:$0xff]
      %v445 = vld [vmem:[%s409 + $0xf0] sm:$0xff]
      %v446 = vld [vmem:[%s409 + $0xf8] sm:$0xff]
      %v447 = vld [vmem:[%s1] sm:$0xf]
      %v448 = vld [vmem:[%s2] sm:$0x1]
      %v450 = vlaneseq
      %v451 = vshrl.u32 %v450, 7
      %v452 = vsub.s32 0, %v451
      %v453 = vrot.slane %v448, %v452
      %vm455 = vcmask 31744
      %v457 = vsel %vm455, %v415, 0
      %v460 = vsel %vm455, %v416, 0
      %v463 = vsel %vm455, %v417, 0
      %v466 = vsel %vm455, %v418, 0
      %v469 = vsel %vm455, %v419, 0
      %v472 = vsel %vm455, %v420, 0
      %v475 = vsel %vm455, %v421, 0
      %v478 = vsel %vm455, %v422, 0
      %v481 = vsel %vm455, %v423, 0
      %v484 = vsel %vm455, %v424, 0
      %v487 = vsel %vm455, %v425, 0
      %v490 = vsel %vm455, %v426, 0
      %v493 = vsel %vm455, %v427, 0
      %v496 = vsel %vm455, %v428, 0
      %v499 = vsel %vm455, %v429, 0
      %v502 = vsel %vm455, %v430, 0
      %v505 = vsel %vm455, %v431, 0
      %v508 = vsel %vm455, %v432, 0
      %v511 = vsel %vm455, %v433, 0
      %v514 = vsel %vm455, %v434, 0
      %v517 = vsel %vm455, %v435, 0
      %v520 = vsel %vm455, %v436, 0
      %v523 = vsel %vm455, %v437, 0
      %v526 = vsel %vm455, %v438, 0
      %v529 = vsel %vm455, %v439, 0
      %v532 = vsel %vm455, %v440, 0
      %v535 = vsel %vm455, %v441, 0
      %v538 = vsel %vm455, %v442, 0
      %v541 = vsel %vm455, %v443, 0
      %v544 = vsel %vm455, %v444, 0
      %v547 = vsel %vm455, %v445, 0
      %v550 = vsel %vm455, %v446, 0
      %vm552 = vcmask 1043456
      %v554 = vsel %vm552, %v447, 0
      %556 = vmatprep.subr.mxu0 0.0
      %557 = vmatpush1.msra.mxu0 0.0
      %558 = vmatprep.subr.mxu0 0.0
      %559 = vmatpush1.msra.mxu0 0.0
      %560 = vmatprep.subr.mxu0 0.0
      %561 = vmatpush1.msra.mxu0 0.0
      %562 = vmatprep.subr.mxu0 0.0
      %563 = vmatpush1.msra.mxu0 0.0
      %564 = vmatprep.subr.mxu0 0.0
      %565 = vmatpush1.msra.mxu0 0.0
      %566 = vmatprep.subr.mxu0 0.0
      %567 = vmatpush1.msra.mxu0 0.0
      %568 = vmatprep.subr.mxu0 0.0
      %569 = vmatpush1.msra.mxu0 0.0
      %570 = vmatprep.subr.mxu0 0.0
      %571 = vmatpush1.msra.mxu0 0.0
      %572 = vmatprep.subr.mxu0 0.0
      %573 = vmatpush1.msra.mxu0 0.0
      %574 = vmatprep.subr.mxu0 0.0
      %575 = vmatpush1.msra.mxu0 0.0
      %576 = vmatprep.subr.mxu0 0.0
      %577 = vmatpush1.msra.mxu0 0.0
      %578 = vmatprep.subr.mxu0 0.0
      %579 = vmatpush1.msra.mxu0 0.0
      %580 = vmatprep.subr.mxu0 0.0
      %581 = vmatpush1.msra.mxu0 0.0
      %582 = vmatprep.subr.mxu0 0.0
      %583 = vmatpush1.msra.mxu0 0.0
      %584 = vmatprep.subr.mxu0 0.0
      %585 = vmatpush1.msra.mxu0 0.0
      %586 = vmatprep.subr.mxu0 0.0
      %587 = vmatpush1.msra.mxu0 %v554
      %588 = vmatprep.subr.mxu0 0.0
      %589 = vmatpush2.msra.mxu0 0.0
      %590 = vmatprep.subr.mxu0 0.0
      %591 = vmatpush2.msra.mxu0 0.0
      %592 = vmatprep.subr.mxu0 0.0
      %593 = vmatpush2.msra.mxu0 0.0
      %594 = vmatprep.subr.mxu0 0.0
      %595 = vmatpush2.msra.mxu0 0.0
      %596 = vmatprep.subr.mxu0 0.0
      %597 = vmatpush2.msra.mxu0 0.0
      %598 = vmatprep.subr.mxu0 0.0
      %599 = vmatpush2.msra.mxu0 0.0
      %600 = vmatprep.subr.mxu0 0.0
      %601 = vmatpush2.msra.mxu0 0.0
      %602 = vmatprep.subr.mxu0 0.0
      %603 = vmatpush2.msra.mxu0 0.0
      %604 = vmatprep.subr.mxu0 0.0
      %605 = vmatpush2.msra.mxu0 0.0
      %606 = vmatprep.subr.mxu0 0.0
      %607 = vmatpush2.msra.mxu0 0.0
      %608 = vmatprep.subr.mxu0 0.0
      %609 = vmatpush2.msra.mxu0 0.0
      %610 = vmatprep.subr.mxu0 0.0
      %611 = vmatpush2.msra.mxu0 0.0
      %612 = vmatprep.subr.mxu0 0.0
      %613 = vmatpush2.msra.mxu0 0.0
      %614 = vmatprep.subr.mxu0 0.0
      %615 = vmatpush2.msra.mxu0 0.0
      %616 = vmatprep.subr.mxu0 0.0
      %617 = vmatpush2.msra.mxu0 0.0
      %618 = vmatprep.subr.mxu0 0.0
      %619 = vmatpush2.msra.mxu0 0.0
      %620 = vmatprep.mubr.f32.mxu0 0.0
      %621 = vmatmul.mubr.f32.gmra.mxu0 %v457
      %v622 = vpop.f32.mrf.mxu0
      %v623 = vadd.f32 %v453, %v622
      %v624 = vpop.f32.mrf.mxu0
      %625 = vmatprep.mubr.f32.mxu0 0.0
      %626 = vmatmul.mubr.f32.gmra.mxu0 %v460
      %v627 = vpop.f32.mrf.mxu0
      %v628 = vadd.f32 %v453, %v627
      %v629 = vpop.f32.mrf.mxu0
      %630 = vmatprep.mubr.f32.mxu0 0.0
      %631 = vmatmul.mubr.f32.gmra.mxu0 %v463
      %v632 = vpop.f32.mrf.mxu0
      %v633 = vadd.f32 %v453, %v632
      %v634 = vpop.f32.mrf.mxu0
      %635 = vmatprep.mubr.f32.mxu0 0.0
      %636 = vmatmul.mubr.f32.gmra.mxu0 %v466
      %v637 = vpop.f32.mrf.mxu0
      %v638 = vadd.f32 %v453, %v637
      %v639 = vpop.f32.mrf.mxu0
      %640 = vmatprep.mubr.f32.mxu0 0.0
      %641 = vmatmul.mubr.f32.gmra.mxu0 %v469
      %v642 = vpop.f32.mrf.mxu0
      %v643 = vadd.f32 %v453, %v642
      %v644 = vpop.f32.mrf.mxu0
      %645 = vmatprep.mubr.f32.mxu0 0.0
      %646 = vmatmul.mubr.f32.gmra.mxu0 %v472
      %v647 = vpop.f32.mrf.mxu0
      %v648 = vadd.f32 %v453, %v647
      %v649 = vpop.f32.mrf.mxu0
      %650 = vmatprep.mubr.f32.mxu0 0.0
      %651 = vmatmul.mubr.f32.gmra.mxu0 %v475
      %v652 = vpop.f32.mrf.mxu0
      %v653 = vadd.f32 %v453, %v652
      %v654 = vpop.f32.mrf.mxu0
      %655 = vmatprep.mubr.f32.mxu0 0.0
      %656 = vmatmul.mubr.f32.gmra.mxu0 %v478
      %v657 = vpop.f32.mrf.mxu0
      %v658 = vadd.f32 %v453, %v657
      %v659 = vpop.f32.mrf.mxu0
      %660 = vmatprep.mubr.f32.mxu0 0.0
      %661 = vmatmul.mubr.f32.gmra.mxu0 %v481
      %v662 = vpop.f32.mrf.mxu0
      %v663 = vadd.f32 %v453, %v662
      %v664 = vpop.f32.mrf.mxu0
      %665 = vmatprep.mubr.f32.mxu0 0.0
      %666 = vmatmul.mubr.f32.gmra.mxu0 %v484
      %v667 = vpop.f32.mrf.mxu0
      %v668 = vadd.f32 %v453, %v667
      %v669 = vpop.f32.mrf.mxu0
      %670 = vmatprep.mubr.f32.mxu0 0.0
      %671 = vmatmul.mubr.f32.gmra.mxu0 %v487
      %v672 = vpop.f32.mrf.mxu0
      %v673 = vadd.f32 %v453, %v672
      %v674 = vpop.f32.mrf.mxu0
      %675 = vmatprep.mubr.f32.mxu0 0.0
      %676 = vmatmul.mubr.f32.gmra.mxu0 %v490
      %v677 = vpop.f32.mrf.mxu0
      %v678 = vadd.f32 %v453, %v677
      %v679 = vpop.f32.mrf.mxu0
      %680 = vmatprep.mubr.f32.mxu0 0.0
      %681 = vmatmul.mubr.f32.gmra.mxu0 %v493
      %v682 = vpop.f32.mrf.mxu0
      %v683 = vadd.f32 %v453, %v682
      %v684 = vpop.f32.mrf.mxu0
      %685 = vmatprep.mubr.f32.mxu0 0.0
      %686 = vmatmul.mubr.f32.gmra.mxu0 %v496
      %v687 = vpop.f32.mrf.mxu0
      %v688 = vadd.f32 %v453, %v687
      %v689 = vpop.f32.mrf.mxu0
      %690 = vmatprep.mubr.f32.mxu0 0.0
      %691 = vmatmul.mubr.f32.gmra.mxu0 %v499
      %v692 = vpop.f32.mrf.mxu0
      %v693 = vadd.f32 %v453, %v692
      %v694 = vpop.f32.mrf.mxu0
      %695 = vmatprep.mubr.f32.mxu0 0.0
      %696 = vmatmul.mubr.f32.gmra.mxu0 %v502
      %v697 = vpop.f32.mrf.mxu0
      %v698 = vadd.f32 %v453, %v697
      %v699 = vpop.f32.mrf.mxu0
      %700 = vmatprep.mubr.f32.mxu0 0.0
      %701 = vmatmul.mubr.f32.gmra.mxu0 %v505
      %v702 = vpop.f32.mrf.mxu0
      %v703 = vadd.f32 %v453, %v702
      %v704 = vpop.f32.mrf.mxu0
      %705 = vmatprep.mubr.f32.mxu0 0.0
      %706 = vmatmul.mubr.f32.gmra.mxu0 %v508
      %v707 = vpop.f32.mrf.mxu0
      %v708 = vadd.f32 %v453, %v707
      %v709 = vpop.f32.mrf.mxu0
      %710 = vmatprep.mubr.f32.mxu0 0.0
      %711 = vmatmul.mubr.f32.gmra.mxu0 %v511
      %v712 = vpop.f32.mrf.mxu0
      %v713 = vadd.f32 %v453, %v712
      %v714 = vpop.f32.mrf.mxu0
      %715 = vmatprep.mubr.f32.mxu0 0.0
      %716 = vmatmul.mubr.f32.gmra.mxu0 %v514
      %v717 = vpop.f32.mrf.mxu0
      %v718 = vadd.f32 %v453, %v717
      %v719 = vpop.f32.mrf.mxu0
      %720 = vmatprep.mubr.f32.mxu0 0.0
      %721 = vmatmul.mubr.f32.gmra.mxu0 %v517
      %v722 = vpop.f32.mrf.mxu0
      %v723 = vadd.f32 %v453, %v722
      %v724 = vpop.f32.mrf.mxu0
      %725 = vmatprep.mubr.f32.mxu0 0.0
      %726 = vmatmul.mubr.f32.gmra.mxu0 %v520
      %v727 = vpop.f32.mrf.mxu0
      %v728 = vadd.f32 %v453, %v727
      %v729 = vpop.f32.mrf.mxu0
      %730 = vmatprep.mubr.f32.mxu0 0.0
      %731 = vmatmul.mubr.f32.gmra.mxu0 %v523
      %v732 = vpop.f32.mrf.mxu0
      %v733 = vadd.f32 %v453, %v732
      %v734 = vpop.f32.mrf.mxu0
      %735 = vmatprep.mubr.f32.mxu0 0.0
      %736 = vmatmul.mubr.f32.gmra.mxu0 %v526
      %v737 = vpop.f32.mrf.mxu0
      %v738 = vadd.f32 %v453, %v737
      %v739 = vpop.f32.mrf.mxu0
      %740 = vmatprep.mubr.f32.mxu0 0.0
      %741 = vmatmul.mubr.f32.gmra.mxu0 %v529
      %v742 = vpop.f32.mrf.mxu0
      %v743 = vadd.f32 %v453, %v742
      %v744 = vpop.f32.mrf.mxu0
      %745 = vmatprep.mubr.f32.mxu0 0.0
      %746 = vmatmul.mubr.f32.gmra.mxu0 %v532
      %v747 = vpop.f32.mrf.mxu0
      %v748 = vadd.f32 %v453, %v747
      %v749 = vpop.f32.mrf.mxu0
      %750 = vmatprep.mubr.f32.mxu0 0.0
      %751 = vmatmul.mubr.f32.gmra.mxu0 %v535
      %v752 = vpop.f32.mrf.mxu0
      %v753 = vadd.f32 %v453, %v752
      %v754 = vpop.f32.mrf.mxu0
      %755 = vmatprep.mubr.f32.mxu0 0.0
      %756 = vmatmul.mubr.f32.gmra.mxu0 %v538
      %v757 = vpop.f32.mrf.mxu0
      %v758 = vadd.f32 %v453, %v757
      %v759 = vpop.f32.mrf.mxu0
      %760 = vmatprep.mubr.f32.mxu0 0.0
      %761 = vmatmul.mubr.f32.gmra.mxu0 %v541
      %v762 = vpop.f32.mrf.mxu0
      %v763 = vadd.f32 %v453, %v762
      %v764 = vpop.f32.mrf.mxu0
      %765 = vmatprep.mubr.f32.mxu0 0.0
      %766 = vmatmul.mubr.f32.gmra.mxu0 %v544
      %v767 = vpop.f32.mrf.mxu0
      %v768 = vadd.f32 %v453, %v767
      %v769 = vpop.f32.mrf.mxu0
      %770 = vmatprep.mubr.f32.mxu0 0.0
      %771 = vmatmul.mubr.f32.gmra.mxu0 %v547
      %v772 = vpop.f32.mrf.mxu0
      %v773 = vadd.f32 %v453, %v772
      %v774 = vpop.f32.mrf.mxu0
      %775 = vmatprep.mubr.f32.mxu0 0.0
      %776 = vmatmul.mubr.f32.gmra.mxu0 %v550
      %v777 = vpop.f32.mrf.mxu0
      %v778 = vadd.f32 %v453, %v777
      %v779 = vpop.f32.mrf.mxu0
      %780 = vdwg.mxu0
      %781 = vst.msk [vmem:[#allocation2] sm:$0xff] %vm455, 0.0
      %782 = vst.msk [vmem:[#allocation2 + $0x8] sm:$0xff] %vm455, 0.0
      %vm783 = vcmask 25600
      %784 = vst.msk [vmem:[#allocation2 + $0x10] sm:$0x3] %vm783, 0.0
      %785 = vst.msk [vmem:[#allocation2 + $0x18] sm:$0xff] %vm455, 0.0
      %786 = vst.msk [vmem:[#allocation2 + $0x20] sm:$0xff] %vm455, 0.0
      %787 = vst.msk [vmem:[#allocation2 + $0x28] sm:$0x3] %vm783, 0.0
      %788 = vst.msk [vmem:[#allocation2 + $0x30] sm:$0xff] %vm455, 0.0
      %789 = vst.msk [vmem:[#allocation2 + $0x38] sm:$0xff] %vm455, 0.0
      %790 = vst.msk [vmem:[#allocation2 + $0x40] sm:$0x3] %vm783, 0.0
      %791 = vst.msk [vmem:[#allocation2 + $0x48] sm:$0xff] %vm455, 0.0
      %792 = vst.msk [vmem:[#allocation2 + $0x50] sm:$0xff] %vm455, 0.0
      %793 = vst.msk [vmem:[#allocation2 + $0x58] sm:$0x3] %vm783, 0.0
      %794 = vst.msk [vmem:[#allocation2 + $0x60] sm:$0xff] %vm455, 0.0
      %795 = vst.msk [vmem:[#allocation2 + $0x68] sm:$0xff] %vm455, 0.0
      %796 = vst.msk [vmem:[#allocation2 + $0x70] sm:$0x3] %vm783, 0.0
      %797 = vst.msk [vmem:[#allocation2 + $0x78] sm:$0xff] %vm455, 0.0
      %798 = vst.msk [vmem:[#allocation2 + $0x80] sm:$0xff] %vm455, 0.0
      %799 = vst.msk [vmem:[#allocation2 + $0x88] sm:$0x3] %vm783, 0.0
      %800 = vst.msk [vmem:[#allocation2 + $0x90] sm:$0xff] %vm455, 0.0
      %801 = vst.msk [vmem:[#allocation2 + $0x98] sm:$0xff] %vm455, 0.0
      %802 = vst.msk [vmem:[#allocation2 + $0xa0] sm:$0x3] %vm783, 0.0
      %803 = vst.msk [vmem:[#allocation2 + $0xa8] sm:$0xff] %vm455, 0.0
      %804 = vst.msk [vmem:[#allocation2 + $0xb0] sm:$0xff] %vm455, 0.0
      %805 = vst.msk [vmem:[#allocation2 + $0xb8] sm:$0x3] %vm783, 0.0
      %806 = vst.msk [vmem:[#allocation2 + $0xc0] sm:$0xff] %vm455, 0.0
      %807 = vst.msk [vmem:[#allocation2 + $0xc8] sm:$0xff] %vm455, 0.0
      %808 = vst.msk [vmem:[#allocation2 + $0xd0] sm:$0x3] %vm783, 0.0
      %809 = vst.msk [vmem:[#allocation2 + $0xd8] sm:$0xff] %vm455, 0.0
      %810 = vst.msk [vmem:[#allocation2 + $0xe0] sm:$0xff] %vm455, 0.0
      %811 = vst.msk [vmem:[#allocation2 + $0xe8] sm:$0x3] %vm783, 0.0
      %812 = vst.msk [vmem:[#allocation2 + $0xf0] sm:$0xff] %vm455, 0.0
      %813 = vst.msk [vmem:[#allocation2 + $0xf8] sm:$0xff] %vm455, 0.0
      %814 = vst.msk [vmem:[#allocation2 + $0x100] sm:$0x3] %vm783, 0.0
      %815 = vst.msk [vmem:[#allocation2 + $0x108] sm:$0xff] %vm455, 0.0
      %816 = vst.msk [vmem:[#allocation2 + $0x110] sm:$0xff] %vm455, 0.0
      %817 = vst.msk [vmem:[#allocation2 + $0x118] sm:$0x3] %vm783, 0.0
      %818 = vst.msk [vmem:[#allocation2 + $0x120] sm:$0xff] %vm455, 0.0
      %819 = vst.msk [vmem:[#allocation2 + $0x128] sm:$0xff] %vm455, 0.0
      %820 = vst.msk [vmem:[#allocation2 + $0x130] sm:$0x3] %vm783, 0.0
      %821 = vst.msk [vmem:[#allocation2 + $0x138] sm:$0xff] %vm455, 0.0
      %822 = vst.msk [vmem:[#allocation2 + $0x140] sm:$0xff] %vm455, 0.0
      %823 = vst.msk [vmem:[#allocation2 + $0x148] sm:$0x3] %vm783, 0.0
      %824 = vst.msk [vmem:[#allocation2 + $0x150] sm:$0xff] %vm455, 0.0
      %825 = vst.msk [vmem:[#allocation2 + $0x158] sm:$0xff] %vm455, 0.0
      %826 = vst.msk [vmem:[#allocation2 + $0x160] sm:$0x3] %vm783, 0.0
      %827 = vst.msk [vmem:[#allocation2 + $0x168] sm:$0xff] %vm455, 0.0
      %828 = vst.msk [vmem:[#allocation2 + $0x170] sm:$0xff] %vm455, 0.0
      %829 = vst.msk [vmem:[#allocation2 + $0x178] sm:$0x3] %vm783, 0.0
      %830 = vst.msk [vmem:[#allocation2 + $0x180] sm:$0xff] %vm455, 0.0
      %831 = vst.msk [vmem:[#allocation2 + $0x188] sm:$0xff] %vm455, 0.0
      %832 = vst.msk [vmem:[#allocation2 + $0x190] sm:$0x3] %vm783, 0.0
      %833 = vst.msk [vmem:[#allocation2 + $0x198] sm:$0xff] %vm455, 0.0
      %834 = vst.msk [vmem:[#allocation2 + $0x1a0] sm:$0xff] %vm455, 0.0
      %835 = vst.msk [vmem:[#allocation2 + $0x1a8] sm:$0x3] %vm783, 0.0
      %s836 = scalar_lea.vmem [#allocation2], 24
      %837 = vst.msk [vmem:[%s836 + $0x1] sm:$0xff] %vm455, %v415
      %838 = vst.msk [vmem:[%s836 + $0x9] sm:$0xff] %vm455, %v416
      %839 = vst.msk [vmem:[%s836 + $0x19] sm:$0xff] %vm455, %v417
      %840 = vst.msk [vmem:[%s836 + $0x21] sm:$0xff] %vm455, %v418
      %841 = vst.msk [vmem:[%s836 + $0x31] sm:$0xff] %vm455, %v419
      %842 = vst.msk [vmem:[%s836 + $0x39] sm:$0xff] %vm455, %v420
      %843 = vst.msk [vmem:[%s836 + $0x49] sm:$0xff] %vm455, %v421
      %844 = vst.msk [vmem:[%s836 + $0x51] sm:$0xff] %vm455, %v422
      %845 = vst.msk [vmem:[%s836 + $0x61] sm:$0xff] %vm455, %v423
      %846 = vst.msk [vmem:[%s836 + $0x69] sm:$0xff] %vm455, %v424
      %847 = vst.msk [vmem:[%s836 + $0x79] sm:$0xff] %vm455, %v425
      %848 = vst.msk [vmem:[%s836 + $0x81] sm:$0xff] %vm455, %v426
      %849 = vst.msk [vmem:[%s836 + $0x91] sm:$0xff] %vm455, %v427
      %850 = vst.msk [vmem:[%s836 + $0x99] sm:$0xff] %vm455, %v428
      %851 = vst.msk [vmem:[%s836 + $0xa9] sm:$0xff] %vm455, %v429
      %852 = vst.msk [vmem:[%s836 + $0xb1] sm:$0xff] %vm455, %v430
      %853 = vst.msk [vmem:[%s836 + $0xc1] sm:$0xff] %vm455, %v431
      %854 = vst.msk [vmem:[%s836 + $0xc9] sm:$0xff] %vm455, %v432
      %855 = vst.msk [vmem:[%s836 + $0xd9] sm:$0xff] %vm455, %v433
      %856 = vst.msk [vmem:[%s836 + $0xe1] sm:$0xff] %vm455, %v434
      %857 = vst.msk [vmem:[%s836 + $0xf1] sm:$0xff] %vm455, %v435
      %858 = vst.msk [vmem:[%s836 + $0xf9] sm:$0xff] %vm455, %v436
      %859 = vst.msk [vmem:[%s836 + $0x109] sm:$0xff] %vm455, %v437
      %860 = vst.msk [vmem:[%s836 + $0x111] sm:$0xff] %vm455, %v438
      %861 = vst.msk [vmem:[%s836 + $0x121] sm:$0xff] %vm455, %v439
      %862 = vst.msk [vmem:[%s836 + $0x129] sm:$0xff] %vm455, %v440
      %863 = vst.msk [vmem:[%s836 + $0x139] sm:$0xff] %vm455, %v441
      %864 = vst.msk [vmem:[%s836 + $0x141] sm:$0xff] %vm455, %v442
      %865 = vst.msk [vmem:[%s836 + $0x151] sm:$0xff] %vm455, %v443
      %866 = vst.msk [vmem:[%s836 + $0x159] sm:$0xff] %vm455, %v444
      %867 = vst.msk [vmem:[%s836 + $0x169] sm:$0xff] %vm455, %v445
      %868 = vst.msk [vmem:[%s836 + $0x171] sm:$0xff] %vm455, %v446
      %v869 = vld [vmem:[#allocation2] sm:$0xff]
      %v870 = vld [vmem:[#allocation2 + $0x8] sm:$0xff]
      %v871 = vld [vmem:[#allocation2 + $0x18] sm:$0xff]
      %v872 = vld [vmem:[#allocation2 + $0x20] sm:$0xff]
      %v873 = vld [vmem:[#allocation2 + $0x30] sm:$0xff]
      %v874 = vld [vmem:[#allocation2 + $0x38] sm:$0xff]
      %v875 = vld [vmem:[#allocation2 + $0x48] sm:$0xff]
      %v876 = vld [vmem:[#allocation2 + $0x50] sm:$0xff]
      %v877 = vld [vmem:[#allocation2 + $0x60] sm:$0xff]
      %v878 = vld [vmem:[#allocation2 + $0x68] sm:$0xff]
      %v879 = vld [vmem:[#allocation2 + $0x78] sm:$0xff]
      %v880 = vld [vmem:[#allocation2 + $0x80] sm:$0xff]
      %v881 = vld [vmem:[#allocation2 + $0x90] sm:$0xff]
      %v882 = vld [vmem:[#allocation2 + $0x98] sm:$0xff]
      %v883 = vld [vmem:[#allocation2 + $0xa8] sm:$0xff]
      %v884 = vld [vmem:[#allocation2 + $0xb0] sm:$0xff]
      %v885 = vld [vmem:[#allocation2 + $0xc0] sm:$0xff]
      %v886 = vld [vmem:[#allocation2 + $0xc8] sm:$0xff]
      %v887 = vld [vmem:[#allocation2 + $0xd8] sm:$0xff]
      %v888 = vld [vmem:[#allocation2 + $0xe0] sm:$0xff]
      %v889 = vld [vmem:[#allocation2 + $0xf0] sm:$0xff]
      %v890 = vld [vmem:[#allocation2 + $0xf8] sm:$0xff]
      %v891 = vld [vmem:[#allocation2 + $0x108] sm:$0xff]
      %v892 = vld [vmem:[#allocation2 + $0x110] sm:$0xff]
      %v893 = vld [vmem:[#allocation2 + $0x120] sm:$0xff]
      %v894 = vld [vmem:[#allocation2 + $0x128] sm:$0xff]
      %v895 = vld [vmem:[#allocation2 + $0x138] sm:$0xff]
      %v896 = vld [vmem:[#allocation2 + $0x140] sm:$0xff]
      %v897 = vld [vmem:[#allocation2 + $0x150] sm:$0xff]
      %v898 = vld [vmem:[#allocation2 + $0x158] sm:$0xff]
      %v899 = vld [vmem:[#allocation2 + $0x168] sm:$0xff]
      %v900 = vld [vmem:[#allocation2 + $0x170] sm:$0xff]
      %v901 = vld [vmem:[#allocation2 + $0x1] sm:$0xff]
      %v902 = vld [vmem:[#allocation2 + $0x9] sm:$0xff]
      %v903 = vld [vmem:[#allocation2 + $0x19] sm:$0xff]
      %v904 = vld [vmem:[#allocation2 + $0x21] sm:$0xff]
      %v905 = vld [vmem:[#allocation2 + $0x31] sm:$0xff]
      %v906 = vld [vmem:[#allocation2 + $0x39] sm:$0xff]
      %v907 = vld [vmem:[#allocation2 + $0x49] sm:$0xff]
      %v908 = vld [vmem:[#allocation2 + $0x51] sm:$0xff]
      %v909 = vld [vmem:[#allocation2 + $0x61] sm:$0xff]
      %v910 = vld [vmem:[#allocation2 + $0x69] sm:$0xff]
      %v911 = vld [vmem:[#allocation2 + $0x79] sm:$0xff]
      %v912 = vld [vmem:[#allocation2 + $0x81] sm:$0xff]
      %v913 = vld [vmem:[#allocation2 + $0x91] sm:$0xff]
      %v914 = vld [vmem:[#allocation2 + $0x99] sm:$0xff]
      %v915 = vld [vmem:[#allocation2 + $0xa9] sm:$0xff]
      %v916 = vld [vmem:[#allocation2 + $0xb1] sm:$0xff]
      %v917 = vld [vmem:[#allocation2 + $0xc1] sm:$0xff]
      %v918 = vld [vmem:[#allocation2 + $0xc9] sm:$0xff]
      %v919 = vld [vmem:[#allocation2 + $0xd9] sm:$0xff]
      %v920 = vld [vmem:[#allocation2 + $0xe1] sm:$0xff]
      %v921 = vld [vmem:[#allocation2 + $0xf1] sm:$0xff]
      %v922 = vld [vmem:[#allocation2 + $0xf9] sm:$0xff]
      %v923 = vld [vmem:[#allocation2 + $0x109] sm:$0xff]
      %v924 = vld [vmem:[#allocation2 + $0x111] sm:$0xff]
      %v925 = vld [vmem:[#allocation2 + $0x121] sm:$0xff]
      %v926 = vld [vmem:[#allocation2 + $0x129] sm:$0xff]
      %v927 = vld [vmem:[#allocation2 + $0x139] sm:$0xff]
      %v928 = vld [vmem:[#allocation2 + $0x141] sm:$0xff]
      %v929 = vld [vmem:[#allocation2 + $0x151] sm:$0xff]
      %v930 = vld [vmem:[#allocation2 + $0x159] sm:$0xff]
      %v931 = vld [vmem:[#allocation2 + $0x169] sm:$0xff]
      %v932 = vld [vmem:[#allocation2 + $0x171] sm:$0xff]
      %v933 = vld [vmem:[#allocation2 + $0x2] sm:$0xff]
      %v934 = vld [vmem:[#allocation2 + $0xa] sm:$0xff]
      %v935 = vld [vmem:[#allocation2 + $0x1a] sm:$0xff]
      %v936 = vld [vmem:[#allocation2 + $0x22] sm:$0xff]
      %v937 = vld [vmem:[#allocation2 + $0x32] sm:$0xff]
      %v938 = vld [vmem:[#allocation2 + $0x3a] sm:$0xff]
      %v939 = vld [vmem:[#allocation2 + $0x4a] sm:$0xff]
      %v940 = vld [vmem:[#allocation2 + $0x52] sm:$0xff]
      %v941 = vld [vmem:[#allocation2 + $0x62] sm:$0xff]
      %v942 = vld [vmem:[#allocation2 + $0x6a] sm:$0xff]
      %v943 = vld [vmem:[#allocation2 + $0x7a] sm:$0xff]
      %v944 = vld [vmem:[#allocation2 + $0x82] sm:$0xff]
      %v945 = vld [vmem:[#allocation2 + $0x92] sm:$0xff]
      %v946 = vld [vmem:[#allocation2 + $0x9a] sm:$0xff]
      %v947 = vld [vmem:[#allocation2 + $0xaa] sm:$0xff]
      %v948 = vld [vmem:[#allocation2 + $0xb2] sm:$0xff]
      %v949 = vld [vmem:[#allocation2 + $0xc2] sm:$0xff]
      %v950 = vld [vmem:[#allocation2 + $0xca] sm:$0xff]
      %v951 = vld [vmem:[#allocation2 + $0xda] sm:$0xff]
      %v952 = vld [vmem:[#allocation2 + $0xe2] sm:$0xff]
      %v953 = vld [vmem:[#allocation2 + $0xf2] sm:$0xff]
      %v954 = vld [vmem:[#allocation2 + $0xfa] sm:$0xff]
      %v955 = vld [vmem:[#allocation2 + $0x10a] sm:$0xff]
      %v956 = vld [vmem:[#allocation2 + $0x112] sm:$0xff]
      %v957 = vld [vmem:[#allocation2 + $0x122] sm:$0xff]
      %v958 = vld [vmem:[#allocation2 + $0x12a] sm:$0xff]
      %v959 = vld [vmem:[#allocation2 + $0x13a] sm:$0xff]
      %v960 = vld [vmem:[#allocation2 + $0x142] sm:$0xff]
      %v961 = vld [vmem:[#allocation2 + $0x152] sm:$0xff]
      %v962 = vld [vmem:[#allocation2 + $0x15a] sm:$0xff]
      %v963 = vld [vmem:[#allocation2 + $0x16a] sm:$0xff]
      %v964 = vld [vmem:[#allocation2 + $0x172] sm:$0xff]
      %v965 = vld [vmem:[%s836] sm:$0xff]
      %v966 = vld [vmem:[%s836 + $0x8] sm:$0xff]
      %v967 = vld [vmem:[%s836 + $0x18] sm:$0xff]
      %v968 = vld [vmem:[%s836 + $0x20] sm:$0xff]
      %v969 = vld [vmem:[%s836 + $0x30] sm:$0xff]
      %v970 = vld [vmem:[%s836 + $0x38] sm:$0xff]
      %v971 = vld [vmem:[%s836 + $0x48] sm:$0xff]
      %v972 = vld [vmem:[%s836 + $0x50] sm:$0xff]
      %v973 = vld [vmem:[%s836 + $0x60] sm:$0xff]
      %v974 = vld [vmem:[%s836 + $0x68] sm:$0xff]
      %v975 = vld [vmem:[%s836 + $0x78] sm:$0xff]
      %v976 = vld [vmem:[%s836 + $0x80] sm:$0xff]
      %v977 = vld [vmem:[%s836 + $0x90] sm:$0xff]
      %v978 = vld [vmem:[%s836 + $0x98] sm:$0xff]
      %v979 = vld [vmem:[%s836 + $0xa8] sm:$0xff]
      %v980 = vld [vmem:[%s836 + $0xb0] sm:$0xff]
      %v981 = vld [vmem:[%s836 + $0xc0] sm:$0xff]
      %v982 = vld [vmem:[%s836 + $0xc8] sm:$0xff]
      %v983 = vld [vmem:[%s836 + $0xd8] sm:$0xff]
      %v984 = vld [vmem:[%s836 + $0xe0] sm:$0xff]
      %v985 = vld [vmem:[%s836 + $0xf0] sm:$0xff]
      %v986 = vld [vmem:[%s836 + $0xf8] sm:$0xff]
      %v987 = vld [vmem:[%s836 + $0x108] sm:$0xff]
      %v988 = vld [vmem:[%s836 + $0x110] sm:$0xff]
      %v989 = vld [vmem:[%s836 + $0x120] sm:$0xff]
      %v990 = vld [vmem:[%s836 + $0x128] sm:$0xff]
      %v991 = vld [vmem:[%s836 + $0x138] sm:$0xff]
      %v992 = vld [vmem:[%s836 + $0x140] sm:$0xff]
      %v993 = vld [vmem:[%s836 + $0x150] sm:$0xff]
      %v994 = vld [vmem:[%s836 + $0x158] sm:$0xff]
      %v995 = vld [vmem:[%s836 + $0x168] sm:$0xff]
      %v996 = vld [vmem:[%s836 + $0x170] sm:$0xff]
      %v997 = vld [vmem:[%s836 + $0x1] sm:$0xff]
      %v998 = vld [vmem:[%s836 + $0x9] sm:$0xff]
      %v999 = vld [vmem:[%s836 + $0x19] sm:$0xff]
      %v1000 = vld [vmem:[%s836 + $0x21] sm:$0xff]
      %v1001 = vld [vmem:[%s836 + $0x31] sm:$0xff]
      %v1002 = vld [vmem:[%s836 + $0x39] sm:$0xff]
      %v1003 = vld [vmem:[%s836 + $0x49] sm:$0xff]
      %v1004 = vld [vmem:[%s836 + $0x51] sm:$0xff]
      %v1005 = vld [vmem:[%s836 + $0x61] sm:$0xff]
      %v1006 = vld [vmem:[%s836 + $0x69] sm:$0xff]
      %v1007 = vld [vmem:[%s836 + $0x79] sm:$0xff]
      %v1008 = vld [vmem:[%s836 + $0x81] sm:$0xff]
      %v1009 = vld [vmem:[%s836 + $0x91] sm:$0xff]
      %v1010 = vld [vmem:[%s836 + $0x99] sm:$0xff]
      %v1011 = vld [vmem:[%s836 + $0xa9] sm:$0xff]
      %v1012 = vld [vmem:[%s836 + $0xb1] sm:$0xff]
      %v1013 = vld [vmem:[%s836 + $0xc1] sm:$0xff]
      %v1014 = vld [vmem:[%s836 + $0xc9] sm:$0xff]
      %v1015 = vld [vmem:[%s836 + $0xd9] sm:$0xff]
      %v1016 = vld [vmem:[%s836 + $0xe1] sm:$0xff]
      %v1017 = vld [vmem:[%s836 + $0xf1] sm:$0xff]
      %v1018 = vld [vmem:[%s836 + $0xf9] sm:$0xff]
      %v1019 = vld [vmem:[%s836 + $0x109] sm:$0xff]
      %v1020 = vld [vmem:[%s836 + $0x111] sm:$0xff]
      %v1021 = vld [vmem:[%s836 + $0x121] sm:$0xff]
      %v1022 = vld [vmem:[%s836 + $0x129] sm:$0xff]
      %v1023 = vld [vmem:[%s836 + $0x139] sm:$0xff]
      %v1024 = vld [vmem:[%s836 + $0x141] sm:$0xff]
      %v1025 = vld [vmem:[%s836 + $0x151] sm:$0xff]
      %v1026 = vld [vmem:[%s836 + $0x159] sm:$0xff]
      %v1027 = vld [vmem:[%s836 + $0x169] sm:$0xff]
      %v1028 = vld [vmem:[%s836 + $0x171] sm:$0xff]
      %v1029 = vld [vmem:[%s836 + $0x2] sm:$0xff]
      %v1030 = vld [vmem:[%s836 + $0xa] sm:$0xff]
      %v1031 = vld [vmem:[%s836 + $0x1a] sm:$0xff]
      %v1032 = vld [vmem:[%s836 + $0x22] sm:$0xff]
      %v1033 = vld [vmem:[%s836 + $0x32] sm:$0xff]
      %v1034 = vld [vmem:[%s836 + $0x3a] sm:$0xff]
      %v1035 = vld [vmem:[%s836 + $0x4a] sm:$0xff]
      %v1036 = vld [vmem:[%s836 + $0x52] sm:$0xff]
      %v1037 = vld [vmem:[%s836 + $0x62] sm:$0xff]
      %v1038 = vld [vmem:[%s836 + $0x6a] sm:$0xff]
      %v1039 = vld [vmem:[%s836 + $0x7a] sm:$0xff]
      %v1040 = vld [vmem:[%s836 + $0x82] sm:$0xff]
      %v1041 = vld [vmem:[%s836 + $0x92] sm:$0xff]
      %v1042 = vld [vmem:[%s836 + $0x9a] sm:$0xff]
      %v1043 = vld [vmem:[%s836 + $0xaa] sm:$0xff]
      %v1044 = vld [vmem:[%s836 + $0xb2] sm:$0xff]
      %v1045 = vld [vmem:[%s836 + $0xc2] sm:$0xff]
      %v1046 = vld [vmem:[%s836 + $0xca] sm:$0xff]
      %v1047 = vld [vmem:[%s836 + $0xda] sm:$0xff]
      %v1048 = vld [vmem:[%s836 + $0xe2] sm:$0xff]
      %v1049 = vld [vmem:[%s836 + $0xf2] sm:$0xff]
      %v1050 = vld [vmem:[%s836 + $0xfa] sm:$0xff]
      %v1051 = vld [vmem:[%s836 + $0x10a] sm:$0xff]
      %v1052 = vld [vmem:[%s836 + $0x112] sm:$0xff]
      %v1053 = vld [vmem:[%s836 + $0x122] sm:$0xff]
      %v1054 = vld [vmem:[%s836 + $0x12a] sm:$0xff]
      %v1055 = vld [vmem:[%s836 + $0x13a] sm:$0xff]
      %v1056 = vld [vmem:[%s836 + $0x142] sm:$0xff]
      %v1057 = vld [vmem:[%s836 + $0x152] sm:$0xff]
      %v1058 = vld [vmem:[%s836 + $0x15a] sm:$0xff]
      %v1059 = vld [vmem:[%s836 + $0x16a] sm:$0xff]
      %v1060 = vld [vmem:[%s836 + $0x172] sm:$0xff]
      %s1061 = scalar_lea.vmem [#allocation2], 48
      %v1062 = vld [vmem:[%s1061] sm:$0xff]
      %v1063 = vld [vmem:[%s1061 + $0x8] sm:$0xff]
      %v1064 = vld [vmem:[%s1061 + $0x18] sm:$0xff]
      %v1065 = vld [vmem:[%s1061 + $0x20] sm:$0xff]
      %v1066 = vld [vmem:[%s1061 + $0x30] sm:$0xff]
      %v1067 = vld [vmem:[%s1061 + $0x38] sm:$0xff]
      %v1068 = vld [vmem:[%s1061 + $0x48] sm:$0xff]
      %v1069 = vld [vmem:[%s1061 + $0x50] sm:$0xff]
      %v1070 = vld [vmem:[%s1061 + $0x60] sm:$0xff]
      %v1071 = vld [vmem:[%s1061 + $0x68] sm:$0xff]
      %v1072 = vld [vmem:[%s1061 + $0x78] sm:$0xff]
      %v1073 = vld [vmem:[%s1061 + $0x80] sm:$0xff]
      %v1074 = vld [vmem:[%s1061 + $0x90] sm:$0xff]
      %v1075 = vld [vmem:[%s1061 + $0x98] sm:$0xff]
      %v1076 = vld [vmem:[%s1061 + $0xa8] sm:$0xff]
      %v1077 = vld [vmem:[%s1061 + $0xb0] sm:$0xff]
      %v1078 = vld [vmem:[%s1061 + $0xc0] sm:$0xff]
      %v1079 = vld [vmem:[%s1061 + $0xc8] sm:$0xff]
      %v1080 = vld [vmem:[%s1061 + $0xd8] sm:$0xff]
      %v1081 = vld [vmem:[%s1061 + $0xe0] sm:$0xff]
      %v1082 = vld [vmem:[%s1061 + $0xf0] sm:$0xff]
      %v1083 = vld [vmem:[%s1061 + $0xf8] sm:$0xff]
      %v1084 = vld [vmem:[%s1061 + $0x108] sm:$0xff]
      %v1085 = vld [vmem:[%s1061 + $0x110] sm:$0xff]
      %v1086 = vld [vmem:[%s1061 + $0x120] sm:$0xff]
      %v1087 = vld [vmem:[%s1061 + $0x128] sm:$0xff]
      %v1088 = vld [vmem:[%s1061 + $0x138] sm:$0xff]
      %v1089 = vld [vmem:[%s1061 + $0x140] sm:$0xff]
      %v1090 = vld [vmem:[%s1061 + $0x150] sm:$0xff]
      %v1091 = vld [vmem:[%s1061 + $0x158] sm:$0xff]
      %v1092 = vld [vmem:[%s1061 + $0x168] sm:$0xff]
      %v1093 = vld [vmem:[%s1061 + $0x170] sm:$0xff]
      %v1094 = vld [vmem:[%s1061 + $0x1] sm:$0xff]
      %v1095 = vld [vmem:[%s1061 + $0x9] sm:$0xff]
      %v1096 = vld [vmem:[%s1061 + $0x19] sm:$0xff]
      %v1097 = vld [vmem:[%s1061 + $0x21] sm:$0xff]
      %v1098 = vld [vmem:[%s1061 + $0x31] sm:$0xff]
      %v1099 = vld [vmem:[%s1061 + $0x39] sm:$0xff]
      %v1100 = vld [vmem:[%s1061 + $0x49] sm:$0xff]
      %v1101 = vld [vmem:[%s1061 + $0x51] sm:$0xff]
      %v1102 = vld [vmem:[%s1061 + $0x61] sm:$0xff]
      %v1103 = vld [vmem:[%s1061 + $0x69] sm:$0xff]
      %v1104 = vld [vmem:[%s1061 + $0x79] sm:$0xff]
      %v1105 = vld [vmem:[%s1061 + $0x81] sm:$0xff]
      %v1106 = vld [vmem:[%s1061 + $0x91] sm:$0xff]
      %v1107 = vld [vmem:[%s1061 + $0x99] sm:$0xff]
      %v1108 = vld [vmem:[%s1061 + $0xa9] sm:$0xff]
      %v1109 = vld [vmem:[%s1061 + $0xb1] sm:$0xff]
      %v1110 = vld [vmem:[%s1061 + $0xc1] sm:$0xff]
      %v1111 = vld [vmem:[%s1061 + $0xc9] sm:$0xff]
      %v1112 = vld [vmem:[%s1061 + $0xd9] sm:$0xff]
      %v1113 = vld [vmem:[%s1061 + $0xe1] sm:$0xff]
      %v1114 = vld [vmem:[%s1061 + $0xf1] sm:$0xff]
      %v1115 = vld [vmem:[%s1061 + $0xf9] sm:$0xff]
      %v1116 = vld [vmem:[%s1061 + $0x109] sm:$0xff]
      %v1117 = vld [vmem:[%s1061 + $0x111] sm:$0xff]
      %v1118 = vld [vmem:[%s1061 + $0x121] sm:$0xff]
      %v1119 = vld [vmem:[%s1061 + $0x129] sm:$0xff]
      %v1120 = vld [vmem:[%s1061 + $0x139] sm:$0xff]
      %v1121 = vld [vmem:[%s1061 + $0x141] sm:$0xff]
      %v1122 = vld [vmem:[%s1061 + $0x151] sm:$0xff]
      %v1123 = vld [vmem:[%s1061 + $0x159] sm:$0xff]
      %v1124 = vld [vmem:[%s1061 + $0x169] sm:$0xff]
      %v1125 = vld [vmem:[%s1061 + $0x171] sm:$0xff]
      %v1126 = vld [vmem:[%s1061 + $0x2] sm:$0xff]
      %v1127 = vld [vmem:[%s1061 + $0xa] sm:$0xff]
      %v1128 = vld [vmem:[%s1061 + $0x1a] sm:$0xff]
      %v1129 = vld [vmem:[%s1061 + $0x22] sm:$0xff]
      %v1130 = vld [vmem:[%s1061 + $0x32] sm:$0xff]
      %v1131 = vld [vmem:[%s1061 + $0x3a] sm:$0xff]
      %v1132 = vld [vmem:[%s1061 + $0x4a] sm:$0xff]
      %v1133 = vld [vmem:[%s1061 + $0x52] sm:$0xff]
      %v1134 = vld [vmem:[%s1061 + $0x62] sm:$0xff]
      %v1135 = vld [vmem:[%s1061 + $0x6a] sm:$0xff]
      %v1136 = vld [vmem:[%s1061 + $0x7a] sm:$0xff]
      %v1137 = vld [vmem:[%s1061 + $0x82] sm:$0xff]
      %v1138 = vld [vmem:[%s1061 + $0x92] sm:$0xff]
      %v1139 = vld [vmem:[%s1061 + $0x9a] sm:$0xff]
      %v1140 = vld [vmem:[%s1061 + $0xaa] sm:$0xff]
      %v1141 = vld [vmem:[%s1061 + $0xb2] sm:$0xff]
      %v1142 = vld [vmem:[%s1061 + $0xc2] sm:$0xff]
      %v1143 = vld [vmem:[%s1061 + $0xca] sm:$0xff]
      %v1144 = vld [vmem:[%s1061 + $0xda] sm:$0xff]
      %v1145 = vld [vmem:[%s1061 + $0xe2] sm:$0xff]
      %v1146 = vld [vmem:[%s1061 + $0xf2] sm:$0xff]
      %v1147 = vld [vmem:[%s1061 + $0xfa] sm:$0xff]
      %v1148 = vld [vmem:[%s1061 + $0x10a] sm:$0xff]
      %v1149 = vld [vmem:[%s1061 + $0x112] sm:$0xff]
      %v1150 = vld [vmem:[%s1061 + $0x122] sm:$0xff]
      %v1151 = vld [vmem:[%s1061 + $0x12a] sm:$0xff]
      %v1152 = vld [vmem:[%s1061 + $0x13a] sm:$0xff]
      %v1153 = vld [vmem:[%s1061 + $0x142] sm:$0xff]
      %v1154 = vld [vmem:[%s1061 + $0x152] sm:$0xff]
      %v1155 = vld [vmem:[%s1061 + $0x15a] sm:$0xff]
      %v1156 = vld [vmem:[%s1061 + $0x16a] sm:$0xff]
      %v1157 = vld [vmem:[%s1061 + $0x172] sm:$0xff]
      %1190 = vrot.lane.b32.xlu0 %v901, 4
      %v1191 = vpop.permute.xlu0 %1190
      %1192 = vrot.lane.b32.xlu0 %v902, 4
      %v1193 = vpop.permute.xlu0 %1192
      %1194 = vrot.lane.b32.xlu0 %v903, 4
      %v1195 = vpop.permute.xlu0 %1194
      %1196 = vrot.lane.b32.xlu0 %v904, 4
      %v1197 = vpop.permute.xlu0 %1196
      %1198 = vrot.lane.b32.xlu0 %v905, 4
      %v1199 = vpop.permute.xlu0 %1198
      %1200 = vrot.lane.b32.xlu0 %v906, 4
      %v1201 = vpop.permute.xlu0 %1200
      %1202 = vrot.lane.b32.xlu0 %v907, 4
      %v1203 = vpop.permute.xlu0 %1202
      %1204 = vrot.lane.b32.xlu0 %v908, 4
      %v1205 = vpop.permute.xlu0 %1204
      %1206 = vrot.lane.b32.xlu0 %v909, 4
      %v1207 = vpop.permute.xlu0 %1206
      %1208 = vrot.lane.b32.xlu0 %v910, 4
      %v1209 = vpop.permute.xlu0 %1208
      %1210 = vrot.lane.b32.xlu0 %v911, 4
      %v1211 = vpop.permute.xlu0 %1210
      %1212 = vrot.lane.b32.xlu0 %v912, 4
      %v1213 = vpop.permute.xlu0 %1212
      %1214 = vrot.lane.b32.xlu0 %v913, 4
      %v1215 = vpop.permute.xlu0 %1214
      %1216 = vrot.lane.b32.xlu0 %v914, 4
      %v1217 = vpop.permute.xlu0 %1216
      %1218 = vrot.lane.b32.xlu0 %v915, 4
      %v1219 = vpop.permute.xlu0 %1218
      %1220 = vrot.lane.b32.xlu0 %v916, 4
      %v1221 = vpop.permute.xlu0 %1220
      %1222 = vrot.lane.b32.xlu0 %v917, 4
      %v1223 = vpop.permute.xlu0 %1222
      %1224 = vrot.lane.b32.xlu0 %v918, 4
      %v1225 = vpop.permute.xlu0 %1224
      %1226 = vrot.lane.b32.xlu0 %v919, 4
      %v1227 = vpop.permute.xlu0 %1226
      %1228 = vrot.lane.b32.xlu0 %v920, 4
      %v1229 = vpop.permute.xlu0 %1228
      %1230 = vrot.lane.b32.xlu0 %v921, 4
      %v1231 = vpop.permute.xlu0 %1230
      %1232 = vrot.lane.b32.xlu0 %v922, 4
      %v1233 = vpop.permute.xlu0 %1232
      %1234 = vrot.lane.b32.xlu0 %v923, 4
      %v1235 = vpop.permute.xlu0 %1234
      %1236 = vrot.lane.b32.xlu0 %v924, 4
      %v1237 = vpop.permute.xlu0 %1236
      %1238 = vrot.lane.b32.xlu0 %v925, 4
      %v1239 = vpop.permute.xlu0 %1238
      %1240 = vrot.lane.b32.xlu0 %v926, 4
      %v1241 = vpop.permute.xlu0 %1240
      %1242 = vrot.lane.b32.xlu0 %v927, 4
      %v1243 = vpop.permute.xlu0 %1242
      %1244 = vrot.lane.b32.xlu0 %v928, 4
      %v1245 = vpop.permute.xlu0 %1244
      %1246 = vrot.lane.b32.xlu0 %v929, 4
      %v1247 = vpop.permute.xlu0 %1246
      %1248 = vrot.lane.b32.xlu0 %v930, 4
      %v1249 = vpop.permute.xlu0 %1248
      %1250 = vrot.lane.b32.xlu0 %v931, 4
      %v1251 = vpop.permute.xlu0 %1250
      %1252 = vrot.lane.b32.xlu0 %v932, 4
      %v1253 = vpop.permute.xlu0 %1252
      %1318 = vrot.lane.b32.xlu0 %v933, 8
      %v1319 = vpop.permute.xlu0 %1318
      %1320 = vrot.lane.b32.xlu0 %v934, 8
      %v1321 = vpop.permute.xlu0 %1320
      %1322 = vrot.lane.b32.xlu0 %v935, 8
      %v1323 = vpop.permute.xlu0 %1322
      %1324 = vrot.lane.b32.xlu0 %v936, 8
      %v1325 = vpop.permute.xlu0 %1324
      %1326 = vrot.lane.b32.xlu0 %v937, 8
      %v1327 = vpop.permute.xlu0 %1326
      %1328 = vrot.lane.b32.xlu0 %v938, 8
      %v1329 = vpop.permute.xlu0 %1328
      %1330 = vrot.lane.b32.xlu0 %v939, 8
      %v1331 = vpop.permute.xlu0 %1330
      %1332 = vrot.lane.b32.xlu0 %v940, 8
      %v1333 = vpop.permute.xlu0 %1332
      %1334 = vrot.lane.b32.xlu0 %v941, 8
      %v1335 = vpop.permute.xlu0 %1334
      %1336 = vrot.lane.b32.xlu0 %v942, 8
      %v1337 = vpop.permute.xlu0 %1336
      %1338 = vrot.lane.b32.xlu0 %v943, 8
      %v1339 = vpop.permute.xlu0 %1338
      %1340 = vrot.lane.b32.xlu0 %v944, 8
      %v1341 = vpop.permute.xlu0 %1340
      %1342 = vrot.lane.b32.xlu0 %v945, 8
      %v1343 = vpop.permute.xlu0 %1342
      %1344 = vrot.lane.b32.xlu0 %v946, 8
      %v1345 = vpop.permute.xlu0 %1344
      %1346 = vrot.lane.b32.xlu0 %v947, 8
      %v1347 = vpop.permute.xlu0 %1346
      %1348 = vrot.lane.b32.xlu0 %v948, 8
      %v1349 = vpop.permute.xlu0 %1348
      %1350 = vrot.lane.b32.xlu0 %v949, 8
      %v1351 = vpop.permute.xlu0 %1350
      %1352 = vrot.lane.b32.xlu0 %v950, 8
      %v1353 = vpop.permute.xlu0 %1352
      %1354 = vrot.lane.b32.xlu0 %v951, 8
      %v1355 = vpop.permute.xlu0 %1354
      %1356 = vrot.lane.b32.xlu0 %v952, 8
      %v1357 = vpop.permute.xlu0 %1356
      %1358 = vrot.lane.b32.xlu0 %v953, 8
      %v1359 = vpop.permute.xlu0 %1358
      %1360 = vrot.lane.b32.xlu0 %v954, 8
      %v1361 = vpop.permute.xlu0 %1360
      %1362 = vrot.lane.b32.xlu0 %v955, 8
      %v1363 = vpop.permute.xlu0 %1362
      %1364 = vrot.lane.b32.xlu0 %v956, 8
      %v1365 = vpop.permute.xlu0 %1364
      %1366 = vrot.lane.b32.xlu0 %v957, 8
      %v1367 = vpop.permute.xlu0 %1366
      %1368 = vrot.lane.b32.xlu0 %v958, 8
      %v1369 = vpop.permute.xlu0 %1368
      %1370 = vrot.lane.b32.xlu0 %v959, 8
      %v1371 = vpop.permute.xlu0 %1370
      %1372 = vrot.lane.b32.xlu0 %v960, 8
      %v1373 = vpop.permute.xlu0 %1372
      %1374 = vrot.lane.b32.xlu0 %v961, 8
      %v1375 = vpop.permute.xlu0 %1374
      %1376 = vrot.lane.b32.xlu0 %v962, 8
      %v1377 = vpop.permute.xlu0 %1376
      %1378 = vrot.lane.b32.xlu0 %v963, 8
      %v1379 = vpop.permute.xlu0 %1378
      %1380 = vrot.lane.b32.xlu0 %v964, 8
      %v1381 = vpop.permute.xlu0 %1380
      %1446 = vrot.lane.b32.xlu0 %v965, 12
      %v1447 = vpop.permute.xlu0 %1446
      %1448 = vrot.lane.b32.xlu0 %v966, 12
      %v1449 = vpop.permute.xlu0 %1448
      %1450 = vrot.lane.b32.xlu0 %v967, 12
      %v1451 = vpop.permute.xlu0 %1450
      %1452 = vrot.lane.b32.xlu0 %v968, 12
      %v1453 = vpop.permute.xlu0 %1452
      %1454 = vrot.lane.b32.xlu0 %v969, 12
      %v1455 = vpop.permute.xlu0 %1454
      %1456 = vrot.lane.b32.xlu0 %v970, 12
      %v1457 = vpop.permute.xlu0 %1456
      %1458 = vrot.lane.b32.xlu0 %v971, 12
      %v1459 = vpop.permute.xlu0 %1458
      %1460 = vrot.lane.b32.xlu0 %v972, 12
      %v1461 = vpop.permute.xlu0 %1460
      %1462 = vrot.lane.b32.xlu0 %v973, 12
      %v1463 = vpop.permute.xlu0 %1462
      %1464 = vrot.lane.b32.xlu0 %v974, 12
      %v1465 = vpop.permute.xlu0 %1464
      %1466 = vrot.lane.b32.xlu0 %v975, 12
      %v1467 = vpop.permute.xlu0 %1466
      %1468 = vrot.lane.b32.xlu0 %v976, 12
      %v1469 = vpop.permute.xlu0 %1468
      %1470 = vrot.lane.b32.xlu0 %v977, 12
      %v1471 = vpop.permute.xlu0 %1470
      %1472 = vrot.lane.b32.xlu0 %v978, 12
      %v1473 = vpop.permute.xlu0 %1472
      %1474 = vrot.lane.b32.xlu0 %v979, 12
      %v1475 = vpop.permute.xlu0 %1474
      %1476 = vrot.lane.b32.xlu0 %v980, 12
      %v1477 = vpop.permute.xlu0 %1476
      %1478 = vrot.lane.b32.xlu0 %v981, 12
      %v1479 = vpop.permute.xlu0 %1478
      %1480 = vrot.lane.b32.xlu0 %v982, 12
      %v1481 = vpop.permute.xlu0 %1480
      %1482 = vrot.lane.b32.xlu0 %v983, 12
      %v1483 = vpop.permute.xlu0 %1482
      %1484 = vrot.lane.b32.xlu0 %v984, 12
      %v1485 = vpop.permute.xlu0 %1484
      %1486 = vrot.lane.b32.xlu0 %v985, 12
      %v1487 = vpop.permute.xlu0 %1486
      %1488 = vrot.lane.b32.xlu0 %v986, 12
      %v1489 = vpop.permute.xlu0 %1488
      %1490 = vrot.lane.b32.xlu0 %v987, 12
      %v1491 = vpop.permute.xlu0 %1490
      %1492 = vrot.lane.b32.xlu0 %v988, 12
      %v1493 = vpop.permute.xlu0 %1492
      %1494 = vrot.lane.b32.xlu0 %v989, 12
      %v1495 = vpop.permute.xlu0 %1494
      %1496 = vrot.lane.b32.xlu0 %v990, 12
      %v1497 = vpop.permute.xlu0 %1496
      %1498 = vrot.lane.b32.xlu0 %v991, 12
      %v1499 = vpop.permute.xlu0 %1498
      %1500 = vrot.lane.b32.xlu0 %v992, 12
      %v1501 = vpop.permute.xlu0 %1500
      %1502 = vrot.lane.b32.xlu0 %v993, 12
      %v1503 = vpop.permute.xlu0 %1502
      %1504 = vrot.lane.b32.xlu0 %v994, 12
      %v1505 = vpop.permute.xlu0 %1504
      %1506 = vrot.lane.b32.xlu0 %v995, 12
      %v1507 = vpop.permute.xlu0 %1506
      %1508 = vrot.lane.b32.xlu0 %v996, 12
      %v1509 = vpop.permute.xlu0 %1508
      %1574 = vrot.lane.b32.xlu0 %v997, 16
      %v1575 = vpop.permute.xlu0 %1574
      %1576 = vrot.lane.b32.xlu0 %v998, 16
      %v1577 = vpop.permute.xlu0 %1576
      %1578 = vrot.lane.b32.xlu0 %v999, 16
      %v1579 = vpop.permute.xlu0 %1578
      %1580 = vrot.lane.b32.xlu0 %v1000, 16
      %v1581 = vpop.permute.xlu0 %1580
      %1582 = vrot.lane.b32.xlu0 %v1001, 16
      %v1583 = vpop.permute.xlu0 %1582
      %1584 = vrot.lane.b32.xlu0 %v1002, 16
      %v1585 = vpop.permute.xlu0 %1584
      %1586 = vrot.lane.b32.xlu0 %v1003, 16
      %v1587 = vpop.permute.xlu0 %1586
      %1588 = vrot.lane.b32.xlu0 %v1004, 16
      %v1589 = vpop.permute.xlu0 %1588
      %1590 = vrot.lane.b32.xlu0 %v1005, 16
      %v1591 = vpop.permute.xlu0 %1590
      %1592 = vrot.lane.b32.xlu0 %v1006, 16
      %v1593 = vpop.permute.xlu0 %1592
      %1594 = vrot.lane.b32.xlu0 %v1007, 16
      %v1595 = vpop.permute.xlu0 %1594
      %1596 = vrot.lane.b32.xlu0 %v1008, 16
      %v1597 = vpop.permute.xlu0 %1596
      %1598 = vrot.lane.b32.xlu0 %v1009, 16
      %v1599 = vpop.permute.xlu0 %1598
      %1600 = vrot.lane.b32.xlu0 %v1010, 16
      %v1601 = vpop.permute.xlu0 %1600
      %1602 = vrot.lane.b32.xlu0 %v1011, 16
      %v1603 = vpop.permute.xlu0 %1602
      %1604 = vrot.lane.b32.xlu0 %v1012, 16
      %v1605 = vpop.permute.xlu0 %1604
      %1606 = vrot.lane.b32.xlu0 %v1013, 16
      %v1607 = vpop.permute.xlu0 %1606
      %1608 = vrot.lane.b32.xlu0 %v1014, 16
      %v1609 = vpop.permute.xlu0 %1608
      %1610 = vrot.lane.b32.xlu0 %v1015, 16
      %v1611 = vpop.permute.xlu0 %1610
      %1612 = vrot.lane.b32.xlu0 %v1016, 16
      %v1613 = vpop.permute.xlu0 %1612
      %1614 = vrot.lane.b32.xlu0 %v1017, 16
      %v1615 = vpop.permute.xlu0 %1614
      %1616 = vrot.lane.b32.xlu0 %v1018, 16
      %v1617 = vpop.permute.xlu0 %1616
      %1618 = vrot.lane.b32.xlu0 %v1019, 16
      %v1619 = vpop.permute.xlu0 %1618
      %1620 = vrot.lane.b32.xlu0 %v1020, 16
      %v1621 = vpop.permute.xlu0 %1620
      %1622 = vrot.lane.b32.xlu0 %v1021, 16
      %v1623 = vpop.permute.xlu0 %1622
      %1624 = vrot.lane.b32.xlu0 %v1022, 16
      %v1625 = vpop.permute.xlu0 %1624
      %1626 = vrot.lane.b32.xlu0 %v1023, 16
      %v1627 = vpop.permute.xlu0 %1626
      %1628 = vrot.lane.b32.xlu0 %v1024, 16
      %v1629 = vpop.permute.xlu0 %1628
      %1630 = vrot.lane.b32.xlu0 %v1025, 16
      %v1631 = vpop.permute.xlu0 %1630
      %1632 = vrot.lane.b32.xlu0 %v1026, 16
      %v1633 = vpop.permute.xlu0 %1632
      %1634 = vrot.lane.b32.xlu0 %v1027, 16
      %v1635 = vpop.permute.xlu0 %1634
      %1636 = vrot.lane.b32.xlu0 %v1028, 16
      %v1637 = vpop.permute.xlu0 %1636
      %1702 = vrot.lane.b32.xlu0 %v1029, 20
      %v1703 = vpop.permute.xlu0 %1702
      %1704 = vrot.lane.b32.xlu0 %v1030, 20
      %v1705 = vpop.permute.xlu0 %1704
      %1706 = vrot.lane.b32.xlu0 %v1031, 20
      %v1707 = vpop.permute.xlu0 %1706
      %1708 = vrot.lane.b32.xlu0 %v1032, 20
      %v1709 = vpop.permute.xlu0 %1708
      %1710 = vrot.lane.b32.xlu0 %v1033, 20
      %v1711 = vpop.permute.xlu0 %1710
      %1712 = vrot.lane.b32.xlu0 %v1034, 20
      %v1713 = vpop.permute.xlu0 %1712
      %1714 = vrot.lane.b32.xlu0 %v1035, 20
      %v1715 = vpop.permute.xlu0 %1714
      %1716 = vrot.lane.b32.xlu0 %v1036, 20
      %v1717 = vpop.permute.xlu0 %1716
      %1718 = vrot.lane.b32.xlu0 %v1037, 20
      %v1719 = vpop.permute.xlu0 %1718
      %1720 = vrot.lane.b32.xlu0 %v1038, 20
      %v1721 = vpop.permute.xlu0 %1720
      %1722 = vrot.lane.b32.xlu0 %v1039, 20
      %v1723 = vpop.permute.xlu0 %1722
      %1724 = vrot.lane.b32.xlu0 %v1040, 20
      %v1725 = vpop.permute.xlu0 %1724
      %1726 = vrot.lane.b32.xlu0 %v1041, 20
      %v1727 = vpop.permute.xlu0 %1726
      %1728 = vrot.lane.b32.xlu0 %v1042, 20
      %v1729 = vpop.permute.xlu0 %1728
      %1730 = vrot.lane.b32.xlu0 %v1043, 20
      %v1731 = vpop.permute.xlu0 %1730
      %1732 = vrot.lane.b32.xlu0 %v1044, 20
      %v1733 = vpop.permute.xlu0 %1732
      %1734 = vrot.lane.b32.xlu0 %v1045, 20
      %v1735 = vpop.permute.xlu0 %1734
      %1736 = vrot.lane.b32.xlu0 %v1046, 20
      %v1737 = vpop.permute.xlu0 %1736
      %1738 = vrot.lane.b32.xlu0 %v1047, 20
      %v1739 = vpop.permute.xlu0 %1738
      %1740 = vrot.lane.b32.xlu0 %v1048, 20
      %v1741 = vpop.permute.xlu0 %1740
      %1742 = vrot.lane.b32.xlu0 %v1049, 20
      %v1743 = vpop.permute.xlu0 %1742
      %1744 = vrot.lane.b32.xlu0 %v1050, 20
      %v1745 = vpop.permute.xlu0 %1744
      %1746 = vrot.lane.b32.xlu0 %v1051, 20
      %v1747 = vpop.permute.xlu0 %1746
      %1748 = vrot.lane.b32.xlu0 %v1052, 20
      %v1749 = vpop.permute.xlu0 %1748
      %1750 = vrot.lane.b32.xlu0 %v1053, 20
      %v1751 = vpop.permute.xlu0 %1750
      %1752 = vrot.lane.b32.xlu0 %v1054, 20
      %v1753 = vpop.permute.xlu0 %1752
      %1754 = vrot.lane.b32.xlu0 %v1055, 20
      %v1755 = vpop.permute.xlu0 %1754
      %1756 = vrot.lane.b32.xlu0 %v1056, 20
      %v1757 = vpop.permute.xlu0 %1756
      %1758 = vrot.lane.b32.xlu0 %v1057, 20
      %v1759 = vpop.permute.xlu0 %1758
      %1760 = vrot.lane.b32.xlu0 %v1058, 20
      %v1761 = vpop.permute.xlu0 %1760
      %1762 = vrot.lane.b32.xlu0 %v1059, 20
      %v1763 = vpop.permute.xlu0 %1762
      %1764 = vrot.lane.b32.xlu0 %v1060, 20
      %v1765 = vpop.permute.xlu0 %1764
      %1830 = vrot.lane.b32.xlu0 %v1062, 24
      %v1831 = vpop.permute.xlu0 %1830
      %1832 = vrot.lane.b32.xlu0 %v1063, 24
      %v1833 = vpop.permute.xlu0 %1832
      %1834 = vrot.lane.b32.xlu0 %v1064, 24
      %v1835 = vpop.permute.xlu0 %1834
      %1836 = vrot.lane.b32.xlu0 %v1065, 24
      %v1837 = vpop.permute.xlu0 %1836
      %1838 = vrot.lane.b32.xlu0 %v1066, 24
      %v1839 = vpop.permute.xlu0 %1838
      %1840 = vrot.lane.b32.xlu0 %v1067, 24
      %v1841 = vpop.permute.xlu0 %1840
      %1842 = vrot.lane.b32.xlu0 %v1068, 24
      %v1843 = vpop.permute.xlu0 %1842
      %1844 = vrot.lane.b32.xlu0 %v1069, 24
      %v1845 = vpop.permute.xlu0 %1844
      %1846 = vrot.lane.b32.xlu0 %v1070, 24
      %v1847 = vpop.permute.xlu0 %1846
      %1848 = vrot.lane.b32.xlu0 %v1071, 24
      %v1849 = vpop.permute.xlu0 %1848
      %1850 = vrot.lane.b32.xlu0 %v1072, 24
      %v1851 = vpop.permute.xlu0 %1850
      %1852 = vrot.lane.b32.xlu0 %v1073, 24
      %v1853 = vpop.permute.xlu0 %1852
      %1854 = vrot.lane.b32.xlu0 %v1074, 24
      %v1855 = vpop.permute.xlu0 %1854
      %1856 = vrot.lane.b32.xlu0 %v1075, 24
      %v1857 = vpop.permute.xlu0 %1856
      %1858 = vrot.lane.b32.xlu0 %v1076, 24
      %v1859 = vpop.permute.xlu0 %1858
      %1860 = vrot.lane.b32.xlu0 %v1077, 24
      %v1861 = vpop.permute.xlu0 %1860
      %1862 = vrot.lane.b32.xlu0 %v1078, 24
      %v1863 = vpop.permute.xlu0 %1862
      %1864 = vrot.lane.b32.xlu0 %v1079, 24
      %v1865 = vpop.permute.xlu0 %1864
      %1866 = vrot.lane.b32.xlu0 %v1080, 24
      %v1867 = vpop.permute.xlu0 %1866
      %1868 = vrot.lane.b32.xlu0 %v1081, 24
      %v1869 = vpop.permute.xlu0 %1868
      %1870 = vrot.lane.b32.xlu0 %v1082, 24
      %v1871 = vpop.permute.xlu0 %1870
      %1872 = vrot.lane.b32.xlu0 %v1083, 24
      %v1873 = vpop.permute.xlu0 %1872
      %1874 = vrot.lane.b32.xlu0 %v1084, 24
      %v1875 = vpop.permute.xlu0 %1874
      %1876 = vrot.lane.b32.xlu0 %v1085, 24
      %v1877 = vpop.permute.xlu0 %1876
      %1878 = vrot.lane.b32.xlu0 %v1086, 24
      %v1879 = vpop.permute.xlu0 %1878
      %1880 = vrot.lane.b32.xlu0 %v1087, 24
      %v1881 = vpop.permute.xlu0 %1880
      %1882 = vrot.lane.b32.xlu0 %v1088, 24
      %v1883 = vpop.permute.xlu0 %1882
      %1884 = vrot.lane.b32.xlu0 %v1089, 24
      %v1885 = vpop.permute.xlu0 %1884
      %1886 = vrot.lane.b32.xlu0 %v1090, 24
      %v1887 = vpop.permute.xlu0 %1886
      %1888 = vrot.lane.b32.xlu0 %v1091, 24
      %v1889 = vpop.permute.xlu0 %1888
      %1890 = vrot.lane.b32.xlu0 %v1092, 24
      %v1891 = vpop.permute.xlu0 %1890
      %1892 = vrot.lane.b32.xlu0 %v1093, 24
      %v1893 = vpop.permute.xlu0 %1892
      %1958 = vrot.lane.b32.xlu0 %v1094, 28
      %v1959 = vpop.permute.xlu0 %1958
      %1960 = vrot.lane.b32.xlu0 %v1095, 28
      %v1961 = vpop.permute.xlu0 %1960
      %1962 = vrot.lane.b32.xlu0 %v1096, 28
      %v1963 = vpop.permute.xlu0 %1962
      %1964 = vrot.lane.b32.xlu0 %v1097, 28
      %v1965 = vpop.permute.xlu0 %1964
      %1966 = vrot.lane.b32.xlu0 %v1098, 28
      %v1967 = vpop.permute.xlu0 %1966
      %1968 = vrot.lane.b32.xlu0 %v1099, 28
      %v1969 = vpop.permute.xlu0 %1968
      %1970 = vrot.lane.b32.xlu0 %v1100, 28
      %v1971 = vpop.permute.xlu0 %1970
      %1972 = vrot.lane.b32.xlu0 %v1101, 28
      %v1973 = vpop.permute.xlu0 %1972
      %1974 = vrot.lane.b32.xlu0 %v1102, 28
      %v1975 = vpop.permute.xlu0 %1974
      %1976 = vrot.lane.b32.xlu0 %v1103, 28
      %v1977 = vpop.permute.xlu0 %1976
      %1978 = vrot.lane.b32.xlu0 %v1104, 28
      %v1979 = vpop.permute.xlu0 %1978
      %1980 = vrot.lane.b32.xlu0 %v1105, 28
      %v1981 = vpop.permute.xlu0 %1980
      %1982 = vrot.lane.b32.xlu0 %v1106, 28
      %v1983 = vpop.permute.xlu0 %1982
      %1984 = vrot.lane.b32.xlu0 %v1107, 28
      %v1985 = vpop.permute.xlu0 %1984
      %1986 = vrot.lane.b32.xlu0 %v1108, 28
      %v1987 = vpop.permute.xlu0 %1986
      %1988 = vrot.lane.b32.xlu0 %v1109, 28
      %v1989 = vpop.permute.xlu0 %1988
      %1990 = vrot.lane.b32.xlu0 %v1110, 28
      %v1991 = vpop.permute.xlu0 %1990
      %1992 = vrot.lane.b32.xlu0 %v1111, 28
      %v1993 = vpop.permute.xlu0 %1992
      %1994 = vrot.lane.b32.xlu0 %v1112, 28
      %v1995 = vpop.permute.xlu0 %1994
      %1996 = vrot.lane.b32.xlu0 %v1113, 28
      %v1997 = vpop.permute.xlu0 %1996
      %1998 = vrot.lane.b32.xlu0 %v1114, 28
      %v1999 = vpop.permute.xlu0 %1998
      %2000 = vrot.lane.b32.xlu0 %v1115, 28
      %v2001 = vpop.permute.xlu0 %2000
      %2002 = vrot.lane.b32.xlu0 %v1116, 28
      %v2003 = vpop.permute.xlu0 %2002
      %2004 = vrot.lane.b32.xlu0 %v1117, 28
      %v2005 = vpop.permute.xlu0 %2004
      %2006 = vrot.lane.b32.xlu0 %v1118, 28
      %v2007 = vpop.permute.xlu0 %2006
      %2008 = vrot.lane.b32.xlu0 %v1119, 28
      %v2009 = vpop.permute.xlu0 %2008
      %2010 = vrot.lane.b32.xlu0 %v1120, 28
      %v2011 = vpop.permute.xlu0 %2010
      %2012 = vrot.lane.b32.xlu0 %v1121, 28
      %v2013 = vpop.permute.xlu0 %2012
      %2014 = vrot.lane.b32.xlu0 %v1122, 28
      %v2015 = vpop.permute.xlu0 %2014
      %2016 = vrot.lane.b32.xlu0 %v1123, 28
      %v2017 = vpop.permute.xlu0 %2016
      %2018 = vrot.lane.b32.xlu0 %v1124, 28
      %v2019 = vpop.permute.xlu0 %2018
      %2020 = vrot.lane.b32.xlu0 %v1125, 28
      %v2021 = vpop.permute.xlu0 %2020
      %2086 = vrot.lane.b32.xlu0 %v1126, 32
      %v2087 = vpop.permute.xlu0 %2086
      %2088 = vrot.lane.b32.xlu0 %v1127, 32
      %v2089 = vpop.permute.xlu0 %2088
      %2090 = vrot.lane.b32.xlu0 %v1128, 32
      %v2091 = vpop.permute.xlu0 %2090
      %2092 = vrot.lane.b32.xlu0 %v1129, 32
      %v2093 = vpop.permute.xlu0 %2092
      %2094 = vrot.lane.b32.xlu0 %v1130, 32
      %v2095 = vpop.permute.xlu0 %2094
      %2096 = vrot.lane.b32.xlu0 %v1131, 32
      %v2097 = vpop.permute.xlu0 %2096
      %2098 = vrot.lane.b32.xlu0 %v1132, 32
      %v2099 = vpop.permute.xlu0 %2098
      %2100 = vrot.lane.b32.xlu0 %v1133, 32
      %v2101 = vpop.permute.xlu0 %2100
      %2102 = vrot.lane.b32.xlu0 %v1134, 32
      %v2103 = vpop.permute.xlu0 %2102
      %2104 = vrot.lane.b32.xlu0 %v1135, 32
      %v2105 = vpop.permute.xlu0 %2104
      %2106 = vrot.lane.b32.xlu0 %v1136, 32
      %v2107 = vpop.permute.xlu0 %2106
      %2108 = vrot.lane.b32.xlu0 %v1137, 32
      %v2109 = vpop.permute.xlu0 %2108
      %2110 = vrot.lane.b32.xlu0 %v1138, 32
      %v2111 = vpop.permute.xlu0 %2110
      %2112 = vrot.lane.b32.xlu0 %v1139, 32
      %v2113 = vpop.permute.xlu0 %2112
      %2114 = vrot.lane.b32.xlu0 %v1140, 32
      %v2115 = vpop.permute.xlu0 %2114
      %2116 = vrot.lane.b32.xlu0 %v1141, 32
      %v2117 = vpop.permute.xlu0 %2116
      %2118 = vrot.lane.b32.xlu0 %v1142, 32
      %v2119 = vpop.permute.xlu0 %2118
      %2120 = vrot.lane.b32.xlu0 %v1143, 32
      %v2121 = vpop.permute.xlu0 %2120
      %2122 = vrot.lane.b32.xlu0 %v1144, 32
      %v2123 = vpop.permute.xlu0 %2122
      %2124 = vrot.lane.b32.xlu0 %v1145, 32
      %v2125 = vpop.permute.xlu0 %2124
      %2126 = vrot.lane.b32.xlu0 %v1146, 32
      %v2127 = vpop.permute.xlu0 %2126
      %2128 = vrot.lane.b32.xlu0 %v1147, 32
      %v2129 = vpop.permute.xlu0 %2128
      %2130 = vrot.lane.b32.xlu0 %v1148, 32
      %v2131 = vpop.permute.xlu0 %2130
      %2132 = vrot.lane.b32.xlu0 %v1149, 32
      %v2133 = vpop.permute.xlu0 %2132
      %2134 = vrot.lane.b32.xlu0 %v1150, 32
      %v2135 = vpop.permute.xlu0 %2134
      %2136 = vrot.lane.b32.xlu0 %v1151, 32
      %v2137 = vpop.permute.xlu0 %2136
      %2138 = vrot.lane.b32.xlu0 %v1152, 32
      %v2139 = vpop.permute.xlu0 %2138
      %2140 = vrot.lane.b32.xlu0 %v1153, 32
      %v2141 = vpop.permute.xlu0 %2140
      %2142 = vrot.lane.b32.xlu0 %v1154, 32
      %v2143 = vpop.permute.xlu0 %2142
      %2144 = vrot.lane.b32.xlu0 %v1155, 32
      %v2145 = vpop.permute.xlu0 %2144
      %2146 = vrot.lane.b32.xlu0 %v1156, 32
      %v2147 = vpop.permute.xlu0 %2146
      %2148 = vrot.lane.b32.xlu0 %v1157, 32
      %v2149 = vpop.permute.xlu0 %2148
      %v2182 = vsel %vm455, %v869, %v1191
      %v2183 = vsel %vm455, %v870, %v1193
      %v2184 = vsel %vm455, %v871, %v1195
      %v2185 = vsel %vm455, %v872, %v1197
      %v2186 = vsel %vm455, %v873, %v1199
      %v2187 = vsel %vm455, %v874, %v1201
      %v2188 = vsel %vm455, %v875, %v1203
      %v2189 = vsel %vm455, %v876, %v1205
      %v2190 = vsel %vm455, %v877, %v1207
      %v2191 = vsel %vm455, %v878, %v1209
      %v2192 = vsel %vm455, %v879, %v1211
      %v2193 = vsel %vm455, %v880, %v1213
      %v2194 = vsel %vm455, %v881, %v1215
      %v2195 = vsel %vm455, %v882, %v1217
      %v2196 = vsel %vm455, %v883, %v1219
      %v2197 = vsel %vm455, %v884, %v1221
      %v2198 = vsel %vm455, %v885, %v1223
      %v2199 = vsel %vm455, %v886, %v1225
      %v2200 = vsel %vm455, %v887, %v1227
      %v2201 = vsel %vm455, %v888, %v1229
      %v2202 = vsel %vm455, %v889, %v1231
      %v2203 = vsel %vm455, %v890, %v1233
      %v2204 = vsel %vm455, %v891, %v1235
      %v2205 = vsel %vm455, %v892, %v1237
      %v2206 = vsel %vm455, %v893, %v1239
      %v2207 = vsel %vm455, %v894, %v1241
      %v2208 = vsel %vm455, %v895, %v1243
      %v2209 = vsel %vm455, %v896, %v1245
      %v2210 = vsel %vm455, %v897, %v1247
      %v2211 = vsel %vm455, %v898, %v1249
      %v2212 = vsel %vm455, %v899, %v1251
      %v2213 = vsel %vm455, %v900, %v1253
      %vm2214 = vcmask 64512
      %v2215 = vsel %vm2214, %v2182, %v1319
      %v2216 = vsel %vm2214, %v2183, %v1321
      %v2217 = vsel %vm2214, %v2184, %v1323
      %v2218 = vsel %vm2214, %v2185, %v1325
      %v2219 = vsel %vm2214, %v2186, %v1327
      %v2220 = vsel %vm2214, %v2187, %v1329
      %v2221 = vsel %vm2214, %v2188, %v1331
      %v2222 = vsel %vm2214, %v2189, %v1333
      %v2223 = vsel %vm2214, %v2190, %v1335
      %v2224 = vsel %vm2214, %v2191, %v1337
      %v2225 = vsel %vm2214, %v2192, %v1339
      %v2226 = vsel %vm2214, %v2193, %v1341
      %v2227 = vsel %vm2214, %v2194, %v1343
      %v2228 = vsel %vm2214, %v2195, %v1345
      %v2229 = vsel %vm2214, %v2196, %v1347
      %v2230 = vsel %vm2214, %v2197, %v1349
      %v2231 = vsel %vm2214, %v2198, %v1351
      %v2232 = vsel %vm2214, %v2199, %v1353
      %v2233 = vsel %vm2214, %v2200, %v1355
      %v2234 = vsel %vm2214, %v2201, %v1357
      %v2235 = vsel %vm2214, %v2202, %v1359
      %v2236 = vsel %vm2214, %v2203, %v1361
      %v2237 = vsel %vm2214, %v2204, %v1363
      %v2238 = vsel %vm2214, %v2205, %v1365
      %v2239 = vsel %vm2214, %v2206, %v1367
      %v2240 = vsel %vm2214, %v2207, %v1369
      %v2241 = vsel %vm2214, %v2208, %v1371
      %v2242 = vsel %vm2214, %v2209, %v1373
      %v2243 = vsel %vm2214, %v2210, %v1375
      %v2244 = vsel %vm2214, %v2211, %v1377
      %v2245 = vsel %vm2214, %v2212, %v1379
      %v2246 = vsel %vm2214, %v2213, %v1381
      %vm2247 = vcmask 97280
      %v2248 = vsel %vm2247, %v2215, %v1447
      %v2249 = vsel %vm2247, %v2216, %v1449
      %v2250 = vsel %vm2247, %v2217, %v1451
      %v2251 = vsel %vm2247, %v2218, %v1453
      %v2252 = vsel %vm2247, %v2219, %v1455
      %v2253 = vsel %vm2247, %v2220, %v1457
      %v2254 = vsel %vm2247, %v2221, %v1459
      %v2255 = vsel %vm2247, %v2222, %v1461
      %v2256 = vsel %vm2247, %v2223, %v1463
      %v2257 = vsel %vm2247, %v2224, %v1465
      %v2258 = vsel %vm2247, %v2225, %v1467
      %v2259 = vsel %vm2247, %v2226, %v1469
      %v2260 = vsel %vm2247, %v2227, %v1471
      %v2261 = vsel %vm2247, %v2228, %v1473
      %v2262 = vsel %vm2247, %v2229, %v1475
      %v2263 = vsel %vm2247, %v2230, %v1477
      %v2264 = vsel %vm2247, %v2231, %v1479
      %v2265 = vsel %vm2247, %v2232, %v1481
      %v2266 = vsel %vm2247, %v2233, %v1483
      %v2267 = vsel %vm2247, %v2234, %v1485
      %v2268 = vsel %vm2247, %v2235, %v1487
      %v2269 = vsel %vm2247, %v2236, %v1489
      %v2270 = vsel %vm2247, %v2237, %v1491
      %v2271 = vsel %vm2247, %v2238, %v1493
      %v2272 = vsel %vm2247, %v2239, %v1495
      %v2273 = vsel %vm2247, %v2240, %v1497
      %v2274 = vsel %vm2247, %v2241, %v1499
      %v2275 = vsel %vm2247, %v2242, %v1501
      %v2276 = vsel %vm2247, %v2243, %v1503
      %v2277 = vsel %vm2247, %v2244, %v1505
      %v2278 = vsel %vm2247, %v2245, %v1507
      %v2279 = vsel %vm2247, %v2246, %v1509
      %vm2280 = vcmask 130048
      %v2281 = vsel %vm2280, %v2248, %v1575
      %v2282 = vsel %vm2280, %v2249, %v1577
      %v2283 = vsel %vm2280, %v2250, %v1579
      %v2284 = vsel %vm2280, %v2251, %v1581
      %v2285 = vsel %vm2280, %v2252, %v1583
      %v2286 = vsel %vm2280, %v2253, %v1585
      %v2287 = vsel %vm2280, %v2254, %v1587
      %v2288 = vsel %vm2280, %v2255, %v1589
      %v2289 = vsel %vm2280, %v2256, %v1591
      %v2290 = vsel %vm2280, %v2257, %v1593
      %v2291 = vsel %vm2280, %v2258, %v1595
      %v2292 = vsel %vm2280, %v2259, %v1597
      %v2293 = vsel %vm2280, %v2260, %v1599
      %v2294 = vsel %vm2280, %v2261, %v1601
      %v2295 = vsel %vm2280, %v2262, %v1603
      %v2296 = vsel %vm2280, %v2263, %v1605
      %v2297 = vsel %vm2280, %v2264, %v1607
      %v2298 = vsel %vm2280, %v2265, %v1609
      %v2299 = vsel %vm2280, %v2266, %v1611
      %v2300 = vsel %vm2280, %v2267, %v1613
      %v2301 = vsel %vm2280, %v2268, %v1615
      %v2302 = vsel %vm2280, %v2269, %v1617
      %v2303 = vsel %vm2280, %v2270, %v1619
      %v2304 = vsel %vm2280, %v2271, %v1621
      %v2305 = vsel %vm2280, %v2272, %v1623
      %v2306 = vsel %vm2280, %v2273, %v1625
      %v2307 = vsel %vm2280, %v2274, %v1627
      %v2308 = vsel %vm2280, %v2275, %v1629
      %v2309 = vsel %vm2280, %v2276, %v1631
      %v2310 = vsel %vm2280, %v2277, %v1633
      %v2311 = vsel %vm2280, %v2278, %v1635
      %v2312 = vsel %vm2280, %v2279, %v1637
      %vm2313 = vcmask 162816
      %v2314 = vsel %vm2313, %v2281, %v1703
      %v2315 = vsel %vm2313, %v2282, %v1705
      %v2316 = vsel %vm2313, %v2283, %v1707
      %v2317 = vsel %vm2313, %v2284, %v1709
      %v2318 = vsel %vm2313, %v2285, %v1711
      %v2319 = vsel %vm2313, %v2286, %v1713
      %v2320 = vsel %vm2313, %v2287, %v1715
      %v2321 = vsel %vm2313, %v2288, %v1717
      %v2322 = vsel %vm2313, %v2289, %v1719
      %v2323 = vsel %vm2313, %v2290, %v1721
      %v2324 = vsel %vm2313, %v2291, %v1723
      %v2325 = vsel %vm2313, %v2292, %v1725
      %v2326 = vsel %vm2313, %v2293, %v1727
      %v2327 = vsel %vm2313, %v2294, %v1729
      %v2328 = vsel %vm2313, %v2295, %v1731
      %v2329 = vsel %vm2313, %v2296, %v1733
      %v2330 = vsel %vm2313, %v2297, %v1735
      %v2331 = vsel %vm2313, %v2298, %v1737
      %v2332 = vsel %vm2313, %v2299, %v1739
      %v2333 = vsel %vm2313, %v2300, %v1741
      %v2334 = vsel %vm2313, %v2301, %v1743
      %v2335 = vsel %vm2313, %v2302, %v1745
      %v2336 = vsel %vm2313, %v2303, %v1747
      %v2337 = vsel %vm2313, %v2304, %v1749
      %v2338 = vsel %vm2313, %v2305, %v1751
      %v2339 = vsel %vm2313, %v2306, %v1753
      %v2340 = vsel %vm2313, %v2307, %v1755
      %v2341 = vsel %vm2313, %v2308, %v1757
      %v2342 = vsel %vm2313, %v2309, %v1759
      %v2343 = vsel %vm2313, %v2310, %v1761
      %v2344 = vsel %vm2313, %v2311, %v1763
      %v2345 = vsel %vm2313, %v2312, %v1765
      %vm2346 = vcmask 195584
      %v2347 = vsel %vm2346, %v2314, %v1831
      %v2348 = vsel %vm2346, %v2315, %v1833
      %v2349 = vsel %vm2346, %v2316, %v1835
      %v2350 = vsel %vm2346, %v2317, %v1837
      %v2351 = vsel %vm2346, %v2318, %v1839
      %v2352 = vsel %vm2346, %v2319, %v1841
      %v2353 = vsel %vm2346, %v2320, %v1843
      %v2354 = vsel %vm2346, %v2321, %v1845
      %v2355 = vsel %vm2346, %v2322, %v1847
      %v2356 = vsel %vm2346, %v2323, %v1849
      %v2357 = vsel %vm2346, %v2324, %v1851
      %v2358 = vsel %vm2346, %v2325, %v1853
      %v2359 = vsel %vm2346, %v2326, %v1855
      %v2360 = vsel %vm2346, %v2327, %v1857
      %v2361 = vsel %vm2346, %v2328, %v1859
      %v2362 = vsel %vm2346, %v2329, %v1861
      %v2363 = vsel %vm2346, %v2330, %v1863
      %v2364 = vsel %vm2346, %v2331, %v1865
      %v2365 = vsel %vm2346, %v2332, %v1867
      %v2366 = vsel %vm2346, %v2333, %v1869
      %v2367 = vsel %vm2346, %v2334, %v1871
      %v2368 = vsel %vm2346, %v2335, %v1873
      %v2369 = vsel %vm2346, %v2336, %v1875
      %v2370 = vsel %vm2346, %v2337, %v1877
      %v2371 = vsel %vm2346, %v2338, %v1879
      %v2372 = vsel %vm2346, %v2339, %v1881
      %v2373 = vsel %vm2346, %v2340, %v1883
      %v2374 = vsel %vm2346, %v2341, %v1885
      %v2375 = vsel %vm2346, %v2342, %v1887
      %v2376 = vsel %vm2346, %v2343, %v1889
      %v2377 = vsel %vm2346, %v2344, %v1891
      %v2378 = vsel %vm2346, %v2345, %v1893
      %vm2379 = vcmask 228352
      %v2380 = vsel %vm2379, %v2347, %v1959
      %v2381 = vsel %vm2379, %v2348, %v1961
      %v2382 = vsel %vm2379, %v2349, %v1963
      %v2383 = vsel %vm2379, %v2350, %v1965
      %v2384 = vsel %vm2379, %v2351, %v1967
      %v2385 = vsel %vm2379, %v2352, %v1969
      %v2386 = vsel %vm2379, %v2353, %v1971
      %v2387 = vsel %vm2379, %v2354, %v1973
      %v2388 = vsel %vm2379, %v2355, %v1975
      %v2389 = vsel %vm2379, %v2356, %v1977
      %v2390 = vsel %vm2379, %v2357, %v1979
      %v2391 = vsel %vm2379, %v2358, %v1981
      %v2392 = vsel %vm2379, %v2359, %v1983
      %v2393 = vsel %vm2379, %v2360, %v1985
      %v2394 = vsel %vm2379, %v2361, %v1987
      %v2395 = vsel %vm2379, %v2362, %v1989
      %v2396 = vsel %vm2379, %v2363, %v1991
      %v2397 = vsel %vm2379, %v2364, %v1993
      %v2398 = vsel %vm2379, %v2365, %v1995
      %v2399 = vsel %vm2379, %v2366, %v1997
      %v2400 = vsel %vm2379, %v2367, %v1999
      %v2401 = vsel %vm2379, %v2368, %v2001
      %v2402 = vsel %vm2379, %v2369, %v2003
      %v2403 = vsel %vm2379, %v2370, %v2005
      %v2404 = vsel %vm2379, %v2371, %v2007
      %v2405 = vsel %vm2379, %v2372, %v2009
      %v2406 = vsel %vm2379, %v2373, %v2011
      %v2407 = vsel %vm2379, %v2374, %v2013
      %v2408 = vsel %vm2379, %v2375, %v2015
      %v2409 = vsel %vm2379, %v2376, %v2017
      %v2410 = vsel %vm2379, %v2377, %v2019
      %v2411 = vsel %vm2379, %v2378, %v2021
      %vm2412 = vcmask 261120
      %v2413 = vsel %vm2412, %v2380, %v2087
      %v2414 = vsel %vm2412, %v2381, %v2089
      %v2415 = vsel %vm2412, %v2382, %v2091
      %v2416 = vsel %vm2412, %v2383, %v2093
      %v2417 = vsel %vm2412, %v2384, %v2095
      %v2418 = vsel %vm2412, %v2385, %v2097
      %v2419 = vsel %vm2412, %v2386, %v2099
      %v2420 = vsel %vm2412, %v2387, %v2101
      %v2421 = vsel %vm2412, %v2388, %v2103
      %v2422 = vsel %vm2412, %v2389, %v2105
      %v2423 = vsel %vm2412, %v2390, %v2107
      %v2424 = vsel %vm2412, %v2391, %v2109
      %v2425 = vsel %vm2412, %v2392, %v2111
      %v2426 = vsel %vm2412, %v2393, %v2113
      %v2427 = vsel %vm2412, %v2394, %v2115
      %v2428 = vsel %vm2412, %v2395, %v2117
      %v2429 = vsel %vm2412, %v2396, %v2119
      %v2430 = vsel %vm2412, %v2397, %v2121
      %v2431 = vsel %vm2412, %v2398, %v2123
      %v2432 = vsel %vm2412, %v2399, %v2125
      %v2433 = vsel %vm2412, %v2400, %v2127
      %v2434 = vsel %vm2412, %v2401, %v2129
      %v2435 = vsel %vm2412, %v2402, %v2131
      %v2436 = vsel %vm2412, %v2403, %v2133
      %v2437 = vsel %vm2412, %v2404, %v2135
      %v2438 = vsel %vm2412, %v2405, %v2137
      %v2439 = vsel %vm2412, %v2406, %v2139
      %v2440 = vsel %vm2412, %v2407, %v2141
      %v2441 = vsel %vm2412, %v2408, %v2143
      %v2442 = vsel %vm2412, %v2409, %v2145
      %v2443 = vsel %vm2412, %v2410, %v2147
      %v2444 = vsel %vm2412, %v2411, %v2149
      %v2445 = vld [vmem:[%s3] sm:$0xff]
      %v2446 = vld [vmem:[%s3 + $0x8] sm:$0xff]
      %v2447 = vld [vmem:[%s3 + $0x10] sm:$0xff]
      %v2448 = vld [vmem:[%s3 + $0x18] sm:$0xff]
      %v2449 = vld [vmem:[%s3 + $0x20] sm:$0xf]
      %v2450 = vld [vmem:[%s4] sm:$0x1]
      %v2452 = vlaneseq
      %v2453 = vshrl.u32 %v2452, 7
      %v2454 = vsub.s32 0, %v2453
      %v2455 = vrot.slane %v2450, %v2454
      %vm2457 = vcmask 293888
      %v2459 = vsel %vm2457, %v2413, 0
      %v2462 = vsel %vm2457, %v2414, 0
      %v2465 = vsel %vm2457, %v2415, 0
      %v2468 = vsel %vm2457, %v2416, 0
      %v2471 = vsel %vm2457, %v2417, 0
      %v2474 = vsel %vm2457, %v2418, 0
      %v2477 = vsel %vm2457, %v2419, 0
      %v2480 = vsel %vm2457, %v2420, 0
      %v2483 = vsel %vm2457, %v2421, 0
      %v2486 = vsel %vm2457, %v2422, 0
      %v2489 = vsel %vm2457, %v2423, 0
      %v2492 = vsel %vm2457, %v2424, 0
      %v2495 = vsel %vm2457, %v2425, 0
      %v2498 = vsel %vm2457, %v2426, 0
      %v2501 = vsel %vm2457, %v2427, 0
      %v2504 = vsel %vm2457, %v2428, 0
      %v2507 = vsel %vm2457, %v2429, 0
      %v2510 = vsel %vm2457, %v2430, 0
      %v2513 = vsel %vm2457, %v2431, 0
      %v2516 = vsel %vm2457, %v2432, 0
      %v2519 = vsel %vm2457, %v2433, 0
      %v2522 = vsel %vm2457, %v2434, 0
      %v2525 = vsel %vm2457, %v2435, 0
      %v2528 = vsel %vm2457, %v2436, 0
      %v2531 = vsel %vm2457, %v2437, 0
      %v2534 = vsel %vm2457, %v2438, 0
      %v2537 = vsel %vm2457, %v2439, 0
      %v2540 = vsel %vm2457, %v2440, 0
      %v2543 = vsel %vm2457, %v2441, 0
      %v2546 = vsel %vm2457, %v2442, 0
      %v2549 = vsel %vm2457, %v2443, 0
      %v2552 = vsel %vm2457, %v2444, 0
      %v2555 = vsel %vm552, %v2449, 0
      %2557 = vmatprep.subr.mxu0 0.0
      %2558 = vmatpush1.msra.mxu0 0.0
      %2559 = vmatprep.subr.mxu0 0.0
      %2560 = vmatpush1.msra.mxu0 0.0
      %2561 = vmatprep.subr.mxu0 0.0
      %2562 = vmatpush1.msra.mxu0 0.0
      %2563 = vmatprep.subr.mxu0 0.0
      %2564 = vmatpush1.msra.mxu0 0.0
      %2565 = vmatprep.subr.mxu0 0.0
      %2566 = vmatpush1.msra.mxu0 0.0
      %2567 = vmatprep.subr.mxu0 0.0
      %2568 = vmatpush1.msra.mxu0 0.0
      %2569 = vmatprep.subr.mxu0 0.0
      %2570 = vmatpush1.msra.mxu0 0.0
      %2571 = vmatprep.subr.mxu0 0.0
      %2572 = vmatpush1.msra.mxu0 0.0
      %2573 = vmatprep.subr.mxu0 0.0
      %2574 = vmatpush1.msra.mxu0 0.0
      %2575 = vmatprep.subr.mxu0 0.0
      %2576 = vmatpush1.msra.mxu0 0.0
      %2577 = vmatprep.subr.mxu0 0.0
      %2578 = vmatpush1.msra.mxu0 0.0
      %2579 = vmatprep.subr.mxu0 0.0
      %2580 = vmatpush1.msra.mxu0 %v2555
      %2581 = vmatprep.subr.mxu0 0.0
      %2582 = vmatpush1.msra.mxu0 %v2448
      %2583 = vmatprep.subr.mxu0 0.0
      %2584 = vmatpush1.msra.mxu0 %v2447
      %2585 = vmatprep.subr.mxu0 0.0
      %2586 = vmatpush1.msra.mxu0 %v2446
      %2587 = vmatprep.subr.mxu0 0.0
      %2588 = vmatpush1.msra.mxu0 %v2445
      %2589 = vmatprep.subr.mxu0 0.0
      %2590 = vmatpush2.msra.mxu0 0.0
      %2591 = vmatprep.subr.mxu0 0.0
      %2592 = vmatpush2.msra.mxu0 0.0
      %2593 = vmatprep.subr.mxu0 0.0
      %2594 = vmatpush2.msra.mxu0 0.0
      %2595 = vmatprep.subr.mxu0 0.0
      %2596 = vmatpush2.msra.mxu0 0.0
      %2597 = vmatprep.subr.mxu0 0.0
      %2598 = vmatpush2.msra.mxu0 0.0
      %2599 = vmatprep.subr.mxu0 0.0
      %2600 = vmatpush2.msra.mxu0 0.0
      %2601 = vmatprep.subr.mxu0 0.0
      %2602 = vmatpush2.msra.mxu0 0.0
      %2603 = vmatprep.subr.mxu0 0.0
      %2604 = vmatpush2.msra.mxu0 0.0
      %2605 = vmatprep.subr.mxu0 0.0
      %2606 = vmatpush2.msra.mxu0 0.0
      %2607 = vmatprep.subr.mxu0 0.0
      %2608 = vmatpush2.msra.mxu0 0.0
      %2609 = vmatprep.subr.mxu0 0.0
      %2610 = vmatpush2.msra.mxu0 0.0
      %2611 = vmatprep.subr.mxu0 0.0
      %2612 = vmatpush2.msra.mxu0 0.0
      %2613 = vmatprep.subr.mxu0 0.0
      %2614 = vmatpush2.msra.mxu0 0.0
      %2615 = vmatprep.subr.mxu0 0.0
      %2616 = vmatpush2.msra.mxu0 0.0
      %2617 = vmatprep.subr.mxu0 0.0
      %2618 = vmatpush2.msra.mxu0 0.0
      %2619 = vmatprep.subr.mxu0 0.0
      %2620 = vmatpush2.msra.mxu0 0.0
      %2621 = vmatprep.mubr.f32.mxu0 0.0
      %2622 = vmatmul.mubr.f32.gmra.mxu0 %v2459
      %v2623 = vpop.f32.mrf.mxu0
      %v2624 = vadd.f32 %v2455, %v2623
      %v2625 = vpop.f32.mrf.mxu0
      %2626 = vmatprep.mubr.f32.mxu0 0.0
      %2627 = vmatmul.mubr.f32.gmra.mxu0 %v2462
      %v2628 = vpop.f32.mrf.mxu0
      %v2629 = vadd.f32 %v2455, %v2628
      %v2630 = vpop.f32.mrf.mxu0
      %2631 = vmatprep.mubr.f32.mxu0 0.0
      %2632 = vmatmul.mubr.f32.gmra.mxu0 %v2465
      %v2633 = vpop.f32.mrf.mxu0
      %v2634 = vadd.f32 %v2455, %v2633
      %v2635 = vpop.f32.mrf.mxu0
      %2636 = vmatprep.mubr.f32.mxu0 0.0
      %2637 = vmatmul.mubr.f32.gmra.mxu0 %v2468
      %v2638 = vpop.f32.mrf.mxu0
      %v2639 = vadd.f32 %v2455, %v2638
      %v2640 = vpop.f32.mrf.mxu0
      %2641 = vmatprep.mubr.f32.mxu0 0.0
      %2642 = vmatmul.mubr.f32.gmra.mxu0 %v2471
      %v2643 = vpop.f32.mrf.mxu0
      %v2644 = vadd.f32 %v2455, %v2643
      %v2645 = vpop.f32.mrf.mxu0
      %2646 = vmatprep.mubr.f32.mxu0 0.0
      %2647 = vmatmul.mubr.f32.gmra.mxu0 %v2474
      %v2648 = vpop.f32.mrf.mxu0
      %v2649 = vadd.f32 %v2455, %v2648
      %v2650 = vpop.f32.mrf.mxu0
      %2651 = vmatprep.mubr.f32.mxu0 0.0
      %2652 = vmatmul.mubr.f32.gmra.mxu0 %v2477
      %v2653 = vpop.f32.mrf.mxu0
      %v2654 = vadd.f32 %v2455, %v2653
      %v2655 = vpop.f32.mrf.mxu0
      %2656 = vmatprep.mubr.f32.mxu0 0.0
      %2657 = vmatmul.mubr.f32.gmra.mxu0 %v2480
      %v2658 = vpop.f32.mrf.mxu0
      %v2659 = vadd.f32 %v2455, %v2658
      %v2660 = vpop.f32.mrf.mxu0
      %2661 = vmatprep.mubr.f32.mxu0 0.0
      %2662 = vmatmul.mubr.f32.gmra.mxu0 %v2483
      %v2663 = vpop.f32.mrf.mxu0
      %v2664 = vadd.f32 %v2455, %v2663
      %v2665 = vpop.f32.mrf.mxu0
      %2666 = vmatprep.mubr.f32.mxu0 0.0
      %2667 = vmatmul.mubr.f32.gmra.mxu0 %v2486
      %v2668 = vpop.f32.mrf.mxu0
      %v2669 = vadd.f32 %v2455, %v2668
      %v2670 = vpop.f32.mrf.mxu0
      %2671 = vmatprep.mubr.f32.mxu0 0.0
      %2672 = vmatmul.mubr.f32.gmra.mxu0 %v2489
      %v2673 = vpop.f32.mrf.mxu0
      %v2674 = vadd.f32 %v2455, %v2673
      %v2675 = vpop.f32.mrf.mxu0
      %2676 = vmatprep.mubr.f32.mxu0 0.0
      %2677 = vmatmul.mubr.f32.gmra.mxu0 %v2492
      %v2678 = vpop.f32.mrf.mxu0
      %v2679 = vadd.f32 %v2455, %v2678
      %v2680 = vpop.f32.mrf.mxu0
      %2681 = vmatprep.mubr.f32.mxu0 0.0
      %2682 = vmatmul.mubr.f32.gmra.mxu0 %v2495
      %v2683 = vpop.f32.mrf.mxu0
      %v2684 = vadd.f32 %v2455, %v2683
      %v2685 = vpop.f32.mrf.mxu0
      %2686 = vmatprep.mubr.f32.mxu0 0.0
      %2687 = vmatmul.mubr.f32.gmra.mxu0 %v2498
      %v2688 = vpop.f32.mrf.mxu0
      %v2689 = vadd.f32 %v2455, %v2688
      %v2690 = vpop.f32.mrf.mxu0
      %2691 = vmatprep.mubr.f32.mxu0 0.0
      %2692 = vmatmul.mubr.f32.gmra.mxu0 %v2501
      %v2693 = vpop.f32.mrf.mxu0
      %v2694 = vadd.f32 %v2455, %v2693
      %v2695 = vpop.f32.mrf.mxu0
      %2696 = vmatprep.mubr.f32.mxu0 0.0
      %2697 = vmatmul.mubr.f32.gmra.mxu0 %v2504
      %v2698 = vpop.f32.mrf.mxu0
      %v2699 = vadd.f32 %v2455, %v2698
      %v2700 = vpop.f32.mrf.mxu0
      %2701 = vmatprep.mubr.f32.mxu0 0.0
      %2702 = vmatmul.mubr.f32.gmra.mxu0 %v2507
      %v2703 = vpop.f32.mrf.mxu0
      %v2704 = vadd.f32 %v2455, %v2703
      %v2705 = vpop.f32.mrf.mxu0
      %2706 = vmatprep.mubr.f32.mxu0 0.0
      %2707 = vmatmul.mubr.f32.gmra.mxu0 %v2510
      %v2708 = vpop.f32.mrf.mxu0
      %v2709 = vadd.f32 %v2455, %v2708
      %v2710 = vpop.f32.mrf.mxu0
      %2711 = vmatprep.mubr.f32.mxu0 0.0
      %2712 = vmatmul.mubr.f32.gmra.mxu0 %v2513
      %v2713 = vpop.f32.mrf.mxu0
      %v2714 = vadd.f32 %v2455, %v2713
      %v2715 = vpop.f32.mrf.mxu0
      %2716 = vmatprep.mubr.f32.mxu0 0.0
      %2717 = vmatmul.mubr.f32.gmra.mxu0 %v2516
      %v2718 = vpop.f32.mrf.mxu0
      %v2719 = vadd.f32 %v2455, %v2718
      %v2720 = vpop.f32.mrf.mxu0
      %2721 = vmatprep.mubr.f32.mxu0 0.0
      %2722 = vmatmul.mubr.f32.gmra.mxu0 %v2519
      %v2723 = vpop.f32.mrf.mxu0
      %v2724 = vadd.f32 %v2455, %v2723
      %v2725 = vpop.f32.mrf.mxu0
      %2726 = vmatprep.mubr.f32.mxu0 0.0
      %2727 = vmatmul.mubr.f32.gmra.mxu0 %v2522
      %v2728 = vpop.f32.mrf.mxu0
      %v2729 = vadd.f32 %v2455, %v2728
      %v2730 = vpop.f32.mrf.mxu0
      %2731 = vmatprep.mubr.f32.mxu0 0.0
      %2732 = vmatmul.mubr.f32.gmra.mxu0 %v2525
      %v2733 = vpop.f32.mrf.mxu0
      %v2734 = vadd.f32 %v2455, %v2733
      %v2735 = vpop.f32.mrf.mxu0
      %2736 = vmatprep.mubr.f32.mxu0 0.0
      %2737 = vmatmul.mubr.f32.gmra.mxu0 %v2528
      %v2738 = vpop.f32.mrf.mxu0
      %v2739 = vadd.f32 %v2455, %v2738
      %v2740 = vpop.f32.mrf.mxu0
      %2741 = vmatprep.mubr.f32.mxu0 0.0
      %2742 = vmatmul.mubr.f32.gmra.mxu0 %v2531
      %v2743 = vpop.f32.mrf.mxu0
      %v2744 = vadd.f32 %v2455, %v2743
      %v2745 = vpop.f32.mrf.mxu0
      %2746 = vmatprep.mubr.f32.mxu0 0.0
      %2747 = vmatmul.mubr.f32.gmra.mxu0 %v2534
      %v2748 = vpop.f32.mrf.mxu0
      %v2749 = vadd.f32 %v2455, %v2748
      %v2750 = vpop.f32.mrf.mxu0
      %2751 = vmatprep.mubr.f32.mxu0 0.0
      %2752 = vmatmul.mubr.f32.gmra.mxu0 %v2537
      %v2753 = vpop.f32.mrf.mxu0
      %v2754 = vadd.f32 %v2455, %v2753
      %v2755 = vpop.f32.mrf.mxu0
      %2756 = vmatprep.mubr.f32.mxu0 0.0
      %2757 = vmatmul.mubr.f32.gmra.mxu0 %v2540
      %v2758 = vpop.f32.mrf.mxu0
      %v2759 = vadd.f32 %v2455, %v2758
      %v2760 = vpop.f32.mrf.mxu0
      %2761 = vmatprep.mubr.f32.mxu0 0.0
      %2762 = vmatmul.mubr.f32.gmra.mxu0 %v2543
      %v2763 = vpop.f32.mrf.mxu0
      %v2764 = vadd.f32 %v2455, %v2763
      %v2765 = vpop.f32.mrf.mxu0
      %2766 = vmatprep.mubr.f32.mxu0 0.0
      %2767 = vmatmul.mubr.f32.gmra.mxu0 %v2546
      %v2768 = vpop.f32.mrf.mxu0
      %v2769 = vadd.f32 %v2455, %v2768
      %v2770 = vpop.f32.mrf.mxu0
      %2771 = vmatprep.mubr.f32.mxu0 0.0
      %2772 = vmatmul.mubr.f32.gmra.mxu0 %v2549
      %v2773 = vpop.f32.mrf.mxu0
      %v2774 = vadd.f32 %v2455, %v2773
      %v2775 = vpop.f32.mrf.mxu0
      %2776 = vmatprep.mubr.f32.mxu0 0.0
      %2777 = vmatmul.mubr.f32.gmra.mxu0 %v2552
      %v2778 = vpop.f32.mrf.mxu0
      %v2779 = vadd.f32 %v2455, %v2778
      %v2780 = vpop.f32.mrf.mxu0
      %2781 = vdwg.mxu0
      %v2782 = vmax.f32 %v2624, 0.0
      %v2783 = vmax.f32 %v2629, 0.0
      %v2784 = vmax.f32 %v2634, 0.0
      %v2785 = vmax.f32 %v2639, 0.0
      %v2786 = vmax.f32 %v2644, 0.0
      %v2787 = vmax.f32 %v2649, 0.0
      %v2788 = vmax.f32 %v2654, 0.0
      %v2789 = vmax.f32 %v2659, 0.0
      %v2790 = vmax.f32 %v2664, 0.0
      %v2791 = vmax.f32 %v2669, 0.0
      %v2792 = vmax.f32 %v2674, 0.0
      %v2793 = vmax.f32 %v2679, 0.0
      %v2794 = vmax.f32 %v2684, 0.0
      %v2795 = vmax.f32 %v2689, 0.0
      %v2796 = vmax.f32 %v2694, 0.0
      %v2797 = vmax.f32 %v2699, 0.0
      %v2798 = vmax.f32 %v2704, 0.0
      %v2799 = vmax.f32 %v2709, 0.0
      %v2800 = vmax.f32 %v2714, 0.0
      %v2801 = vmax.f32 %v2719, 0.0
      %v2802 = vmax.f32 %v2724, 0.0
      %v2803 = vmax.f32 %v2729, 0.0
      %v2804 = vmax.f32 %v2734, 0.0
      %v2805 = vmax.f32 %v2739, 0.0
      %v2806 = vmax.f32 %v2744, 0.0
      %v2807 = vmax.f32 %v2749, 0.0
      %v2808 = vmax.f32 %v2754, 0.0
      %v2809 = vmax.f32 %v2759, 0.0
      %v2810 = vmax.f32 %v2764, 0.0
      %v2811 = vmax.f32 %v2769, 0.0
      %v2812 = vmax.f32 %v2774, 0.0
      %v2813 = vmax.f32 %v2779, 0.0
      %2814 = vst.msk [vmem:[#allocation3] sm:$0xff] %vm2214, 0.0
      %2815 = vst.msk [vmem:[#allocation3 + $0x8] sm:$0xff] %vm2214, 0.0
      %vm2816 = vcmask 58368
      %2817 = vst.msk [vmem:[#allocation3 + $0x10] sm:$0x3] %vm2816, 0.0
      %2818 = vst.msk [vmem:[#allocation3 + $0x18] sm:$0xff] %vm2214, 0.0
      %2819 = vst.msk [vmem:[#allocation3 + $0x20] sm:$0xff] %vm2214, 0.0
      %2820 = vst.msk [vmem:[#allocation3 + $0x28] sm:$0x3] %vm2816, 0.0
      %2821 = vst.msk [vmem:[#allocation3 + $0x30] sm:$0xff] %vm2214, 0.0
      %2822 = vst.msk [vmem:[#allocation3 + $0x38] sm:$0xff] %vm2214, 0.0
      %2823 = vst.msk [vmem:[#allocation3 + $0x40] sm:$0x3] %vm2816, 0.0
      %2824 = vst.msk [vmem:[#allocation3 + $0x48] sm:$0xff] %vm2214, 0.0
      %2825 = vst.msk [vmem:[#allocation3 + $0x50] sm:$0xff] %vm2214, 0.0
      %2826 = vst.msk [vmem:[#allocation3 + $0x58] sm:$0x3] %vm2816, 0.0
      %2827 = vst.msk [vmem:[#allocation3 + $0x60] sm:$0xff] %vm2214, 0.0
      %2828 = vst.msk [vmem:[#allocation3 + $0x68] sm:$0xff] %vm2214, 0.0
      %2829 = vst.msk [vmem:[#allocation3 + $0x70] sm:$0x3] %vm2816, 0.0
      %2830 = vst.msk [vmem:[#allocation3 + $0x78] sm:$0xff] %vm2214, 0.0
      %2831 = vst.msk [vmem:[#allocation3 + $0x80] sm:$0xff] %vm2214, 0.0
      %2832 = vst.msk [vmem:[#allocation3 + $0x88] sm:$0x3] %vm2816, 0.0
      %2833 = vst.msk [vmem:[#allocation3 + $0x90] sm:$0xff] %vm2214, 0.0
      %2834 = vst.msk [vmem:[#allocation3 + $0x98] sm:$0xff] %vm2214, 0.0
      %2835 = vst.msk [vmem:[#allocation3 + $0xa0] sm:$0x3] %vm2816, 0.0
      %2836 = vst.msk [vmem:[#allocation3 + $0xa8] sm:$0xff] %vm2214, 0.0
      %2837 = vst.msk [vmem:[#allocation3 + $0xb0] sm:$0xff] %vm2214, 0.0
      %2838 = vst.msk [vmem:[#allocation3 + $0xb8] sm:$0x3] %vm2816, 0.0
      %2839 = vst.msk [vmem:[#allocation3 + $0xc0] sm:$0xff] %vm2214, 0.0
      %2840 = vst.msk [vmem:[#allocation3 + $0xc8] sm:$0xff] %vm2214, 0.0
      %2841 = vst.msk [vmem:[#allocation3 + $0xd0] sm:$0x3] %vm2816, 0.0
      %2842 = vst.msk [vmem:[#allocation3 + $0xd8] sm:$0xff] %vm2214, 0.0
      %2843 = vst.msk [vmem:[#allocation3 + $0xe0] sm:$0xff] %vm2214, 0.0
      %2844 = vst.msk [vmem:[#allocation3 + $0xe8] sm:$0x3] %vm2816, 0.0
      %2845 = vst.msk [vmem:[#allocation3 + $0xf0] sm:$0xff] %vm2214, 0.0
      %2846 = vst.msk [vmem:[#allocation3 + $0xf8] sm:$0xff] %vm2214, 0.0
      %2847 = vst.msk [vmem:[#allocation3 + $0x100] sm:$0x3] %vm2816, 0.0
      %2848 = vst.msk [vmem:[#allocation3 + $0x108] sm:$0xff] %vm2214, 0.0
      %2849 = vst.msk [vmem:[#allocation3 + $0x110] sm:$0xff] %vm2214, 0.0
      %2850 = vst.msk [vmem:[#allocation3 + $0x118] sm:$0x3] %vm2816, 0.0
      %2851 = vst.msk [vmem:[#allocation3 + $0x120] sm:$0xff] %vm2214, 0.0
      %2852 = vst.msk [vmem:[#allocation3 + $0x128] sm:$0xff] %vm2214, 0.0
      %2853 = vst.msk [vmem:[#allocation3 + $0x130] sm:$0x3] %vm2816, 0.0
      %2854 = vst.msk [vmem:[#allocation3 + $0x138] sm:$0xff] %vm2214, 0.0
      %2855 = vst.msk [vmem:[#allocation3 + $0x140] sm:$0xff] %vm2214, 0.0
      %2856 = vst.msk [vmem:[#allocation3 + $0x148] sm:$0x3] %vm2816, 0.0
      %2857 = vst.msk [vmem:[#allocation3 + $0x150] sm:$0xff] %vm2214, 0.0
      %2858 = vst.msk [vmem:[#allocation3 + $0x158] sm:$0xff] %vm2214, 0.0
      %2859 = vst.msk [vmem:[#allocation3 + $0x160] sm:$0x3] %vm2816, 0.0
      %2860 = vst.msk [vmem:[#allocation3 + $0x168] sm:$0xff] %vm2214, 0.0
      %2861 = vst.msk [vmem:[#allocation3 + $0x170] sm:$0xff] %vm2214, 0.0
      %2862 = vst.msk [vmem:[#allocation3 + $0x178] sm:$0x3] %vm2816, 0.0
      %2863 = vst.msk [vmem:[#allocation3 + $0x180] sm:$0xff] %vm2214, 0.0
      %2864 = vst.msk [vmem:[#allocation3 + $0x188] sm:$0xff] %vm2214, 0.0
      %2865 = vst.msk [vmem:[#allocation3 + $0x190] sm:$0x3] %vm2816, 0.0
      %2866 = vst.msk [vmem:[#allocation3 + $0x198] sm:$0xff] %vm2214, 0.0
      %2867 = vst.msk [vmem:[#allocation3 + $0x1a0] sm:$0xff] %vm2214, 0.0
      %2868 = vst.msk [vmem:[#allocation3 + $0x1a8] sm:$0x3] %vm2816, 0.0
      %s2869 = scalar_lea.vmem [#allocation3], 24
      %2870 = vst.msk [vmem:[%s2869 + $0x1] sm:$0xff] %vm2214, %v2782
      %2871 = vst.msk [vmem:[%s2869 + $0x9] sm:$0xff] %vm2214, %v2783
      %2872 = vst.msk [vmem:[%s2869 + $0x19] sm:$0xff] %vm2214, %v2784
      %2873 = vst.msk [vmem:[%s2869 + $0x21] sm:$0xff] %vm2214, %v2785
      %2874 = vst.msk [vmem:[%s2869 + $0x31] sm:$0xff] %vm2214, %v2786
      %2875 = vst.msk [vmem:[%s2869 + $0x39] sm:$0xff] %vm2214, %v2787
      %2876 = vst.msk [vmem:[%s2869 + $0x49] sm:$0xff] %vm2214, %v2788
      %2877 = vst.msk [vmem:[%s2869 + $0x51] sm:$0xff] %vm2214, %v2789
      %2878 = vst.msk [vmem:[%s2869 + $0x61] sm:$0xff] %vm2214, %v2790
      %2879 = vst.msk [vmem:[%s2869 + $0x69] sm:$0xff] %vm2214, %v2791
      %2880 = vst.msk [vmem:[%s2869 + $0x79] sm:$0xff] %vm2214, %v2792
      %2881 = vst.msk [vmem:[%s2869 + $0x81] sm:$0xff] %vm2214, %v2793
      %2882 = vst.msk [vmem:[%s2869 + $0x91] sm:$0xff] %vm2214, %v2794
      %2883 = vst.msk [vmem:[%s2869 + $0x99] sm:$0xff] %vm2214, %v2795
      %2884 = vst.msk [vmem:[%s2869 + $0xa9] sm:$0xff] %vm2214, %v2796
      %2885 = vst.msk [vmem:[%s2869 + $0xb1] sm:$0xff] %vm2214, %v2797
      %2886 = vst.msk [vmem:[%s2869 + $0xc1] sm:$0xff] %vm2214, %v2798
      %2887 = vst.msk [vmem:[%s2869 + $0xc9] sm:$0xff] %vm2214, %v2799
      %2888 = vst.msk [vmem:[%s2869 + $0xd9] sm:$0xff] %vm2214, %v2800
      %2889 = vst.msk [vmem:[%s2869 + $0xe1] sm:$0xff] %vm2214, %v2801
      %2890 = vst.msk [vmem:[%s2869 + $0xf1] sm:$0xff] %vm2214, %v2802
      %2891 = vst.msk [vmem:[%s2869 + $0xf9] sm:$0xff] %vm2214, %v2803
      %2892 = vst.msk [vmem:[%s2869 + $0x109] sm:$0xff] %vm2214, %v2804
      %2893 = vst.msk [vmem:[%s2869 + $0x111] sm:$0xff] %vm2214, %v2805
      %2894 = vst.msk [vmem:[%s2869 + $0x121] sm:$0xff] %vm2214, %v2806
      %2895 = vst.msk [vmem:[%s2869 + $0x129] sm:$0xff] %vm2214, %v2807
      %2896 = vst.msk [vmem:[%s2869 + $0x139] sm:$0xff] %vm2214, %v2808
      %2897 = vst.msk [vmem:[%s2869 + $0x141] sm:$0xff] %vm2214, %v2809
      %2898 = vst.msk [vmem:[%s2869 + $0x151] sm:$0xff] %vm2214, %v2810
      %2899 = vst.msk [vmem:[%s2869 + $0x159] sm:$0xff] %vm2214, %v2811
      %2900 = vst.msk [vmem:[%s2869 + $0x169] sm:$0xff] %vm2214, %v2812
      %2901 = vst.msk [vmem:[%s2869 + $0x171] sm:$0xff] %vm2214, %v2813
      %v2902 = vld [vmem:[#allocation3] sm:$0xff]
      %v2903 = vld [vmem:[#allocation3 + $0x8] sm:$0xff]
      %v2904 = vld [vmem:[#allocation3 + $0x18] sm:$0xff]
      %v2905 = vld [vmem:[#allocation3 + $0x20] sm:$0xff]
      %v2906 = vld [vmem:[#allocation3 + $0x30] sm:$0xff]
      %v2907 = vld [vmem:[#allocation3 + $0x38] sm:$0xff]
      %v2908 = vld [vmem:[#allocation3 + $0x48] sm:$0xff]
      %v2909 = vld [vmem:[#allocation3 + $0x50] sm:$0xff]
      %v2910 = vld [vmem:[#allocation3 + $0x60] sm:$0xff]
      %v2911 = vld [vmem:[#allocation3 + $0x68] sm:$0xff]
      %v2912 = vld [vmem:[#allocation3 + $0x78] sm:$0xff]
      %v2913 = vld [vmem:[#allocation3 + $0x80] sm:$0xff]
      %v2914 = vld [vmem:[#allocation3 + $0x90] sm:$0xff]
      %v2915 = vld [vmem:[#allocation3 + $0x98] sm:$0xff]
      %v2916 = vld [vmem:[#allocation3 + $0xa8] sm:$0xff]
      %v2917 = vld [vmem:[#allocation3 + $0xb0] sm:$0xff]
      %v2918 = vld [vmem:[#allocation3 + $0xc0] sm:$0xff]
      %v2919 = vld [vmem:[#allocation3 + $0xc8] sm:$0xff]
      %v2920 = vld [vmem:[#allocation3 + $0xd8] sm:$0xff]
      %v2921 = vld [vmem:[#allocation3 + $0xe0] sm:$0xff]
      %v2922 = vld [vmem:[#allocation3 + $0xf0] sm:$0xff]
      %v2923 = vld [vmem:[#allocation3 + $0xf8] sm:$0xff]
      %v2924 = vld [vmem:[#allocation3 + $0x108] sm:$0xff]
      %v2925 = vld [vmem:[#allocation3 + $0x110] sm:$0xff]
      %v2926 = vld [vmem:[#allocation3 + $0x120] sm:$0xff]
      %v2927 = vld [vmem:[#allocation3 + $0x128] sm:$0xff]
      %v2928 = vld [vmem:[#allocation3 + $0x138] sm:$0xff]
      %v2929 = vld [vmem:[#allocation3 + $0x140] sm:$0xff]
      %v2930 = vld [vmem:[#allocation3 + $0x150] sm:$0xff]
      %v2931 = vld [vmem:[#allocation3 + $0x158] sm:$0xff]
      %v2932 = vld [vmem:[#allocation3 + $0x168] sm:$0xff]
      %v2933 = vld [vmem:[#allocation3 + $0x170] sm:$0xff]
      %v2934 = vld [vmem:[#allocation3 + $0x1] sm:$0xff]
      %v2935 = vld [vmem:[#allocation3 + $0x9] sm:$0xff]
      %v2936 = vld [vmem:[#allocation3 + $0x19] sm:$0xff]
      %v2937 = vld [vmem:[#allocation3 + $0x21] sm:$0xff]
      %v2938 = vld [vmem:[#allocation3 + $0x31] sm:$0xff]
      %v2939 = vld [vmem:[#allocation3 + $0x39] sm:$0xff]
      %v2940 = vld [vmem:[#allocation3 + $0x49] sm:$0xff]
      %v2941 = vld [vmem:[#allocation3 + $0x51] sm:$0xff]
      %v2942 = vld [vmem:[#allocation3 + $0x61] sm:$0xff]
      %v2943 = vld [vmem:[#allocation3 + $0x69] sm:$0xff]
      %v2944 = vld [vmem:[#allocation3 + $0x79] sm:$0xff]
      %v2945 = vld [vmem:[#allocation3 + $0x81] sm:$0xff]
      %v2946 = vld [vmem:[#allocation3 + $0x91] sm:$0xff]
      %v2947 = vld [vmem:[#allocation3 + $0x99] sm:$0xff]
      %v2948 = vld [vmem:[#allocation3 + $0xa9] sm:$0xff]
      %v2949 = vld [vmem:[#allocation3 + $0xb1] sm:$0xff]
      %v2950 = vld [vmem:[#allocation3 + $0xc1] sm:$0xff]
      %v2951 = vld [vmem:[#allocation3 + $0xc9] sm:$0xff]
      %v2952 = vld [vmem:[#allocation3 + $0xd9] sm:$0xff]
      %v2953 = vld [vmem:[#allocation3 + $0xe1] sm:$0xff]
      %v2954 = vld [vmem:[#allocation3 + $0xf1] sm:$0xff]
      %v2955 = vld [vmem:[#allocation3 + $0xf9] sm:$0xff]
      %v2956 = vld [vmem:[#allocation3 + $0x109] sm:$0xff]
      %v2957 = vld [vmem:[#allocation3 + $0x111] sm:$0xff]
      %v2958 = vld [vmem:[#allocation3 + $0x121] sm:$0xff]
      %v2959 = vld [vmem:[#allocation3 + $0x129] sm:$0xff]
      %v2960 = vld [vmem:[#allocation3 + $0x139] sm:$0xff]
      %v2961 = vld [vmem:[#allocation3 + $0x141] sm:$0xff]
      %v2962 = vld [vmem:[#allocation3 + $0x151] sm:$0xff]
      %v2963 = vld [vmem:[#allocation3 + $0x159] sm:$0xff]
      %v2964 = vld [vmem:[#allocation3 + $0x169] sm:$0xff]
      %v2965 = vld [vmem:[#allocation3 + $0x171] sm:$0xff]
      %v2966 = vld [vmem:[#allocation3 + $0x2] sm:$0xff]
      %v2967 = vld [vmem:[#allocation3 + $0xa] sm:$0xff]
      %v2968 = vld [vmem:[#allocation3 + $0x1a] sm:$0xff]
      %v2969 = vld [vmem:[#allocation3 + $0x22] sm:$0xff]
      %v2970 = vld [vmem:[#allocation3 + $0x32] sm:$0xff]
      %v2971 = vld [vmem:[#allocation3 + $0x3a] sm:$0xff]
      %v2972 = vld [vmem:[#allocation3 + $0x4a] sm:$0xff]
      %v2973 = vld [vmem:[#allocation3 + $0x52] sm:$0xff]
      %v2974 = vld [vmem:[#allocation3 + $0x62] sm:$0xff]
      %v2975 = vld [vmem:[#allocation3 + $0x6a] sm:$0xff]
      %v2976 = vld [vmem:[#allocation3 + $0x7a] sm:$0xff]
      %v2977 = vld [vmem:[#allocation3 + $0x82] sm:$0xff]
      %v2978 = vld [vmem:[#allocation3 + $0x92] sm:$0xff]
      %v2979 = vld [vmem:[#allocation3 + $0x9a] sm:$0xff]
      %v2980 = vld [vmem:[#allocation3 + $0xaa] sm:$0xff]
      %v2981 = vld [vmem:[#allocation3 + $0xb2] sm:$0xff]
      %v2982 = vld [vmem:[#allocation3 + $0xc2] sm:$0xff]
      %v2983 = vld [vmem:[#allocation3 + $0xca] sm:$0xff]
      %v2984 = vld [vmem:[#allocation3 + $0xda] sm:$0xff]
      %v2985 = vld [vmem:[#allocation3 + $0xe2] sm:$0xff]
      %v2986 = vld [vmem:[#allocation3 + $0xf2] sm:$0xff]
      %v2987 = vld [vmem:[#allocation3 + $0xfa] sm:$0xff]
      %v2988 = vld [vmem:[#allocation3 + $0x10a] sm:$0xff]
      %v2989 = vld [vmem:[#allocation3 + $0x112] sm:$0xff]
      %v2990 = vld [vmem:[#allocation3 + $0x122] sm:$0xff]
      %v2991 = vld [vmem:[#allocation3 + $0x12a] sm:$0xff]
      %v2992 = vld [vmem:[#allocation3 + $0x13a] sm:$0xff]
      %v2993 = vld [vmem:[#allocation3 + $0x142] sm:$0xff]
      %v2994 = vld [vmem:[#allocation3 + $0x152] sm:$0xff]
      %v2995 = vld [vmem:[#allocation3 + $0x15a] sm:$0xff]
      %v2996 = vld [vmem:[#allocation3 + $0x16a] sm:$0xff]
      %v2997 = vld [vmem:[#allocation3 + $0x172] sm:$0xff]
      %v2998 = vld [vmem:[%s2869] sm:$0xff]
      %v2999 = vld [vmem:[%s2869 + $0x8] sm:$0xff]
      %v3000 = vld [vmem:[%s2869 + $0x18] sm:$0xff]
      %v3001 = vld [vmem:[%s2869 + $0x20] sm:$0xff]
      %v3002 = vld [vmem:[%s2869 + $0x30] sm:$0xff]
      %v3003 = vld [vmem:[%s2869 + $0x38] sm:$0xff]
      %v3004 = vld [vmem:[%s2869 + $0x48] sm:$0xff]
      %v3005 = vld [vmem:[%s2869 + $0x50] sm:$0xff]
      %v3006 = vld [vmem:[%s2869 + $0x60] sm:$0xff]
      %v3007 = vld [vmem:[%s2869 + $0x68] sm:$0xff]
      %v3008 = vld [vmem:[%s2869 + $0x78] sm:$0xff]
      %v3009 = vld [vmem:[%s2869 + $0x80] sm:$0xff]
      %v3010 = vld [vmem:[%s2869 + $0x90] sm:$0xff]
      %v3011 = vld [vmem:[%s2869 + $0x98] sm:$0xff]
      %v3012 = vld [vmem:[%s2869 + $0xa8] sm:$0xff]
      %v3013 = vld [vmem:[%s2869 + $0xb0] sm:$0xff]
      %v3014 = vld [vmem:[%s2869 + $0xc0] sm:$0xff]
      %v3015 = vld [vmem:[%s2869 + $0xc8] sm:$0xff]
      %v3016 = vld [vmem:[%s2869 + $0xd8] sm:$0xff]
      %v3017 = vld [vmem:[%s2869 + $0xe0] sm:$0xff]
      %v3018 = vld [vmem:[%s2869 + $0xf0] sm:$0xff]
      %v3019 = vld [vmem:[%s2869 + $0xf8] sm:$0xff]
      %v3020 = vld [vmem:[%s2869 + $0x108] sm:$0xff]
      %v3021 = vld [vmem:[%s2869 + $0x110] sm:$0xff]
      %v3022 = vld [vmem:[%s2869 + $0x120] sm:$0xff]
      %v3023 = vld [vmem:[%s2869 + $0x128] sm:$0xff]
      %v3024 = vld [vmem:[%s2869 + $0x138] sm:$0xff]
      %v3025 = vld [vmem:[%s2869 + $0x140] sm:$0xff]
      %v3026 = vld [vmem:[%s2869 + $0x150] sm:$0xff]
      %v3027 = vld [vmem:[%s2869 + $0x158] sm:$0xff]
      %v3028 = vld [vmem:[%s2869 + $0x168] sm:$0xff]
      %v3029 = vld [vmem:[%s2869 + $0x170] sm:$0xff]
      %v3030 = vld [vmem:[%s2869 + $0x1] sm:$0xff]
      %v3031 = vld [vmem:[%s2869 + $0x9] sm:$0xff]
      %v3032 = vld [vmem:[%s2869 + $0x19] sm:$0xff]
      %v3033 = vld [vmem:[%s2869 + $0x21] sm:$0xff]
      %v3034 = vld [vmem:[%s2869 + $0x31] sm:$0xff]
      %v3035 = vld [vmem:[%s2869 + $0x39] sm:$0xff]
      %v3036 = vld [vmem:[%s2869 + $0x49] sm:$0xff]
      %v3037 = vld [vmem:[%s2869 + $0x51] sm:$0xff]
      %v3038 = vld [vmem:[%s2869 + $0x61] sm:$0xff]
      %v3039 = vld [vmem:[%s2869 + $0x69] sm:$0xff]
      %v3040 = vld [vmem:[%s2869 + $0x79] sm:$0xff]
      %v3041 = vld [vmem:[%s2869 + $0x81] sm:$0xff]
      %v3042 = vld [vmem:[%s2869 + $0x91] sm:$0xff]
      %v3043 = vld [vmem:[%s2869 + $0x99] sm:$0xff]
      %v3044 = vld [vmem:[%s2869 + $0xa9] sm:$0xff]
      %v3045 = vld [vmem:[%s2869 + $0xb1] sm:$0xff]
      %v3046 = vld [vmem:[%s2869 + $0xc1] sm:$0xff]
      %v3047 = vld [vmem:[%s2869 + $0xc9] sm:$0xff]
      %v3048 = vld [vmem:[%s2869 + $0xd9] sm:$0xff]
      %v3049 = vld [vmem:[%s2869 + $0xe1] sm:$0xff]
      %v3050 = vld [vmem:[%s2869 + $0xf1] sm:$0xff]
      %v3051 = vld [vmem:[%s2869 + $0xf9] sm:$0xff]
      %v3052 = vld [vmem:[%s2869 + $0x109] sm:$0xff]
      %v3053 = vld [vmem:[%s2869 + $0x111] sm:$0xff]
      %v3054 = vld [vmem:[%s2869 + $0x121] sm:$0xff]
      %v3055 = vld [vmem:[%s2869 + $0x129] sm:$0xff]
      %v3056 = vld [vmem:[%s2869 + $0x139] sm:$0xff]
      %v3057 = vld [vmem:[%s2869 + $0x141] sm:$0xff]
      %v3058 = vld [vmem:[%s2869 + $0x151] sm:$0xff]
      %v3059 = vld [vmem:[%s2869 + $0x159] sm:$0xff]
      %v3060 = vld [vmem:[%s2869 + $0x169] sm:$0xff]
      %v3061 = vld [vmem:[%s2869 + $0x171] sm:$0xff]
      %v3062 = vld [vmem:[%s2869 + $0x2] sm:$0xff]
      %v3063 = vld [vmem:[%s2869 + $0xa] sm:$0xff]
      %v3064 = vld [vmem:[%s2869 + $0x1a] sm:$0xff]
      %v3065 = vld [vmem:[%s2869 + $0x22] sm:$0xff]
      %v3066 = vld [vmem:[%s2869 + $0x32] sm:$0xff]
      %v3067 = vld [vmem:[%s2869 + $0x3a] sm:$0xff]
      %v3068 = vld [vmem:[%s2869 + $0x4a] sm:$0xff]
      %v3069 = vld [vmem:[%s2869 + $0x52] sm:$0xff]
      %v3070 = vld [vmem:[%s2869 + $0x62] sm:$0xff]
      %v3071 = vld [vmem:[%s2869 + $0x6a] sm:$0xff]
      %v3072 = vld [vmem:[%s2869 + $0x7a] sm:$0xff]
      %v3073 = vld [vmem:[%s2869 + $0x82] sm:$0xff]
      %v3074 = vld [vmem:[%s2869 + $0x92] sm:$0xff]
      %v3075 = vld [vmem:[%s2869 + $0x9a] sm:$0xff]
      %v3076 = vld [vmem:[%s2869 + $0xaa] sm:$0xff]
      %v3077 = vld [vmem:[%s2869 + $0xb2] sm:$0xff]
      %v3078 = vld [vmem:[%s2869 + $0xc2] sm:$0xff]
      %v3079 = vld [vmem:[%s2869 + $0xca] sm:$0xff]
      %v3080 = vld [vmem:[%s2869 + $0xda] sm:$0xff]
      %v3081 = vld [vmem:[%s2869 + $0xe2] sm:$0xff]
      %v3082 = vld [vmem:[%s2869 + $0xf2] sm:$0xff]
      %v3083 = vld [vmem:[%s2869 + $0xfa] sm:$0xff]
      %v3084 = vld [vmem:[%s2869 + $0x10a] sm:$0xff]
      %v3085 = vld [vmem:[%s2869 + $0x112] sm:$0xff]
      %v3086 = vld [vmem:[%s2869 + $0x122] sm:$0xff]
      %v3087 = vld [vmem:[%s2869 + $0x12a] sm:$0xff]
      %v3088 = vld [vmem:[%s2869 + $0x13a] sm:$0xff]
      %v3089 = vld [vmem:[%s2869 + $0x142] sm:$0xff]
      %v3090 = vld [vmem:[%s2869 + $0x152] sm:$0xff]
      %v3091 = vld [vmem:[%s2869 + $0x15a] sm:$0xff]
      %v3092 = vld [vmem:[%s2869 + $0x16a] sm:$0xff]
      %v3093 = vld [vmem:[%s2869 + $0x172] sm:$0xff]
      %s3094 = scalar_lea.vmem [#allocation3], 48
      %v3095 = vld [vmem:[%s3094] sm:$0xff]
      %v3096 = vld [vmem:[%s3094 + $0x8] sm:$0xff]
      %v3097 = vld [vmem:[%s3094 + $0x18] sm:$0xff]
      %v3098 = vld [vmem:[%s3094 + $0x20] sm:$0xff]
      %v3099 = vld [vmem:[%s3094 + $0x30] sm:$0xff]
      %v3100 = vld [vmem:[%s3094 + $0x38] sm:$0xff]
      %v3101 = vld [vmem:[%s3094 + $0x48] sm:$0xff]
      %v3102 = vld [vmem:[%s3094 + $0x50] sm:$0xff]
      %v3103 = vld [vmem:[%s3094 + $0x60] sm:$0xff]
      %v3104 = vld [vmem:[%s3094 + $0x68] sm:$0xff]
      %v3105 = vld [vmem:[%s3094 + $0x78] sm:$0xff]
      %v3106 = vld [vmem:[%s3094 + $0x80] sm:$0xff]
      %v3107 = vld [vmem:[%s3094 + $0x90] sm:$0xff]
      %v3108 = vld [vmem:[%s3094 + $0x98] sm:$0xff]
      %v3109 = vld [vmem:[%s3094 + $0xa8] sm:$0xff]
      %v3110 = vld [vmem:[%s3094 + $0xb0] sm:$0xff]
      %v3111 = vld [vmem:[%s3094 + $0xc0] sm:$0xff]
      %v3112 = vld [vmem:[%s3094 + $0xc8] sm:$0xff]
      %v3113 = vld [vmem:[%s3094 + $0xd8] sm:$0xff]
      %v3114 = vld [vmem:[%s3094 + $0xe0] sm:$0xff]
      %v3115 = vld [vmem:[%s3094 + $0xf0] sm:$0xff]
      %v3116 = vld [vmem:[%s3094 + $0xf8] sm:$0xff]
      %v3117 = vld [vmem:[%s3094 + $0x108] sm:$0xff]
      %v3118 = vld [vmem:[%s3094 + $0x110] sm:$0xff]
      %v3119 = vld [vmem:[%s3094 + $0x120] sm:$0xff]
      %v3120 = vld [vmem:[%s3094 + $0x128] sm:$0xff]
      %v3121 = vld [vmem:[%s3094 + $0x138] sm:$0xff]
      %v3122 = vld [vmem:[%s3094 + $0x140] sm:$0xff]
      %v3123 = vld [vmem:[%s3094 + $0x150] sm:$0xff]
      %v3124 = vld [vmem:[%s3094 + $0x158] sm:$0xff]
      %v3125 = vld [vmem:[%s3094 + $0x168] sm:$0xff]
      %v3126 = vld [vmem:[%s3094 + $0x170] sm:$0xff]
      %v3127 = vld [vmem:[%s3094 + $0x1] sm:$0xff]
      %v3128 = vld [vmem:[%s3094 + $0x9] sm:$0xff]
      %v3129 = vld [vmem:[%s3094 + $0x19] sm:$0xff]
      %v3130 = vld [vmem:[%s3094 + $0x21] sm:$0xff]
      %v3131 = vld [vmem:[%s3094 + $0x31] sm:$0xff]
      %v3132 = vld [vmem:[%s3094 + $0x39] sm:$0xff]
      %v3133 = vld [vmem:[%s3094 + $0x49] sm:$0xff]
      %v3134 = vld [vmem:[%s3094 + $0x51] sm:$0xff]
      %v3135 = vld [vmem:[%s3094 + $0x61] sm:$0xff]
      %v3136 = vld [vmem:[%s3094 + $0x69] sm:$0xff]
      %v3137 = vld [vmem:[%s3094 + $0x79] sm:$0xff]
      %v3138 = vld [vmem:[%s3094 + $0x81] sm:$0xff]
      %v3139 = vld [vmem:[%s3094 + $0x91] sm:$0xff]
      %v3140 = vld [vmem:[%s3094 + $0x99] sm:$0xff]
      %v3141 = vld [vmem:[%s3094 + $0xa9] sm:$0xff]
      %v3142 = vld [vmem:[%s3094 + $0xb1] sm:$0xff]
      %v3143 = vld [vmem:[%s3094 + $0xc1] sm:$0xff]
      %v3144 = vld [vmem:[%s3094 + $0xc9] sm:$0xff]
      %v3145 = vld [vmem:[%s3094 + $0xd9] sm:$0xff]
      %v3146 = vld [vmem:[%s3094 + $0xe1] sm:$0xff]
      %v3147 = vld [vmem:[%s3094 + $0xf1] sm:$0xff]
      %v3148 = vld [vmem:[%s3094 + $0xf9] sm:$0xff]
      %v3149 = vld [vmem:[%s3094 + $0x109] sm:$0xff]
      %v3150 = vld [vmem:[%s3094 + $0x111] sm:$0xff]
      %v3151 = vld [vmem:[%s3094 + $0x121] sm:$0xff]
      %v3152 = vld [vmem:[%s3094 + $0x129] sm:$0xff]
      %v3153 = vld [vmem:[%s3094 + $0x139] sm:$0xff]
      %v3154 = vld [vmem:[%s3094 + $0x141] sm:$0xff]
      %v3155 = vld [vmem:[%s3094 + $0x151] sm:$0xff]
      %v3156 = vld [vmem:[%s3094 + $0x159] sm:$0xff]
      %v3157 = vld [vmem:[%s3094 + $0x169] sm:$0xff]
      %v3158 = vld [vmem:[%s3094 + $0x171] sm:$0xff]
      %v3159 = vld [vmem:[%s3094 + $0x2] sm:$0xff]
      %v3160 = vld [vmem:[%s3094 + $0xa] sm:$0xff]
      %v3161 = vld [vmem:[%s3094 + $0x1a] sm:$0xff]
      %v3162 = vld [vmem:[%s3094 + $0x22] sm:$0xff]
      %v3163 = vld [vmem:[%s3094 + $0x32] sm:$0xff]
      %v3164 = vld [vmem:[%s3094 + $0x3a] sm:$0xff]
      %v3165 = vld [vmem:[%s3094 + $0x4a] sm:$0xff]
      %v3166 = vld [vmem:[%s3094 + $0x52] sm:$0xff]
      %v3167 = vld [vmem:[%s3094 + $0x62] sm:$0xff]
      %v3168 = vld [vmem:[%s3094 + $0x6a] sm:$0xff]
      %v3169 = vld [vmem:[%s3094 + $0x7a] sm:$0xff]
      %v3170 = vld [vmem:[%s3094 + $0x82] sm:$0xff]
      %v3171 = vld [vmem:[%s3094 + $0x92] sm:$0xff]
      %v3172 = vld [vmem:[%s3094 + $0x9a] sm:$0xff]
      %v3173 = vld [vmem:[%s3094 + $0xaa] sm:$0xff]
      %v3174 = vld [vmem:[%s3094 + $0xb2] sm:$0xff]
      %v3175 = vld [vmem:[%s3094 + $0xc2] sm:$0xff]
      %v3176 = vld [vmem:[%s3094 + $0xca] sm:$0xff]
      %v3177 = vld [vmem:[%s3094 + $0xda] sm:$0xff]
      %v3178 = vld [vmem:[%s3094 + $0xe2] sm:$0xff]
      %v3179 = vld [vmem:[%s3094 + $0xf2] sm:$0xff]
      %v3180 = vld [vmem:[%s3094 + $0xfa] sm:$0xff]
      %v3181 = vld [vmem:[%s3094 + $0x10a] sm:$0xff]
      %v3182 = vld [vmem:[%s3094 + $0x112] sm:$0xff]
      %v3183 = vld [vmem:[%s3094 + $0x122] sm:$0xff]
      %v3184 = vld [vmem:[%s3094 + $0x12a] sm:$0xff]
      %v3185 = vld [vmem:[%s3094 + $0x13a] sm:$0xff]
      %v3186 = vld [vmem:[%s3094 + $0x142] sm:$0xff]
      %v3187 = vld [vmem:[%s3094 + $0x152] sm:$0xff]
      %v3188 = vld [vmem:[%s3094 + $0x15a] sm:$0xff]
      %v3189 = vld [vmem:[%s3094 + $0x16a] sm:$0xff]
      %v3190 = vld [vmem:[%s3094 + $0x172] sm:$0xff]
      %3223 = vrot.lane.b32.xlu0 %v2934, 8
      %v3224 = vpop.permute.xlu0 %3223
      %3225 = vrot.lane.b32.xlu0 %v2935, 8
      %v3226 = vpop.permute.xlu0 %3225
      %3227 = vrot.lane.b32.xlu0 %v2936, 8
      %v3228 = vpop.permute.xlu0 %3227
      %3229 = vrot.lane.b32.xlu0 %v2937, 8
      %v3230 = vpop.permute.xlu0 %3229
      %3231 = vrot.lane.b32.xlu0 %v2938, 8
      %v3232 = vpop.permute.xlu0 %3231
      %3233 = vrot.lane.b32.xlu0 %v2939, 8
      %v3234 = vpop.permute.xlu0 %3233
      %3235 = vrot.lane.b32.xlu0 %v2940, 8
      %v3236 = vpop.permute.xlu0 %3235
      %3237 = vrot.lane.b32.xlu0 %v2941, 8
      %v3238 = vpop.permute.xlu0 %3237
      %3239 = vrot.lane.b32.xlu0 %v2942, 8
      %v3240 = vpop.permute.xlu0 %3239
      %3241 = vrot.lane.b32.xlu0 %v2943, 8
      %v3242 = vpop.permute.xlu0 %3241
      %3243 = vrot.lane.b32.xlu0 %v2944, 8
      %v3244 = vpop.permute.xlu0 %3243
      %3245 = vrot.lane.b32.xlu0 %v2945, 8
      %v3246 = vpop.permute.xlu0 %3245
      %3247 = vrot.lane.b32.xlu0 %v2946, 8
      %v3248 = vpop.permute.xlu0 %3247
      %3249 = vrot.lane.b32.xlu0 %v2947, 8
      %v3250 = vpop.permute.xlu0 %3249
      %3251 = vrot.lane.b32.xlu0 %v2948, 8
      %v3252 = vpop.permute.xlu0 %3251
      %3253 = vrot.lane.b32.xlu0 %v2949, 8
      %v3254 = vpop.permute.xlu0 %3253
      %3255 = vrot.lane.b32.xlu0 %v2950, 8
      %v3256 = vpop.permute.xlu0 %3255
      %3257 = vrot.lane.b32.xlu0 %v2951, 8
      %v3258 = vpop.permute.xlu0 %3257
      %3259 = vrot.lane.b32.xlu0 %v2952, 8
      %v3260 = vpop.permute.xlu0 %3259
      %3261 = vrot.lane.b32.xlu0 %v2953, 8
      %v3262 = vpop.permute.xlu0 %3261
      %3263 = vrot.lane.b32.xlu0 %v2954, 8
      %v3264 = vpop.permute.xlu0 %3263
      %3265 = vrot.lane.b32.xlu0 %v2955, 8
      %v3266 = vpop.permute.xlu0 %3265
      %3267 = vrot.lane.b32.xlu0 %v2956, 8
      %v3268 = vpop.permute.xlu0 %3267
      %3269 = vrot.lane.b32.xlu0 %v2957, 8
      %v3270 = vpop.permute.xlu0 %3269
      %3271 = vrot.lane.b32.xlu0 %v2958, 8
      %v3272 = vpop.permute.xlu0 %3271
      %3273 = vrot.lane.b32.xlu0 %v2959, 8
      %v3274 = vpop.permute.xlu0 %3273
      %3275 = vrot.lane.b32.xlu0 %v2960, 8
      %v3276 = vpop.permute.xlu0 %3275
      %3277 = vrot.lane.b32.xlu0 %v2961, 8
      %v3278 = vpop.permute.xlu0 %3277
      %3279 = vrot.lane.b32.xlu0 %v2962, 8
      %v3280 = vpop.permute.xlu0 %3279
      %3281 = vrot.lane.b32.xlu0 %v2963, 8
      %v3282 = vpop.permute.xlu0 %3281
      %3283 = vrot.lane.b32.xlu0 %v2964, 8
      %v3284 = vpop.permute.xlu0 %3283
      %3285 = vrot.lane.b32.xlu0 %v2965, 8
      %v3286 = vpop.permute.xlu0 %3285
      %3351 = vrot.lane.b32.xlu0 %v2966, 16
      %v3352 = vpop.permute.xlu0 %3351
      %3353 = vrot.lane.b32.xlu0 %v2967, 16
      %v3354 = vpop.permute.xlu0 %3353
      %3355 = vrot.lane.b32.xlu0 %v2968, 16
      %v3356 = vpop.permute.xlu0 %3355
      %3357 = vrot.lane.b32.xlu0 %v2969, 16
      %v3358 = vpop.permute.xlu0 %3357
      %3359 = vrot.lane.b32.xlu0 %v2970, 16
      %v3360 = vpop.permute.xlu0 %3359
      %3361 = vrot.lane.b32.xlu0 %v2971, 16
      %v3362 = vpop.permute.xlu0 %3361
      %3363 = vrot.lane.b32.xlu0 %v2972, 16
      %v3364 = vpop.permute.xlu0 %3363
      %3365 = vrot.lane.b32.xlu0 %v2973, 16
      %v3366 = vpop.permute.xlu0 %3365
      %3367 = vrot.lane.b32.xlu0 %v2974, 16
      %v3368 = vpop.permute.xlu0 %3367
      %3369 = vrot.lane.b32.xlu0 %v2975, 16
      %v3370 = vpop.permute.xlu0 %3369
      %3371 = vrot.lane.b32.xlu0 %v2976, 16
      %v3372 = vpop.permute.xlu0 %3371
      %3373 = vrot.lane.b32.xlu0 %v2977, 16
      %v3374 = vpop.permute.xlu0 %3373
      %3375 = vrot.lane.b32.xlu0 %v2978, 16
      %v3376 = vpop.permute.xlu0 %3375
      %3377 = vrot.lane.b32.xlu0 %v2979, 16
      %v3378 = vpop.permute.xlu0 %3377
      %3379 = vrot.lane.b32.xlu0 %v2980, 16
      %v3380 = vpop.permute.xlu0 %3379
      %3381 = vrot.lane.b32.xlu0 %v2981, 16
      %v3382 = vpop.permute.xlu0 %3381
      %3383 = vrot.lane.b32.xlu0 %v2982, 16
      %v3384 = vpop.permute.xlu0 %3383
      %3385 = vrot.lane.b32.xlu0 %v2983, 16
      %v3386 = vpop.permute.xlu0 %3385
      %3387 = vrot.lane.b32.xlu0 %v2984, 16
      %v3388 = vpop.permute.xlu0 %3387
      %3389 = vrot.lane.b32.xlu0 %v2985, 16
      %v3390 = vpop.permute.xlu0 %3389
      %3391 = vrot.lane.b32.xlu0 %v2986, 16
      %v3392 = vpop.permute.xlu0 %3391
      %3393 = vrot.lane.b32.xlu0 %v2987, 16
      %v3394 = vpop.permute.xlu0 %3393
      %3395 = vrot.lane.b32.xlu0 %v2988, 16
      %v3396 = vpop.permute.xlu0 %3395
      %3397 = vrot.lane.b32.xlu0 %v2989, 16
      %v3398 = vpop.permute.xlu0 %3397
      %3399 = vrot.lane.b32.xlu0 %v2990, 16
      %v3400 = vpop.permute.xlu0 %3399
      %3401 = vrot.lane.b32.xlu0 %v2991, 16
      %v3402 = vpop.permute.xlu0 %3401
      %3403 = vrot.lane.b32.xlu0 %v2992, 16
      %v3404 = vpop.permute.xlu0 %3403
      %3405 = vrot.lane.b32.xlu0 %v2993, 16
      %v3406 = vpop.permute.xlu0 %3405
      %3407 = vrot.lane.b32.xlu0 %v2994, 16
      %v3408 = vpop.permute.xlu0 %3407
      %3409 = vrot.lane.b32.xlu0 %v2995, 16
      %v3410 = vpop.permute.xlu0 %3409
      %3411 = vrot.lane.b32.xlu0 %v2996, 16
      %v3412 = vpop.permute.xlu0 %3411
      %3413 = vrot.lane.b32.xlu0 %v2997, 16
      %v3414 = vpop.permute.xlu0 %3413
      %3479 = vrot.lane.b32.xlu0 %v2998, 24
      %v3480 = vpop.permute.xlu0 %3479
      %3481 = vrot.lane.b32.xlu0 %v2999, 24
      %v3482 = vpop.permute.xlu0 %3481
      %3483 = vrot.lane.b32.xlu0 %v3000, 24
      %v3484 = vpop.permute.xlu0 %3483
      %3485 = vrot.lane.b32.xlu0 %v3001, 24
      %v3486 = vpop.permute.xlu0 %3485
      %3487 = vrot.lane.b32.xlu0 %v3002, 24
      %v3488 = vpop.permute.xlu0 %3487
      %3489 = vrot.lane.b32.xlu0 %v3003, 24
      %v3490 = vpop.permute.xlu0 %3489
      %3491 = vrot.lane.b32.xlu0 %v3004, 24
      %v3492 = vpop.permute.xlu0 %3491
      %3493 = vrot.lane.b32.xlu0 %v3005, 24
      %v3494 = vpop.permute.xlu0 %3493
      %3495 = vrot.lane.b32.xlu0 %v3006, 24
      %v3496 = vpop.permute.xlu0 %3495
      %3497 = vrot.lane.b32.xlu0 %v3007, 24
      %v3498 = vpop.permute.xlu0 %3497
      %3499 = vrot.lane.b32.xlu0 %v3008, 24
      %v3500 = vpop.permute.xlu0 %3499
      %3501 = vrot.lane.b32.xlu0 %v3009, 24
      %v3502 = vpop.permute.xlu0 %3501
      %3503 = vrot.lane.b32.xlu0 %v3010, 24
      %v3504 = vpop.permute.xlu0 %3503
      %3505 = vrot.lane.b32.xlu0 %v3011, 24
      %v3506 = vpop.permute.xlu0 %3505
      %3507 = vrot.lane.b32.xlu0 %v3012, 24
      %v3508 = vpop.permute.xlu0 %3507
      %3509 = vrot.lane.b32.xlu0 %v3013, 24
      %v3510 = vpop.permute.xlu0 %3509
      %3511 = vrot.lane.b32.xlu0 %v3014, 24
      %v3512 = vpop.permute.xlu0 %3511
      %3513 = vrot.lane.b32.xlu0 %v3015, 24
      %v3514 = vpop.permute.xlu0 %3513
      %3515 = vrot.lane.b32.xlu0 %v3016, 24
      %v3516 = vpop.permute.xlu0 %3515
      %3517 = vrot.lane.b32.xlu0 %v3017, 24
      %v3518 = vpop.permute.xlu0 %3517
      %3519 = vrot.lane.b32.xlu0 %v3018, 24
      %v3520 = vpop.permute.xlu0 %3519
      %3521 = vrot.lane.b32.xlu0 %v3019, 24
      %v3522 = vpop.permute.xlu0 %3521
      %3523 = vrot.lane.b32.xlu0 %v3020, 24
      %v3524 = vpop.permute.xlu0 %3523
      %3525 = vrot.lane.b32.xlu0 %v3021, 24
      %v3526 = vpop.permute.xlu0 %3525
      %3527 = vrot.lane.b32.xlu0 %v3022, 24
      %v3528 = vpop.permute.xlu0 %3527
      %3529 = vrot.lane.b32.xlu0 %v3023, 24
      %v3530 = vpop.permute.xlu0 %3529
      %3531 = vrot.lane.b32.xlu0 %v3024, 24
      %v3532 = vpop.permute.xlu0 %3531
      %3533 = vrot.lane.b32.xlu0 %v3025, 24
      %v3534 = vpop.permute.xlu0 %3533
      %3535 = vrot.lane.b32.xlu0 %v3026, 24
      %v3536 = vpop.permute.xlu0 %3535
      %3537 = vrot.lane.b32.xlu0 %v3027, 24
      %v3538 = vpop.permute.xlu0 %3537
      %3539 = vrot.lane.b32.xlu0 %v3028, 24
      %v3540 = vpop.permute.xlu0 %3539
      %3541 = vrot.lane.b32.xlu0 %v3029, 24
      %v3542 = vpop.permute.xlu0 %3541
      %3607 = vrot.lane.b32.xlu0 %v3030, 32
      %v3608 = vpop.permute.xlu0 %3607
      %3609 = vrot.lane.b32.xlu0 %v3031, 32
      %v3610 = vpop.permute.xlu0 %3609
      %3611 = vrot.lane.b32.xlu0 %v3032, 32
      %v3612 = vpop.permute.xlu0 %3611
      %3613 = vrot.lane.b32.xlu0 %v3033, 32
      %v3614 = vpop.permute.xlu0 %3613
      %3615 = vrot.lane.b32.xlu0 %v3034, 32
      %v3616 = vpop.permute.xlu0 %3615
      %3617 = vrot.lane.b32.xlu0 %v3035, 32
      %v3618 = vpop.permute.xlu0 %3617
      %3619 = vrot.lane.b32.xlu0 %v3036, 32
      %v3620 = vpop.permute.xlu0 %3619
      %3621 = vrot.lane.b32.xlu0 %v3037, 32
      %v3622 = vpop.permute.xlu0 %3621
      %3623 = vrot.lane.b32.xlu0 %v3038, 32
      %v3624 = vpop.permute.xlu0 %3623
      %3625 = vrot.lane.b32.xlu0 %v3039, 32
      %v3626 = vpop.permute.xlu0 %3625
      %3627 = vrot.lane.b32.xlu0 %v3040, 32
      %v3628 = vpop.permute.xlu0 %3627
      %3629 = vrot.lane.b32.xlu0 %v3041, 32
      %v3630 = vpop.permute.xlu0 %3629
      %3631 = vrot.lane.b32.xlu0 %v3042, 32
      %v3632 = vpop.permute.xlu0 %3631
      %3633 = vrot.lane.b32.xlu0 %v3043, 32
      %v3634 = vpop.permute.xlu0 %3633
      %3635 = vrot.lane.b32.xlu0 %v3044, 32
      %v3636 = vpop.permute.xlu0 %3635
      %3637 = vrot.lane.b32.xlu0 %v3045, 32
      %v3638 = vpop.permute.xlu0 %3637
      %3639 = vrot.lane.b32.xlu0 %v3046, 32
      %v3640 = vpop.permute.xlu0 %3639
      %3641 = vrot.lane.b32.xlu0 %v3047, 32
      %v3642 = vpop.permute.xlu0 %3641
      %3643 = vrot.lane.b32.xlu0 %v3048, 32
      %v3644 = vpop.permute.xlu0 %3643
      %3645 = vrot.lane.b32.xlu0 %v3049, 32
      %v3646 = vpop.permute.xlu0 %3645
      %3647 = vrot.lane.b32.xlu0 %v3050, 32
      %v3648 = vpop.permute.xlu0 %3647
      %3649 = vrot.lane.b32.xlu0 %v3051, 32
      %v3650 = vpop.permute.xlu0 %3649
      %3651 = vrot.lane.b32.xlu0 %v3052, 32
      %v3652 = vpop.permute.xlu0 %3651
      %3653 = vrot.lane.b32.xlu0 %v3053, 32
      %v3654 = vpop.permute.xlu0 %3653
      %3655 = vrot.lane.b32.xlu0 %v3054, 32
      %v3656 = vpop.permute.xlu0 %3655
      %3657 = vrot.lane.b32.xlu0 %v3055, 32
      %v3658 = vpop.permute.xlu0 %3657
      %3659 = vrot.lane.b32.xlu0 %v3056, 32
      %v3660 = vpop.permute.xlu0 %3659
      %3661 = vrot.lane.b32.xlu0 %v3057, 32
      %v3662 = vpop.permute.xlu0 %3661
      %3663 = vrot.lane.b32.xlu0 %v3058, 32
      %v3664 = vpop.permute.xlu0 %3663
      %3665 = vrot.lane.b32.xlu0 %v3059, 32
      %v3666 = vpop.permute.xlu0 %3665
      %3667 = vrot.lane.b32.xlu0 %v3060, 32
      %v3668 = vpop.permute.xlu0 %3667
      %3669 = vrot.lane.b32.xlu0 %v3061, 32
      %v3670 = vpop.permute.xlu0 %3669
      %3735 = vrot.lane.b32.xlu0 %v3062, 40
      %v3736 = vpop.permute.xlu0 %3735
      %3737 = vrot.lane.b32.xlu0 %v3063, 40
      %v3738 = vpop.permute.xlu0 %3737
      %3739 = vrot.lane.b32.xlu0 %v3064, 40
      %v3740 = vpop.permute.xlu0 %3739
      %3741 = vrot.lane.b32.xlu0 %v3065, 40
      %v3742 = vpop.permute.xlu0 %3741
      %3743 = vrot.lane.b32.xlu0 %v3066, 40
      %v3744 = vpop.permute.xlu0 %3743
      %3745 = vrot.lane.b32.xlu0 %v3067, 40
      %v3746 = vpop.permute.xlu0 %3745
      %3747 = vrot.lane.b32.xlu0 %v3068, 40
      %v3748 = vpop.permute.xlu0 %3747
      %3749 = vrot.lane.b32.xlu0 %v3069, 40
      %v3750 = vpop.permute.xlu0 %3749
      %3751 = vrot.lane.b32.xlu0 %v3070, 40
      %v3752 = vpop.permute.xlu0 %3751
      %3753 = vrot.lane.b32.xlu0 %v3071, 40
      %v3754 = vpop.permute.xlu0 %3753
      %3755 = vrot.lane.b32.xlu0 %v3072, 40
      %v3756 = vpop.permute.xlu0 %3755
      %3757 = vrot.lane.b32.xlu0 %v3073, 40
      %v3758 = vpop.permute.xlu0 %3757
      %3759 = vrot.lane.b32.xlu0 %v3074, 40
      %v3760 = vpop.permute.xlu0 %3759
      %3761 = vrot.lane.b32.xlu0 %v3075, 40
      %v3762 = vpop.permute.xlu0 %3761
      %3763 = vrot.lane.b32.xlu0 %v3076, 40
      %v3764 = vpop.permute.xlu0 %3763
      %3765 = vrot.lane.b32.xlu0 %v3077, 40
      %v3766 = vpop.permute.xlu0 %3765
      %3767 = vrot.lane.b32.xlu0 %v3078, 40
      %v3768 = vpop.permute.xlu0 %3767
      %3769 = vrot.lane.b32.xlu0 %v3079, 40
      %v3770 = vpop.permute.xlu0 %3769
      %3771 = vrot.lane.b32.xlu0 %v3080, 40
      %v3772 = vpop.permute.xlu0 %3771
      %3773 = vrot.lane.b32.xlu0 %v3081, 40
      %v3774 = vpop.permute.xlu0 %3773
      %3775 = vrot.lane.b32.xlu0 %v3082, 40
      %v3776 = vpop.permute.xlu0 %3775
      %3777 = vrot.lane.b32.xlu0 %v3083, 40
      %v3778 = vpop.permute.xlu0 %3777
      %3779 = vrot.lane.b32.xlu0 %v3084, 40
      %v3780 = vpop.permute.xlu0 %3779
      %3781 = vrot.lane.b32.xlu0 %v3085, 40
      %v3782 = vpop.permute.xlu0 %3781
      %3783 = vrot.lane.b32.xlu0 %v3086, 40
      %v3784 = vpop.permute.xlu0 %3783
      %3785 = vrot.lane.b32.xlu0 %v3087, 40
      %v3786 = vpop.permute.xlu0 %3785
      %3787 = vrot.lane.b32.xlu0 %v3088, 40
      %v3788 = vpop.permute.xlu0 %3787
      %3789 = vrot.lane.b32.xlu0 %v3089, 40
      %v3790 = vpop.permute.xlu0 %3789
      %3791 = vrot.lane.b32.xlu0 %v3090, 40
      %v3792 = vpop.permute.xlu0 %3791
      %3793 = vrot.lane.b32.xlu0 %v3091, 40
      %v3794 = vpop.permute.xlu0 %3793
      %3795 = vrot.lane.b32.xlu0 %v3092, 40
      %v3796 = vpop.permute.xlu0 %3795
      %3797 = vrot.lane.b32.xlu0 %v3093, 40
      %v3798 = vpop.permute.xlu0 %3797
      %3863 = vrot.lane.b32.xlu0 %v3095, 48
      %v3864 = vpop.permute.xlu0 %3863
      %3865 = vrot.lane.b32.xlu0 %v3096, 48
      %v3866 = vpop.permute.xlu0 %3865
      %3867 = vrot.lane.b32.xlu0 %v3097, 48
      %v3868 = vpop.permute.xlu0 %3867
      %3869 = vrot.lane.b32.xlu0 %v3098, 48
      %v3870 = vpop.permute.xlu0 %3869
      %3871 = vrot.lane.b32.xlu0 %v3099, 48
      %v3872 = vpop.permute.xlu0 %3871
      %3873 = vrot.lane.b32.xlu0 %v3100, 48
      %v3874 = vpop.permute.xlu0 %3873
      %3875 = vrot.lane.b32.xlu0 %v3101, 48
      %v3876 = vpop.permute.xlu0 %3875
      %3877 = vrot.lane.b32.xlu0 %v3102, 48
      %v3878 = vpop.permute.xlu0 %3877
      %3879 = vrot.lane.b32.xlu0 %v3103, 48
      %v3880 = vpop.permute.xlu0 %3879
      %3881 = vrot.lane.b32.xlu0 %v3104, 48
      %v3882 = vpop.permute.xlu0 %3881
      %3883 = vrot.lane.b32.xlu0 %v3105, 48
      %v3884 = vpop.permute.xlu0 %3883
      %3885 = vrot.lane.b32.xlu0 %v3106, 48
      %v3886 = vpop.permute.xlu0 %3885
      %3887 = vrot.lane.b32.xlu0 %v3107, 48
      %v3888 = vpop.permute.xlu0 %3887
      %3889 = vrot.lane.b32.xlu0 %v3108, 48
      %v3890 = vpop.permute.xlu0 %3889
      %3891 = vrot.lane.b32.xlu0 %v3109, 48
      %v3892 = vpop.permute.xlu0 %3891
      %3893 = vrot.lane.b32.xlu0 %v3110, 48
      %v3894 = vpop.permute.xlu0 %3893
      %3895 = vrot.lane.b32.xlu0 %v3111, 48
      %v3896 = vpop.permute.xlu0 %3895
      %3897 = vrot.lane.b32.xlu0 %v3112, 48
      %v3898 = vpop.permute.xlu0 %3897
      %3899 = vrot.lane.b32.xlu0 %v3113, 48
      %v3900 = vpop.permute.xlu0 %3899
      %3901 = vrot.lane.b32.xlu0 %v3114, 48
      %v3902 = vpop.permute.xlu0 %3901
      %3903 = vrot.lane.b32.xlu0 %v3115, 48
      %v3904 = vpop.permute.xlu0 %3903
      %3905 = vrot.lane.b32.xlu0 %v3116, 48
      %v3906 = vpop.permute.xlu0 %3905
      %3907 = vrot.lane.b32.xlu0 %v3117, 48
      %v3908 = vpop.permute.xlu0 %3907
      %3909 = vrot.lane.b32.xlu0 %v3118, 48
      %v3910 = vpop.permute.xlu0 %3909
      %3911 = vrot.lane.b32.xlu0 %v3119, 48
      %v3912 = vpop.permute.xlu0 %3911
      %3913 = vrot.lane.b32.xlu0 %v3120, 48
      %v3914 = vpop.permute.xlu0 %3913
      %3915 = vrot.lane.b32.xlu0 %v3121, 48
      %v3916 = vpop.permute.xlu0 %3915
      %3917 = vrot.lane.b32.xlu0 %v3122, 48
      %v3918 = vpop.permute.xlu0 %3917
      %3919 = vrot.lane.b32.xlu0 %v3123, 48
      %v3920 = vpop.permute.xlu0 %3919
      %3921 = vrot.lane.b32.xlu0 %v3124, 48
      %v3922 = vpop.permute.xlu0 %3921
      %3923 = vrot.lane.b32.xlu0 %v3125, 48
      %v3924 = vpop.permute.xlu0 %3923
      %3925 = vrot.lane.b32.xlu0 %v3126, 48
      %v3926 = vpop.permute.xlu0 %3925
      %3991 = vrot.lane.b32.xlu0 %v3127, 56
      %v3992 = vpop.permute.xlu0 %3991
      %3993 = vrot.lane.b32.xlu0 %v3128, 56
      %v3994 = vpop.permute.xlu0 %3993
      %3995 = vrot.lane.b32.xlu0 %v3129, 56
      %v3996 = vpop.permute.xlu0 %3995
      %3997 = vrot.lane.b32.xlu0 %v3130, 56
      %v3998 = vpop.permute.xlu0 %3997
      %3999 = vrot.lane.b32.xlu0 %v3131, 56
      %v4000 = vpop.permute.xlu0 %3999
      %4001 = vrot.lane.b32.xlu0 %v3132, 56
      %v4002 = vpop.permute.xlu0 %4001
      %4003 = vrot.lane.b32.xlu0 %v3133, 56
      %v4004 = vpop.permute.xlu0 %4003
      %4005 = vrot.lane.b32.xlu0 %v3134, 56
      %v4006 = vpop.permute.xlu0 %4005
      %4007 = vrot.lane.b32.xlu0 %v3135, 56
      %v4008 = vpop.permute.xlu0 %4007
      %4009 = vrot.lane.b32.xlu0 %v3136, 56
      %v4010 = vpop.permute.xlu0 %4009
      %4011 = vrot.lane.b32.xlu0 %v3137, 56
      %v4012 = vpop.permute.xlu0 %4011
      %4013 = vrot.lane.b32.xlu0 %v3138, 56
      %v4014 = vpop.permute.xlu0 %4013
      %4015 = vrot.lane.b32.xlu0 %v3139, 56
      %v4016 = vpop.permute.xlu0 %4015
      %4017 = vrot.lane.b32.xlu0 %v3140, 56
      %v4018 = vpop.permute.xlu0 %4017
      %4019 = vrot.lane.b32.xlu0 %v3141, 56
      %v4020 = vpop.permute.xlu0 %4019
      %4021 = vrot.lane.b32.xlu0 %v3142, 56
      %v4022 = vpop.permute.xlu0 %4021
      %4023 = vrot.lane.b32.xlu0 %v3143, 56
      %v4024 = vpop.permute.xlu0 %4023
      %4025 = vrot.lane.b32.xlu0 %v3144, 56
      %v4026 = vpop.permute.xlu0 %4025
      %4027 = vrot.lane.b32.xlu0 %v3145, 56
      %v4028 = vpop.permute.xlu0 %4027
      %4029 = vrot.lane.b32.xlu0 %v3146, 56
      %v4030 = vpop.permute.xlu0 %4029
      %4031 = vrot.lane.b32.xlu0 %v3147, 56
      %v4032 = vpop.permute.xlu0 %4031
      %4033 = vrot.lane.b32.xlu0 %v3148, 56
      %v4034 = vpop.permute.xlu0 %4033
      %4035 = vrot.lane.b32.xlu0 %v3149, 56
      %v4036 = vpop.permute.xlu0 %4035
      %4037 = vrot.lane.b32.xlu0 %v3150, 56
      %v4038 = vpop.permute.xlu0 %4037
      %4039 = vrot.lane.b32.xlu0 %v3151, 56
      %v4040 = vpop.permute.xlu0 %4039
      %4041 = vrot.lane.b32.xlu0 %v3152, 56
      %v4042 = vpop.permute.xlu0 %4041
      %4043 = vrot.lane.b32.xlu0 %v3153, 56
      %v4044 = vpop.permute.xlu0 %4043
      %4045 = vrot.lane.b32.xlu0 %v3154, 56
      %v4046 = vpop.permute.xlu0 %4045
      %4047 = vrot.lane.b32.xlu0 %v3155, 56
      %v4048 = vpop.permute.xlu0 %4047
      %4049 = vrot.lane.b32.xlu0 %v3156, 56
      %v4050 = vpop.permute.xlu0 %4049
      %4051 = vrot.lane.b32.xlu0 %v3157, 56
      %v4052 = vpop.permute.xlu0 %4051
      %4053 = vrot.lane.b32.xlu0 %v3158, 56
      %v4054 = vpop.permute.xlu0 %4053
      %4119 = vrot.lane.b32.xlu0 %v3159, 64
      %v4120 = vpop.permute.xlu0 %4119
      %4121 = vrot.lane.b32.xlu0 %v3160, 64
      %v4122 = vpop.permute.xlu0 %4121
      %4123 = vrot.lane.b32.xlu0 %v3161, 64
      %v4124 = vpop.permute.xlu0 %4123
      %4125 = vrot.lane.b32.xlu0 %v3162, 64
      %v4126 = vpop.permute.xlu0 %4125
      %4127 = vrot.lane.b32.xlu0 %v3163, 64
      %v4128 = vpop.permute.xlu0 %4127
      %4129 = vrot.lane.b32.xlu0 %v3164, 64
      %v4130 = vpop.permute.xlu0 %4129
      %4131 = vrot.lane.b32.xlu0 %v3165, 64
      %v4132 = vpop.permute.xlu0 %4131
      %4133 = vrot.lane.b32.xlu0 %v3166, 64
      %v4134 = vpop.permute.xlu0 %4133
      %4135 = vrot.lane.b32.xlu0 %v3167, 64
      %v4136 = vpop.permute.xlu0 %4135
      %4137 = vrot.lane.b32.xlu0 %v3168, 64
      %v4138 = vpop.permute.xlu0 %4137
      %4139 = vrot.lane.b32.xlu0 %v3169, 64
      %v4140 = vpop.permute.xlu0 %4139
      %4141 = vrot.lane.b32.xlu0 %v3170, 64
      %v4142 = vpop.permute.xlu0 %4141
      %4143 = vrot.lane.b32.xlu0 %v3171, 64
      %v4144 = vpop.permute.xlu0 %4143
      %4145 = vrot.lane.b32.xlu0 %v3172, 64
      %v4146 = vpop.permute.xlu0 %4145
      %4147 = vrot.lane.b32.xlu0 %v3173, 64
      %v4148 = vpop.permute.xlu0 %4147
      %4149 = vrot.lane.b32.xlu0 %v3174, 64
      %v4150 = vpop.permute.xlu0 %4149
      %4151 = vrot.lane.b32.xlu0 %v3175, 64
      %v4152 = vpop.permute.xlu0 %4151
      %4153 = vrot.lane.b32.xlu0 %v3176, 64
      %v4154 = vpop.permute.xlu0 %4153
      %4155 = vrot.lane.b32.xlu0 %v3177, 64
      %v4156 = vpop.permute.xlu0 %4155
      %4157 = vrot.lane.b32.xlu0 %v3178, 64
      %v4158 = vpop.permute.xlu0 %4157
      %4159 = vrot.lane.b32.xlu0 %v3179, 64
      %v4160 = vpop.permute.xlu0 %4159
      %4161 = vrot.lane.b32.xlu0 %v3180, 64
      %v4162 = vpop.permute.xlu0 %4161
      %4163 = vrot.lane.b32.xlu0 %v3181, 64
      %v4164 = vpop.permute.xlu0 %4163
      %4165 = vrot.lane.b32.xlu0 %v3182, 64
      %v4166 = vpop.permute.xlu0 %4165
      %4167 = vrot.lane.b32.xlu0 %v3183, 64
      %v4168 = vpop.permute.xlu0 %4167
      %4169 = vrot.lane.b32.xlu0 %v3184, 64
      %v4170 = vpop.permute.xlu0 %4169
      %4171 = vrot.lane.b32.xlu0 %v3185, 64
      %v4172 = vpop.permute.xlu0 %4171
      %4173 = vrot.lane.b32.xlu0 %v3186, 64
      %v4174 = vpop.permute.xlu0 %4173
      %4175 = vrot.lane.b32.xlu0 %v3187, 64
      %v4176 = vpop.permute.xlu0 %4175
      %4177 = vrot.lane.b32.xlu0 %v3188, 64
      %v4178 = vpop.permute.xlu0 %4177
      %4179 = vrot.lane.b32.xlu0 %v3189, 64
      %v4180 = vpop.permute.xlu0 %4179
      %4181 = vrot.lane.b32.xlu0 %v3190, 64
      %v4182 = vpop.permute.xlu0 %4181
      %v4215 = vsel %vm2214, %v2902, %v3224
      %v4216 = vsel %vm2214, %v2903, %v3226
      %v4217 = vsel %vm2214, %v2904, %v3228
      %v4218 = vsel %vm2214, %v2905, %v3230
      %v4219 = vsel %vm2214, %v2906, %v3232
      %v4220 = vsel %vm2214, %v2907, %v3234
      %v4221 = vsel %vm2214, %v2908, %v3236
      %v4222 = vsel %vm2214, %v2909, %v3238
      %v4223 = vsel %vm2214, %v2910, %v3240
      %v4224 = vsel %vm2214, %v2911, %v3242
      %v4225 = vsel %vm2214, %v2912, %v3244
      %v4226 = vsel %vm2214, %v2913, %v3246
      %v4227 = vsel %vm2214, %v2914, %v3248
      %v4228 = vsel %vm2214, %v2915, %v3250
      %v4229 = vsel %vm2214, %v2916, %v3252
      %v4230 = vsel %vm2214, %v2917, %v3254
      %v4231 = vsel %vm2214, %v2918, %v3256
      %v4232 = vsel %vm2214, %v2919, %v3258
      %v4233 = vsel %vm2214, %v2920, %v3260
      %v4234 = vsel %vm2214, %v2921, %v3262
      %v4235 = vsel %vm2214, %v2922, %v3264
      %v4236 = vsel %vm2214, %v2923, %v3266
      %v4237 = vsel %vm2214, %v2924, %v3268
      %v4238 = vsel %vm2214, %v2925, %v3270
      %v4239 = vsel %vm2214, %v2926, %v3272
      %v4240 = vsel %vm2214, %v2927, %v3274
      %v4241 = vsel %vm2214, %v2928, %v3276
      %v4242 = vsel %vm2214, %v2929, %v3278
      %v4243 = vsel %vm2214, %v2930, %v3280
      %v4244 = vsel %vm2214, %v2931, %v3282
      %v4245 = vsel %vm2214, %v2932, %v3284
      %v4246 = vsel %vm2214, %v2933, %v3286
      %v4247 = vsel %vm2280, %v4215, %v3352
      %v4248 = vsel %vm2280, %v4216, %v3354
      %v4249 = vsel %vm2280, %v4217, %v3356
      %v4250 = vsel %vm2280, %v4218, %v3358
      %v4251 = vsel %vm2280, %v4219, %v3360
      %v4252 = vsel %vm2280, %v4220, %v3362
      %v4253 = vsel %vm2280, %v4221, %v3364
      %v4254 = vsel %vm2280, %v4222, %v3366
      %v4255 = vsel %vm2280, %v4223, %v3368
      %v4256 = vsel %vm2280, %v4224, %v3370
      %v4257 = vsel %vm2280, %v4225, %v3372
      %v4258 = vsel %vm2280, %v4226, %v3374
      %v4259 = vsel %vm2280, %v4227, %v3376
      %v4260 = vsel %vm2280, %v4228, %v3378
      %v4261 = vsel %vm2280, %v4229, %v3380
      %v4262 = vsel %vm2280, %v4230, %v3382
      %v4263 = vsel %vm2280, %v4231, %v3384
      %v4264 = vsel %vm2280, %v4232, %v3386
      %v4265 = vsel %vm2280, %v4233, %v3388
      %v4266 = vsel %vm2280, %v4234, %v3390
      %v4267 = vsel %vm2280, %v4235, %v3392
      %v4268 = vsel %vm2280, %v4236, %v3394
      %v4269 = vsel %vm2280, %v4237, %v3396
      %v4270 = vsel %vm2280, %v4238, %v3398
      %v4271 = vsel %vm2280, %v4239, %v3400
      %v4272 = vsel %vm2280, %v4240, %v3402
      %v4273 = vsel %vm2280, %v4241, %v3404
      %v4274 = vsel %vm2280, %v4242, %v3406
      %v4275 = vsel %vm2280, %v4243, %v3408
      %v4276 = vsel %vm2280, %v4244, %v3410
      %v4277 = vsel %vm2280, %v4245, %v3412
      %v4278 = vsel %vm2280, %v4246, %v3414
      %v4279 = vsel %vm2346, %v4247, %v3480
      %v4280 = vsel %vm2346, %v4248, %v3482
      %v4281 = vsel %vm2346, %v4249, %v3484
      %v4282 = vsel %vm2346, %v4250, %v3486
      %v4283 = vsel %vm2346, %v4251, %v3488
      %v4284 = vsel %vm2346, %v4252, %v3490
      %v4285 = vsel %vm2346, %v4253, %v3492
      %v4286 = vsel %vm2346, %v4254, %v3494
      %v4287 = vsel %vm2346, %v4255, %v3496
      %v4288 = vsel %vm2346, %v4256, %v3498
      %v4289 = vsel %vm2346, %v4257, %v3500
      %v4290 = vsel %vm2346, %v4258, %v3502
      %v4291 = vsel %vm2346, %v4259, %v3504
      %v4292 = vsel %vm2346, %v4260, %v3506
      %v4293 = vsel %vm2346, %v4261, %v3508
      %v4294 = vsel %vm2346, %v4262, %v3510
      %v4295 = vsel %vm2346, %v4263, %v3512
      %v4296 = vsel %vm2346, %v4264, %v3514
      %v4297 = vsel %vm2346, %v4265, %v3516
      %v4298 = vsel %vm2346, %v4266, %v3518
      %v4299 = vsel %vm2346, %v4267, %v3520
      %v4300 = vsel %vm2346, %v4268, %v3522
      %v4301 = vsel %vm2346, %v4269, %v3524
      %v4302 = vsel %vm2346, %v4270, %v3526
      %v4303 = vsel %vm2346, %v4271, %v3528
      %v4304 = vsel %vm2346, %v4272, %v3530
      %v4305 = vsel %vm2346, %v4273, %v3532
      %v4306 = vsel %vm2346, %v4274, %v3534
      %v4307 = vsel %vm2346, %v4275, %v3536
      %v4308 = vsel %vm2346, %v4276, %v3538
      %v4309 = vsel %vm2346, %v4277, %v3540
      %v4310 = vsel %vm2346, %v4278, %v3542
      %v4311 = vsel %vm2412, %v4279, %v3608
      %v4312 = vsel %vm2412, %v4280, %v3610
      %v4313 = vsel %vm2412, %v4281, %v3612
      %v4314 = vsel %vm2412, %v4282, %v3614
      %v4315 = vsel %vm2412, %v4283, %v3616
      %v4316 = vsel %vm2412, %v4284, %v3618
      %v4317 = vsel %vm2412, %v4285, %v3620
      %v4318 = vsel %vm2412, %v4286, %v3622
      %v4319 = vsel %vm2412, %v4287, %v3624
      %v4320 = vsel %vm2412, %v4288, %v3626
      %v4321 = vsel %vm2412, %v4289, %v3628
      %v4322 = vsel %vm2412, %v4290, %v3630
      %v4323 = vsel %vm2412, %v4291, %v3632
      %v4324 = vsel %vm2412, %v4292, %v3634
      %v4325 = vsel %vm2412, %v4293, %v3636
      %v4326 = vsel %vm2412, %v4294, %v3638
      %v4327 = vsel %vm2412, %v4295, %v3640
      %v4328 = vsel %vm2412, %v4296, %v3642
      %v4329 = vsel %vm2412, %v4297, %v3644
      %v4330 = vsel %vm2412, %v4298, %v3646
      %v4331 = vsel %vm2412, %v4299, %v3648
      %v4332 = vsel %vm2412, %v4300, %v3650
      %v4333 = vsel %vm2412, %v4301, %v3652
      %v4334 = vsel %vm2412, %v4302, %v3654
      %v4335 = vsel %vm2412, %v4303, %v3656
      %v4336 = vsel %vm2412, %v4304, %v3658
      %v4337 = vsel %vm2412, %v4305, %v3660
      %v4338 = vsel %vm2412, %v4306, %v3662
      %v4339 = vsel %vm2412, %v4307, %v3664
      %v4340 = vsel %vm2412, %v4308, %v3666
      %v4341 = vsel %vm2412, %v4309, %v3668
      %v4342 = vsel %vm2412, %v4310, %v3670
      %vm4343 = vcmask 326656
      %v4344 = vsel %vm4343, %v4311, %v3736
      %v4345 = vsel %vm4343, %v4312, %v3738
      %v4346 = vsel %vm4343, %v4313, %v3740
      %v4347 = vsel %vm4343, %v4314, %v3742
      %v4348 = vsel %vm4343, %v4315, %v3744
      %v4349 = vsel %vm4343, %v4316, %v3746
      %v4350 = vsel %vm4343, %v4317, %v3748
      %v4351 = vsel %vm4343, %v4318, %v3750
      %v4352 = vsel %vm4343, %v4319, %v3752
      %v4353 = vsel %vm4343, %v4320, %v3754
      %v4354 = vsel %vm4343, %v4321, %v3756
      %v4355 = vsel %vm4343, %v4322, %v3758
      %v4356 = vsel %vm4343, %v4323, %v3760
      %v4357 = vsel %vm4343, %v4324, %v3762
      %v4358 = vsel %vm4343, %v4325, %v3764
      %v4359 = vsel %vm4343, %v4326, %v3766
      %v4360 = vsel %vm4343, %v4327, %v3768
      %v4361 = vsel %vm4343, %v4328, %v3770
      %v4362 = vsel %vm4343, %v4329, %v3772
      %v4363 = vsel %vm4343, %v4330, %v3774
      %v4364 = vsel %vm4343, %v4331, %v3776
      %v4365 = vsel %vm4343, %v4332, %v3778
      %v4366 = vsel %vm4343, %v4333, %v3780
      %v4367 = vsel %vm4343, %v4334, %v3782
      %v4368 = vsel %vm4343, %v4335, %v3784
      %v4369 = vsel %vm4343, %v4336, %v3786
      %v4370 = vsel %vm4343, %v4337, %v3788
      %v4371 = vsel %vm4343, %v4338, %v3790
      %v4372 = vsel %vm4343, %v4339, %v3792
      %v4373 = vsel %vm4343, %v4340, %v3794
      %v4374 = vsel %vm4343, %v4341, %v3796
      %v4375 = vsel %vm4343, %v4342, %v3798
      %vm4376 = vcmask 392192
      %v4377 = vsel %vm4376, %v4344, %v3864
      %v4378 = vsel %vm4376, %v4345, %v3866
      %v4379 = vsel %vm4376, %v4346, %v3868
      %v4380 = vsel %vm4376, %v4347, %v3870
      %v4381 = vsel %vm4376, %v4348, %v3872
      %v4382 = vsel %vm4376, %v4349, %v3874
      %v4383 = vsel %vm4376, %v4350, %v3876
      %v4384 = vsel %vm4376, %v4351, %v3878
      %v4385 = vsel %vm4376, %v4352, %v3880
      %v4386 = vsel %vm4376, %v4353, %v3882
      %v4387 = vsel %vm4376, %v4354, %v3884
      %v4388 = vsel %vm4376, %v4355, %v3886
      %v4389 = vsel %vm4376, %v4356, %v3888
      %v4390 = vsel %vm4376, %v4357, %v3890
      %v4391 = vsel %vm4376, %v4358, %v3892
      %v4392 = vsel %vm4376, %v4359, %v3894
      %v4393 = vsel %vm4376, %v4360, %v3896
      %v4394 = vsel %vm4376, %v4361, %v3898
      %v4395 = vsel %vm4376, %v4362, %v3900
      %v4396 = vsel %vm4376, %v4363, %v3902
      %v4397 = vsel %vm4376, %v4364, %v3904
      %v4398 = vsel %vm4376, %v4365, %v3906
      %v4399 = vsel %vm4376, %v4366, %v3908
      %v4400 = vsel %vm4376, %v4367, %v3910
      %v4401 = vsel %vm4376, %v4368, %v3912
      %v4402 = vsel %vm4376, %v4369, %v3914
      %v4403 = vsel %vm4376, %v4370, %v3916
      %v4404 = vsel %vm4376, %v4371, %v3918
      %v4405 = vsel %vm4376, %v4372, %v3920
      %v4406 = vsel %vm4376, %v4373, %v3922
      %v4407 = vsel %vm4376, %v4374, %v3924
      %v4408 = vsel %vm4376, %v4375, %v3926
      %vm4409 = vcmask 457728
      %v4410 = vsel %vm4409, %v4377, %v3992
      %v4411 = vsel %vm4409, %v4378, %v3994
      %v4412 = vsel %vm4409, %v4379, %v3996
      %v4413 = vsel %vm4409, %v4380, %v3998
      %v4414 = vsel %vm4409, %v4381, %v4000
      %v4415 = vsel %vm4409, %v4382, %v4002
      %v4416 = vsel %vm4409, %v4383, %v4004
      %v4417 = vsel %vm4409, %v4384, %v4006
      %v4418 = vsel %vm4409, %v4385, %v4008
      %v4419 = vsel %vm4409, %v4386, %v4010
      %v4420 = vsel %vm4409, %v4387, %v4012
      %v4421 = vsel %vm4409, %v4388, %v4014
      %v4422 = vsel %vm4409, %v4389, %v4016
      %v4423 = vsel %vm4409, %v4390, %v4018
      %v4424 = vsel %vm4409, %v4391, %v4020
      %v4425 = vsel %vm4409, %v4392, %v4022
      %v4426 = vsel %vm4409, %v4393, %v4024
      %v4427 = vsel %vm4409, %v4394, %v4026
      %v4428 = vsel %vm4409, %v4395, %v4028
      %v4429 = vsel %vm4409, %v4396, %v4030
      %v4430 = vsel %vm4409, %v4397, %v4032
      %v4431 = vsel %vm4409, %v4398, %v4034
      %v4432 = vsel %vm4409, %v4399, %v4036
      %v4433 = vsel %vm4409, %v4400, %v4038
      %v4434 = vsel %vm4409, %v4401, %v4040
      %v4435 = vsel %vm4409, %v4402, %v4042
      %v4436 = vsel %vm4409, %v4403, %v4044
      %v4437 = vsel %vm4409, %v4404, %v4046
      %v4438 = vsel %vm4409, %v4405, %v4048
      %v4439 = vsel %vm4409, %v4406, %v4050
      %v4440 = vsel %vm4409, %v4407, %v4052
      %v4441 = vsel %vm4409, %v4408, %v4054
      %vm4442 = vcmask 523264
      %v4443 = vsel %vm4442, %v4410, %v4120
      %v4444 = vsel %vm4442, %v4411, %v4122
      %v4445 = vsel %vm4442, %v4412, %v4124
      %v4446 = vsel %vm4442, %v4413, %v4126
      %v4447 = vsel %vm4442, %v4414, %v4128
      %v4448 = vsel %vm4442, %v4415, %v4130
      %v4449 = vsel %vm4442, %v4416, %v4132
      %v4450 = vsel %vm4442, %v4417, %v4134
      %v4451 = vsel %vm4442, %v4418, %v4136
      %v4452 = vsel %vm4442, %v4419, %v4138
      %v4453 = vsel %vm4442, %v4420, %v4140
      %v4454 = vsel %vm4442, %v4421, %v4142
      %v4455 = vsel %vm4442, %v4422, %v4144
      %v4456 = vsel %vm4442, %v4423, %v4146
      %v4457 = vsel %vm4442, %v4424, %v4148
      %v4458 = vsel %vm4442, %v4425, %v4150
      %v4459 = vsel %vm4442, %v4426, %v4152
      %v4460 = vsel %vm4442, %v4427, %v4154
      %v4461 = vsel %vm4442, %v4428, %v4156
      %v4462 = vsel %vm4442, %v4429, %v4158
      %v4463 = vsel %vm4442, %v4430, %v4160
      %v4464 = vsel %vm4442, %v4431, %v4162
      %v4465 = vsel %vm4442, %v4432, %v4164
      %v4466 = vsel %vm4442, %v4433, %v4166
      %v4467 = vsel %vm4442, %v4434, %v4168
      %v4468 = vsel %vm4442, %v4435, %v4170
      %v4469 = vsel %vm4442, %v4436, %v4172
      %v4470 = vsel %vm4442, %v4437, %v4174
      %v4471 = vsel %vm4442, %v4438, %v4176
      %v4472 = vsel %vm4442, %v4439, %v4178
      %v4473 = vsel %vm4442, %v4440, %v4180
      %v4474 = vsel %vm4442, %v4441, %v4182
      %v4475 = vld [vmem:[%s5] sm:$0xff]
      %v4476 = vld [vmem:[%s5 + $0x8] sm:$0xff]
      %v4477 = vld [vmem:[%s5 + $0x10] sm:$0xff]
      %v4478 = vld [vmem:[%s5 + $0x18] sm:$0xff]
      %v4479 = vld [vmem:[%s5 + $0x20] sm:$0xff]
      %v4480 = vld [vmem:[%s5 + $0x28] sm:$0xff]
      %v4481 = vld [vmem:[%s5 + $0x30] sm:$0xff]
      %v4482 = vld [vmem:[%s5 + $0x38] sm:$0xff]
      %v4483 = vld [vmem:[%s5 + $0x40] sm:$0xff]
      %v4484 = vld [vmem:[%s6] sm:$0x1]
      %v4486 = vlaneseq
      %v4487 = vshrl.u32 %v4486, 7
      %v4488 = vsub.s32 0, %v4487
      %v4489 = vrot.slane %v4484, %v4488
      %vm4491 = vcmask 588800
      %v4493 = vsel %vm4491, %v4443, 0
      %v4496 = vsel %vm4491, %v4444, 0
      %v4499 = vsel %vm4491, %v4445, 0
      %v4502 = vsel %vm4491, %v4446, 0
      %v4505 = vsel %vm4491, %v4447, 0
      %v4508 = vsel %vm4491, %v4448, 0
      %v4511 = vsel %vm4491, %v4449, 0
      %v4514 = vsel %vm4491, %v4450, 0
      %v4517 = vsel %vm4491, %v4451, 0
      %v4520 = vsel %vm4491, %v4452, 0
      %v4523 = vsel %vm4491, %v4453, 0
      %v4526 = vsel %vm4491, %v4454, 0
      %v4529 = vsel %vm4491, %v4455, 0
      %v4532 = vsel %vm4491, %v4456, 0
      %v4535 = vsel %vm4491, %v4457, 0
      %v4538 = vsel %vm4491, %v4458, 0
      %v4541 = vsel %vm4491, %v4459, 0
      %v4544 = vsel %vm4491, %v4460, 0
      %v4547 = vsel %vm4491, %v4461, 0
      %v4550 = vsel %vm4491, %v4462, 0
      %v4553 = vsel %vm4491, %v4463, 0
      %v4556 = vsel %vm4491, %v4464, 0
      %v4559 = vsel %vm4491, %v4465, 0
      %v4562 = vsel %vm4491, %v4466, 0
      %v4565 = vsel %vm4491, %v4467, 0
      %v4568 = vsel %vm4491, %v4468, 0
      %v4571 = vsel %vm4491, %v4469, 0
      %v4574 = vsel %vm4491, %v4470, 0
      %v4577 = vsel %vm4491, %v4471, 0
      %v4580 = vsel %vm4491, %v4472, 0
      %v4583 = vsel %vm4491, %v4473, 0
      %v4586 = vsel %vm4491, %v4474, 0
      %4588 = vmatprep.subr.mxu0 0.0
      %4589 = vmatpush1.msra.mxu0 0.0
      %4590 = vmatprep.subr.mxu0 0.0
      %4591 = vmatpush1.msra.mxu0 0.0
      %4592 = vmatprep.subr.mxu0 0.0
      %4593 = vmatpush1.msra.mxu0 0.0
      %4594 = vmatprep.subr.mxu0 0.0
      %4595 = vmatpush1.msra.mxu0 0.0
      %4596 = vmatprep.subr.mxu0 0.0
      %4597 = vmatpush1.msra.mxu0 0.0
      %4598 = vmatprep.subr.mxu0 0.0
      %4599 = vmatpush1.msra.mxu0 0.0
      %4600 = vmatprep.subr.mxu0 0.0
      %4601 = vmatpush1.msra.mxu0 0.0
      %4602 = vmatprep.subr.mxu0 0.0
      %4603 = vmatpush1.msra.mxu0 %v4483
      %4604 = vmatprep.subr.mxu0 0.0
      %4605 = vmatpush1.msra.mxu0 %v4482
      %4606 = vmatprep.subr.mxu0 0.0
      %4607 = vmatpush1.msra.mxu0 %v4481
      %4608 = vmatprep.subr.mxu0 0.0
      %4609 = vmatpush1.msra.mxu0 %v4480
      %4610 = vmatprep.subr.mxu0 0.0
      %4611 = vmatpush1.msra.mxu0 %v4479
      %4612 = vmatprep.subr.mxu0 0.0
      %4613 = vmatpush1.msra.mxu0 %v4478
      %4614 = vmatprep.subr.mxu0 0.0
      %4615 = vmatpush1.msra.mxu0 %v4477
      %4616 = vmatprep.subr.mxu0 0.0
      %4617 = vmatpush1.msra.mxu0 %v4476
      %4618 = vmatprep.subr.mxu0 0.0
      %4619 = vmatpush1.msra.mxu0 %v4475
      %4620 = vmatprep.subr.mxu0 0.0
      %4621 = vmatpush2.msra.mxu0 0.0
      %4622 = vmatprep.subr.mxu0 0.0
      %4623 = vmatpush2.msra.mxu0 0.0
      %4624 = vmatprep.subr.mxu0 0.0
      %4625 = vmatpush2.msra.mxu0 0.0
      %4626 = vmatprep.subr.mxu0 0.0
      %4627 = vmatpush2.msra.mxu0 0.0
      %4628 = vmatprep.subr.mxu0 0.0
      %4629 = vmatpush2.msra.mxu0 0.0
      %4630 = vmatprep.subr.mxu0 0.0
      %4631 = vmatpush2.msra.mxu0 0.0
      %4632 = vmatprep.subr.mxu0 0.0
      %4633 = vmatpush2.msra.mxu0 0.0
      %4634 = vmatprep.subr.mxu0 0.0
      %4635 = vmatpush2.msra.mxu0 0.0
      %4636 = vmatprep.subr.mxu0 0.0
      %4637 = vmatpush2.msra.mxu0 0.0
      %4638 = vmatprep.subr.mxu0 0.0
      %4639 = vmatpush2.msra.mxu0 0.0
      %4640 = vmatprep.subr.mxu0 0.0
      %4641 = vmatpush2.msra.mxu0 0.0
      %4642 = vmatprep.subr.mxu0 0.0
      %4643 = vmatpush2.msra.mxu0 0.0
      %4644 = vmatprep.subr.mxu0 0.0
      %4645 = vmatpush2.msra.mxu0 0.0
      %4646 = vmatprep.subr.mxu0 0.0
      %4647 = vmatpush2.msra.mxu0 0.0
      %4648 = vmatprep.subr.mxu0 0.0
      %4649 = vmatpush2.msra.mxu0 0.0
      %4650 = vmatprep.subr.mxu0 0.0
      %4651 = vmatpush2.msra.mxu0 0.0
      %4652 = vmatprep.mubr.f32.mxu0 0.0
      %4653 = vmatmul.mubr.f32.gmra.mxu0 %v4493
      %v4654 = vpop.f32.mrf.mxu0
      %v4655 = vadd.f32 %v4489, %v4654
      %v4656 = vpop.f32.mrf.mxu0
      %4657 = vmatprep.mubr.f32.mxu0 0.0
      %4658 = vmatmul.mubr.f32.gmra.mxu0 %v4496
      %v4659 = vpop.f32.mrf.mxu0
      %v4660 = vadd.f32 %v4489, %v4659
      %v4661 = vpop.f32.mrf.mxu0
      %4662 = vmatprep.mubr.f32.mxu0 0.0
      %4663 = vmatmul.mubr.f32.gmra.mxu0 %v4499
      %v4664 = vpop.f32.mrf.mxu0
      %v4665 = vadd.f32 %v4489, %v4664
      %v4666 = vpop.f32.mrf.mxu0
      %4667 = vmatprep.mubr.f32.mxu0 0.0
      %4668 = vmatmul.mubr.f32.gmra.mxu0 %v4502
      %v4669 = vpop.f32.mrf.mxu0
      %v4670 = vadd.f32 %v4489, %v4669
      %v4671 = vpop.f32.mrf.mxu0
      %4672 = vmatprep.mubr.f32.mxu0 0.0
      %4673 = vmatmul.mubr.f32.gmra.mxu0 %v4505
      %v4674 = vpop.f32.mrf.mxu0
      %v4675 = vadd.f32 %v4489, %v4674
      %v4676 = vpop.f32.mrf.mxu0
      %4677 = vmatprep.mubr.f32.mxu0 0.0
      %4678 = vmatmul.mubr.f32.gmra.mxu0 %v4508
      %v4679 = vpop.f32.mrf.mxu0
      %v4680 = vadd.f32 %v4489, %v4679
      %v4681 = vpop.f32.mrf.mxu0
      %4682 = vmatprep.mubr.f32.mxu0 0.0
      %4683 = vmatmul.mubr.f32.gmra.mxu0 %v4511
      %v4684 = vpop.f32.mrf.mxu0
      %v4685 = vadd.f32 %v4489, %v4684
      %v4686 = vpop.f32.mrf.mxu0
      %4687 = vmatprep.mubr.f32.mxu0 0.0
      %4688 = vmatmul.mubr.f32.gmra.mxu0 %v4514
      %v4689 = vpop.f32.mrf.mxu0
      %v4690 = vadd.f32 %v4489, %v4689
      %v4691 = vpop.f32.mrf.mxu0
      %4692 = vmatprep.mubr.f32.mxu0 0.0
      %4693 = vmatmul.mubr.f32.gmra.mxu0 %v4517
      %v4694 = vpop.f32.mrf.mxu0
      %v4695 = vadd.f32 %v4489, %v4694
      %v4696 = vpop.f32.mrf.mxu0
      %4697 = vmatprep.mubr.f32.mxu0 0.0
      %4698 = vmatmul.mubr.f32.gmra.mxu0 %v4520
      %v4699 = vpop.f32.mrf.mxu0
      %v4700 = vadd.f32 %v4489, %v4699
      %v4701 = vpop.f32.mrf.mxu0
      %4702 = vmatprep.mubr.f32.mxu0 0.0
      %4703 = vmatmul.mubr.f32.gmra.mxu0 %v4523
      %v4704 = vpop.f32.mrf.mxu0
      %v4705 = vadd.f32 %v4489, %v4704
      %v4706 = vpop.f32.mrf.mxu0
      %4707 = vmatprep.mubr.f32.mxu0 0.0
      %4708 = vmatmul.mubr.f32.gmra.mxu0 %v4526
      %v4709 = vpop.f32.mrf.mxu0
      %v4710 = vadd.f32 %v4489, %v4709
      %v4711 = vpop.f32.mrf.mxu0
      %4712 = vmatprep.mubr.f32.mxu0 0.0
      %4713 = vmatmul.mubr.f32.gmra.mxu0 %v4529
      %v4714 = vpop.f32.mrf.mxu0
      %v4715 = vadd.f32 %v4489, %v4714
      %v4716 = vpop.f32.mrf.mxu0
      %4717 = vmatprep.mubr.f32.mxu0 0.0
      %4718 = vmatmul.mubr.f32.gmra.mxu0 %v4532
      %v4719 = vpop.f32.mrf.mxu0
      %v4720 = vadd.f32 %v4489, %v4719
      %v4721 = vpop.f32.mrf.mxu0
      %4722 = vmatprep.mubr.f32.mxu0 0.0
      %4723 = vmatmul.mubr.f32.gmra.mxu0 %v4535
      %v4724 = vpop.f32.mrf.mxu0
      %v4725 = vadd.f32 %v4489, %v4724
      %v4726 = vpop.f32.mrf.mxu0
      %4727 = vmatprep.mubr.f32.mxu0 0.0
      %4728 = vmatmul.mubr.f32.gmra.mxu0 %v4538
      %v4729 = vpop.f32.mrf.mxu0
      %v4730 = vadd.f32 %v4489, %v4729
      %v4731 = vpop.f32.mrf.mxu0
      %4732 = vmatprep.mubr.f32.mxu0 0.0
      %4733 = vmatmul.mubr.f32.gmra.mxu0 %v4541
      %v4734 = vpop.f32.mrf.mxu0
      %v4735 = vadd.f32 %v4489, %v4734
      %v4736 = vpop.f32.mrf.mxu0
      %4737 = vmatprep.mubr.f32.mxu0 0.0
      %4738 = vmatmul.mubr.f32.gmra.mxu0 %v4544
      %v4739 = vpop.f32.mrf.mxu0
      %v4740 = vadd.f32 %v4489, %v4739
      %v4741 = vpop.f32.mrf.mxu0
      %4742 = vmatprep.mubr.f32.mxu0 0.0
      %4743 = vmatmul.mubr.f32.gmra.mxu0 %v4547
      %v4744 = vpop.f32.mrf.mxu0
      %v4745 = vadd.f32 %v4489, %v4744
      %v4746 = vpop.f32.mrf.mxu0
      %4747 = vmatprep.mubr.f32.mxu0 0.0
      %4748 = vmatmul.mubr.f32.gmra.mxu0 %v4550
      %v4749 = vpop.f32.mrf.mxu0
      %v4750 = vadd.f32 %v4489, %v4749
      %v4751 = vpop.f32.mrf.mxu0
      %4752 = vmatprep.mubr.f32.mxu0 0.0
      %4753 = vmatmul.mubr.f32.gmra.mxu0 %v4553
      %v4754 = vpop.f32.mrf.mxu0
      %v4755 = vadd.f32 %v4489, %v4754
      %v4756 = vpop.f32.mrf.mxu0
      %4757 = vmatprep.mubr.f32.mxu0 0.0
      %4758 = vmatmul.mubr.f32.gmra.mxu0 %v4556
      %v4759 = vpop.f32.mrf.mxu0
      %v4760 = vadd.f32 %v4489, %v4759
      %v4761 = vpop.f32.mrf.mxu0
      %4762 = vmatprep.mubr.f32.mxu0 0.0
      %4763 = vmatmul.mubr.f32.gmra.mxu0 %v4559
      %v4764 = vpop.f32.mrf.mxu0
      %v4765 = vadd.f32 %v4489, %v4764
      %v4766 = vpop.f32.mrf.mxu0
      %4767 = vmatprep.mubr.f32.mxu0 0.0
      %4768 = vmatmul.mubr.f32.gmra.mxu0 %v4562
      %v4769 = vpop.f32.mrf.mxu0
      %v4770 = vadd.f32 %v4489, %v4769
      %v4771 = vpop.f32.mrf.mxu0
      %4772 = vmatprep.mubr.f32.mxu0 0.0
      %4773 = vmatmul.mubr.f32.gmra.mxu0 %v4565
      %v4774 = vpop.f32.mrf.mxu0
      %v4775 = vadd.f32 %v4489, %v4774
      %v4776 = vpop.f32.mrf.mxu0
      %4777 = vmatprep.mubr.f32.mxu0 0.0
      %4778 = vmatmul.mubr.f32.gmra.mxu0 %v4568
      %v4779 = vpop.f32.mrf.mxu0
      %v4780 = vadd.f32 %v4489, %v4779
      %v4781 = vpop.f32.mrf.mxu0
      %4782 = vmatprep.mubr.f32.mxu0 0.0
      %4783 = vmatmul.mubr.f32.gmra.mxu0 %v4571
      %v4784 = vpop.f32.mrf.mxu0
      %v4785 = vadd.f32 %v4489, %v4784
      %v4786 = vpop.f32.mrf.mxu0
      %4787 = vmatprep.mubr.f32.mxu0 0.0
      %4788 = vmatmul.mubr.f32.gmra.mxu0 %v4574
      %v4789 = vpop.f32.mrf.mxu0
      %v4790 = vadd.f32 %v4489, %v4789
      %v4791 = vpop.f32.mrf.mxu0
      %4792 = vmatprep.mubr.f32.mxu0 0.0
      %4793 = vmatmul.mubr.f32.gmra.mxu0 %v4577
      %v4794 = vpop.f32.mrf.mxu0
      %v4795 = vadd.f32 %v4489, %v4794
      %v4796 = vpop.f32.mrf.mxu0
      %4797 = vmatprep.mubr.f32.mxu0 0.0
      %4798 = vmatmul.mubr.f32.gmra.mxu0 %v4580
      %v4799 = vpop.f32.mrf.mxu0
      %v4800 = vadd.f32 %v4489, %v4799
      %v4801 = vpop.f32.mrf.mxu0
      %4802 = vmatprep.mubr.f32.mxu0 0.0
      %4803 = vmatmul.mubr.f32.gmra.mxu0 %v4583
      %v4804 = vpop.f32.mrf.mxu0
      %v4805 = vadd.f32 %v4489, %v4804
      %v4806 = vpop.f32.mrf.mxu0
      %4807 = vmatprep.mubr.f32.mxu0 0.0
      %4808 = vmatmul.mubr.f32.gmra.mxu0 %v4586
      %v4809 = vpop.f32.mrf.mxu0
      %v4810 = vadd.f32 %v4489, %v4809
      %v4811 = vpop.f32.mrf.mxu0
      %4812 = vdwg.mxu0
      %v4813 = vadd.f32 %v4655, %v4660
      %v4814 = vadd.f32 %v4813, %v4665
      %v4815 = vadd.f32 %v4814, %v4670
      %v4816 = vadd.f32 %v4815, %v4675
      %v4817 = vadd.f32 %v4816, %v4680
      %v4818 = vadd.f32 %v4817, %v4685
      %v4819 = vadd.f32 %v4818, %v4690
      %v4820 = vadd.f32 %v4819, %v4695
      %v4821 = vadd.f32 %v4820, %v4700
      %v4822 = vadd.f32 %v4821, %v4705
      %v4823 = vadd.f32 %v4822, %v4710
      %v4824 = vadd.f32 %v4823, %v4715
      %v4825 = vadd.f32 %v4824, %v4720
      %v4826 = vadd.f32 %v4825, %v4725
      %v4827 = vadd.f32 %v4826, %v4730
      %v4828 = vadd.f32 %v4827, %v4735
      %v4829 = vadd.f32 %v4828, %v4740
      %v4830 = vadd.f32 %v4829, %v4745
      %v4831 = vadd.f32 %v4830, %v4750
      %v4832 = vadd.f32 %v4831, %v4755
      %v4833 = vadd.f32 %v4832, %v4760
      %v4834 = vadd.f32 %v4833, %v4765
      %v4835 = vadd.f32 %v4834, %v4770
      %v4836 = vadd.f32 %v4835, %v4775
      %v4837 = vadd.f32 %v4836, %v4780
      %v4838 = vadd.f32 %v4837, %v4785
      %v4839 = vadd.f32 %v4838, %v4790
      %v4840 = vadd.f32 %v4839, %v4795
      %v4841 = vadd.f32 %v4840, %v4800
      %v4842 = vadd.f32 %v4841, %v4805
      %v4843 = vadd.f32 %v4842, %v4810
      %v4844 = vrot.slane %v4843, 4
      %v4845 = vadd.f32 %v4843, %v4844
      %v4846 = vrot.slane %v4845, 2
      %v4847 = vadd.f32 %v4845, %v4846
      %v4848 = vrot.slane %v4847, 1
      %v4849 = vadd.f32 %v4847, %v4848
      %v4850 = vmul.f32 %v4849, 0.00390625
      %v4851 = vld [vmem:[%s7] sm:$0xff]
      %v4852 = vld [vmem:[%s7 + $0x8] sm:$0xff]
      %v4853 = vld [vmem:[%s7 + $0x10] sm:$0xff]
      %v4854 = vld [vmem:[%s7 + $0x18] sm:$0xff]
      %v4855 = vld [vmem:[%s7 + $0x20] sm:$0xff]
      %v4856 = vld [vmem:[%s7 + $0x28] sm:$0xff]
      %v4857 = vld [vmem:[%s7 + $0x30] sm:$0xff]
      %v4858 = vld [vmem:[%s7 + $0x38] sm:$0xff]
      %v4859 = vld [vmem:[%s7 + $0x40] sm:$0xff]
      %v4860 = vld [vmem:[%s7 + $0x48] sm:$0xff]
      %v4861 = vld [vmem:[%s7 + $0x50] sm:$0xff]
      %v4862 = vld [vmem:[%s7 + $0x58] sm:$0xff]
      %v4863 = vld [vmem:[%s7 + $0x60] sm:$0xff]
      %v4864 = vld [vmem:[%s7 + $0x68] sm:$0xff]
      %v4865 = vld [vmem:[%s7 + $0x70] sm:$0xff]
      %v4866 = vld [vmem:[%s7 + $0x78] sm:$0xff]
      %v4867 = vld [vmem:[%s8] sm:$0x1]
      %4868 = vmatprep.subr.mxu0 0.0
      %4869 = vmatpush1.msra.mxu0 %v4866
      %4870 = vmatprep.subr.mxu0 0.0
      %4871 = vmatpush1.msra.mxu0 %v4865
      %4872 = vmatprep.subr.mxu0 0.0
      %4873 = vmatpush1.msra.mxu0 %v4864
      %4874 = vmatprep.subr.mxu0 0.0
      %4875 = vmatpush1.msra.mxu0 %v4863
      %4876 = vmatprep.subr.mxu0 0.0
      %4877 = vmatpush1.msra.mxu0 %v4862
      %4878 = vmatprep.subr.mxu0 0.0
      %4879 = vmatpush1.msra.mxu0 %v4861
      %4880 = vmatprep.subr.mxu0 0.0
      %4881 = vmatpush1.msra.mxu0 %v4860
      %4882 = vmatprep.subr.mxu0 0.0
      %4883 = vmatpush1.msra.mxu0 %v4859
      %4884 = vmatprep.subr.mxu0 0.0
      %4885 = vmatpush1.msra.mxu0 %v4858
      %4886 = vmatprep.subr.mxu0 0.0
      %4887 = vmatpush1.msra.mxu0 %v4857
      %4888 = vmatprep.subr.mxu0 0.0
      %4889 = vmatpush1.msra.mxu0 %v4856
      %4890 = vmatprep.subr.mxu0 0.0
      %4891 = vmatpush1.msra.mxu0 %v4855
      %4892 = vmatprep.subr.mxu0 0.0
      %4893 = vmatpush1.msra.mxu0 %v4854
      %4894 = vmatprep.subr.mxu0 0.0
      %4895 = vmatpush1.msra.mxu0 %v4853
      %4896 = vmatprep.subr.mxu0 0.0
      %4897 = vmatpush1.msra.mxu0 %v4852
      %4898 = vmatprep.subr.mxu0 0.0
      %4899 = vmatpush1.msra.mxu0 %v4851
      %4900 = vmatprep.subr.mxu0 0.0
      %4901 = vmatpush2.msra.mxu0 0.0
      %4902 = vmatprep.subr.mxu0 0.0
      %4903 = vmatpush2.msra.mxu0 0.0
      %4904 = vmatprep.subr.mxu0 0.0
      %4905 = vmatpush2.msra.mxu0 0.0
      %4906 = vmatprep.subr.mxu0 0.0
      %4907 = vmatpush2.msra.mxu0 0.0
      %4908 = vmatprep.subr.mxu0 0.0
      %4909 = vmatpush2.msra.mxu0 0.0
      %4910 = vmatprep.subr.mxu0 0.0
      %4911 = vmatpush2.msra.mxu0 0.0
      %4912 = vmatprep.subr.mxu0 0.0
      %4913 = vmatpush2.msra.mxu0 0.0
      %4914 = vmatprep.subr.mxu0 0.0
      %4915 = vmatpush2.msra.mxu0 0.0
      %4916 = vmatprep.subr.mxu0 0.0
      %4917 = vmatpush2.msra.mxu0 0.0
      %4918 = vmatprep.subr.mxu0 0.0
      %4919 = vmatpush2.msra.mxu0 0.0
      %4920 = vmatprep.subr.mxu0 0.0
      %4921 = vmatpush2.msra.mxu0 0.0
      %4922 = vmatprep.subr.mxu0 0.0
      %4923 = vmatpush2.msra.mxu0 0.0
      %4924 = vmatprep.subr.mxu0 0.0
      %4925 = vmatpush2.msra.mxu0 0.0
      %4926 = vmatprep.subr.mxu0 0.0
      %4927 = vmatpush2.msra.mxu0 0.0
      %4928 = vmatprep.subr.mxu0 0.0
      %4929 = vmatpush2.msra.mxu0 0.0
      %4930 = vmatprep.subr.mxu0 0.0
      %4931 = vmatpush2.msra.mxu0 0.0
      %4932 = vmatprep.mubr.f32.mxu0 0.0
      %4933 = vmatmul.mubr.f32.gmra.mxu0 %v4850
      %v4934 = vpop.f32.mrf.mxu0
      %v4935 = vadd.f32 %v4867, %v4934
      %v4936 = vpop.f32.mrf.mxu0
      %4937 = vdwg.mxu0
      %s4938 = sld [smem:[#allocation4]]
      %vm4939 = vcmp.ge.f32.partialorder %v4935, 0.0
      %v4940 = vstv %s4938
      %v4941 = vmul.f32 %v4940, %v4935
      %v4942 = vsel %vm4939, %v4935, %v4941
      %v4943 = vld [vmem:[%s10] sm:$0xff]
      %v4944 = vld [vmem:[%s10 + $0x8] sm:$0xff]
      %v4945 = vld [vmem:[%s11] sm:$0x1]
      %v4947 = vsel %vm2280, %v4942, 0
      %4949 = vmatprep.subr.mxu0 0.0
      %4950 = vmatpush1.msra.mxu0 0.0
      %4951 = vmatprep.subr.mxu0 0.0
      %4952 = vmatpush1.msra.mxu0 0.0
      %4953 = vmatprep.subr.mxu0 0.0
      %4954 = vmatpush1.msra.mxu0 0.0
      %4955 = vmatprep.subr.mxu0 0.0
      %4956 = vmatpush1.msra.mxu0 0.0
      %4957 = vmatprep.subr.mxu0 0.0
      %4958 = vmatpush1.msra.mxu0 0.0
      %4959 = vmatprep.subr.mxu0 0.0
      %4960 = vmatpush1.msra.mxu0 0.0
      %4961 = vmatprep.subr.mxu0 0.0
      %4962 = vmatpush1.msra.mxu0 0.0
      %4963 = vmatprep.subr.mxu0 0.0
      %4964 = vmatpush1.msra.mxu0 0.0
      %4965 = vmatprep.subr.mxu0 0.0
      %4966 = vmatpush1.msra.mxu0 0.0
      %4967 = vmatprep.subr.mxu0 0.0
      %4968 = vmatpush1.msra.mxu0 0.0
      %4969 = vmatprep.subr.mxu0 0.0
      %4970 = vmatpush1.msra.mxu0 0.0
      %4971 = vmatprep.subr.mxu0 0.0
      %4972 = vmatpush1.msra.mxu0 0.0
      %4973 = vmatprep.subr.mxu0 0.0
      %4974 = vmatpush1.msra.mxu0 0.0
      %4975 = vmatprep.subr.mxu0 0.0
      %4976 = vmatpush1.msra.mxu0 0.0
      %4977 = vmatprep.subr.mxu0 0.0
      %4978 = vmatpush1.msra.mxu0 %v4944
      %4979 = vmatprep.subr.mxu0 0.0
      %4980 = vmatpush1.msra.mxu0 %v4943
      %4981 = vmatprep.subr.mxu0 0.0
      %4982 = vmatpush2.msra.mxu0 0.0
      %4983 = vmatprep.subr.mxu0 0.0
      %4984 = vmatpush2.msra.mxu0 0.0
      %4985 = vmatprep.subr.mxu0 0.0
      %4986 = vmatpush2.msra.mxu0 0.0
      %4987 = vmatprep.subr.mxu0 0.0
      %4988 = vmatpush2.msra.mxu0 0.0
      %4989 = vmatprep.subr.mxu0 0.0
      %4990 = vmatpush2.msra.mxu0 0.0
      %4991 = vmatprep.subr.mxu0 0.0
      %4992 = vmatpush2.msra.mxu0 0.0
      %4993 = vmatprep.subr.mxu0 0.0
      %4994 = vmatpush2.msra.mxu0 0.0
      %4995 = vmatprep.subr.mxu0 0.0
      %4996 = vmatpush2.msra.mxu0 0.0
      %4997 = vmatprep.subr.mxu0 0.0
      %4998 = vmatpush2.msra.mxu0 0.0
      %4999 = vmatprep.subr.mxu0 0.0
      %5000 = vmatpush2.msra.mxu0 0.0
      %5001 = vmatprep.subr.mxu0 0.0
      %5002 = vmatpush2.msra.mxu0 0.0
      %5003 = vmatprep.subr.mxu0 0.0
      %5004 = vmatpush2.msra.mxu0 0.0
      %5005 = vmatprep.subr.mxu0 0.0
      %5006 = vmatpush2.msra.mxu0 0.0
      %5007 = vmatprep.subr.mxu0 0.0
      %5008 = vmatpush2.msra.mxu0 0.0
      %5009 = vmatprep.subr.mxu0 0.0
      %5010 = vmatpush2.msra.mxu0 0.0
      %5011 = vmatprep.subr.mxu0 0.0
      %5012 = vmatpush2.msra.mxu0 0.0
      %5013 = vmatprep.mubr.f32.mxu0 0.0
      %5014 = vmatmul.mubr.f32.gmra.mxu0 %v4947
      %v5015 = vpop.f32.mrf.mxu0
      %v5016 = vadd.f32 %v4945, %v5015
      %v5017 = vpop.f32.mrf.mxu0
      %5018 = vdwg.mxu0
      %v5019 = vxor.u32 %v5016, 2147483648
      %v5020 = vmul.f32 %v5019, 1.442695
      %v5021 = vpow.pop %v5020
      %v5022 = vadd.f32 %v5021, 1.0
      %v5023 = vrcp.pop %v5022
      %v5024 = vmul.f32 1.0, %v5023
      %v5025 = vlaneseq
      %v5026 = vshrl.u32 %v5025, 7
      %v5027 = vsub.s32 0, %v5026
      %v5028 = vrot.slane %v5024, %v5027
      %v5029 = vmul.f32 %v4655, %v5028
      %v5030 = vmul.f32 %v4660, %v5028
      %v5031 = vmul.f32 %v4665, %v5028
      %v5032 = vmul.f32 %v4670, %v5028
      %v5033 = vmul.f32 %v4675, %v5028
      %v5034 = vmul.f32 %v4680, %v5028
      %v5035 = vmul.f32 %v4685, %v5028
      %v5036 = vmul.f32 %v4690, %v5028
      %v5037 = vmul.f32 %v4695, %v5028
      %v5038 = vmul.f32 %v4700, %v5028
      %v5039 = vmul.f32 %v4705, %v5028
      %v5040 = vmul.f32 %v4710, %v5028
      %v5041 = vmul.f32 %v4715, %v5028
      %v5042 = vmul.f32 %v4720, %v5028
      %v5043 = vmul.f32 %v4725, %v5028
      %v5044 = vmul.f32 %v4730, %v5028
      %v5045 = vmul.f32 %v4735, %v5028
      %v5046 = vmul.f32 %v4740, %v5028
      %v5047 = vmul.f32 %v4745, %v5028
      %v5048 = vmul.f32 %v4750, %v5028
      %v5049 = vmul.f32 %v4755, %v5028
      %v5050 = vmul.f32 %v4760, %v5028
      %v5051 = vmul.f32 %v4765, %v5028
      %v5052 = vmul.f32 %v4770, %v5028
      %v5053 = vmul.f32 %v4775, %v5028
      %v5054 = vmul.f32 %v4780, %v5028
      %v5055 = vmul.f32 %v4785, %v5028
      %v5056 = vmul.f32 %v4790, %v5028
      %v5057 = vmul.f32 %v4795, %v5028
      %v5058 = vmul.f32 %v4800, %v5028
      %v5059 = vmul.f32 %v4805, %v5028
      %v5060 = vmul.f32 %v4810, %v5028
      %v5061 = vadd.f32 %v5029, %v623
      %v5062 = vadd.f32 %v5030, %v628
      %v5063 = vadd.f32 %v5031, %v633
      %v5064 = vadd.f32 %v5032, %v638
      %v5065 = vadd.f32 %v5033, %v643
      %v5066 = vadd.f32 %v5034, %v648
      %v5067 = vadd.f32 %v5035, %v653
      %v5068 = vadd.f32 %v5036, %v658
      %v5069 = vadd.f32 %v5037, %v663
      %v5070 = vadd.f32 %v5038, %v668
      %v5071 = vadd.f32 %v5039, %v673
      %v5072 = vadd.f32 %v5040, %v678
      %v5073 = vadd.f32 %v5041, %v683
      %v5074 = vadd.f32 %v5042, %v688
      %v5075 = vadd.f32 %v5043, %v693
      %v5076 = vadd.f32 %v5044, %v698
      %v5077 = vadd.f32 %v5045, %v703
      %v5078 = vadd.f32 %v5046, %v708
      %v5079 = vadd.f32 %v5047, %v713
      %v5080 = vadd.f32 %v5048, %v718
      %v5081 = vadd.f32 %v5049, %v723
      %v5082 = vadd.f32 %v5050, %v728
      %v5083 = vadd.f32 %v5051, %v733
      %v5084 = vadd.f32 %v5052, %v738
      %v5085 = vadd.f32 %v5053, %v743
      %v5086 = vadd.f32 %v5054, %v748
      %v5087 = vadd.f32 %v5055, %v753
      %v5088 = vadd.f32 %v5056, %v758
      %v5089 = vadd.f32 %v5057, %v763
      %v5090 = vadd.f32 %v5058, %v768
      %v5091 = vadd.f32 %v5059, %v773
      %v5092 = vadd.f32 %v5060, %v778
      %v5093 = vmax.f32 %v5061, 0.0
      %v5094 = vmax.f32 %v5062, 0.0
      %v5095 = vmax.f32 %v5063, 0.0
      %v5096 = vmax.f32 %v5064, 0.0
      %v5097 = vmax.f32 %v5065, 0.0
      %v5098 = vmax.f32 %v5066, 0.0
      %v5099 = vmax.f32 %v5067, 0.0
      %v5100 = vmax.f32 %v5068, 0.0
      %v5101 = vmax.f32 %v5069, 0.0
      %v5102 = vmax.f32 %v5070, 0.0
      %v5103 = vmax.f32 %v5071, 0.0
      %v5104 = vmax.f32 %v5072, 0.0
      %v5105 = vmax.f32 %v5073, 0.0
      %v5106 = vmax.f32 %v5074, 0.0
      %v5107 = vmax.f32 %v5075, 0.0
      %v5108 = vmax.f32 %v5076, 0.0
      %v5109 = vmax.f32 %v5077, 0.0
      %v5110 = vmax.f32 %v5078, 0.0
      %v5111 = vmax.f32 %v5079, 0.0
      %v5112 = vmax.f32 %v5080, 0.0
      %v5113 = vmax.f32 %v5081, 0.0
      %v5114 = vmax.f32 %v5082, 0.0
      %v5115 = vmax.f32 %v5083, 0.0
      %v5116 = vmax.f32 %v5084, 0.0
      %v5117 = vmax.f32 %v5085, 0.0
      %v5118 = vmax.f32 %v5086, 0.0
      %v5119 = vmax.f32 %v5087, 0.0
      %v5120 = vmax.f32 %v5088, 0.0
      %v5121 = vmax.f32 %v5089, 0.0
      %v5122 = vmax.f32 %v5090, 0.0
      %v5123 = vmax.f32 %v5091, 0.0
      %v5124 = vmax.f32 %v5092, 0.0
      %5125 = vxpose.xlu0.b32.start [1/16] %v5093, 128
      %5126 = vxpose.xlu0.b32.cont [2/16] %v5094, 128
      %5127 = vxpose.xlu0.b32.cont [3/16] %v5095, 128
      %5128 = vxpose.xlu0.b32.cont [4/16] %v5096, 128
      %5129 = vxpose.xlu0.b32.cont [5/16] %v5097, 128
      %5130 = vxpose.xlu0.b32.cont [6/16] %v5098, 128
      %5131 = vxpose.xlu0.b32.cont [7/16] %v5099, 128
      %5132 = vxpose.xlu0.b32.cont [8/16] %v5100, 128
      %5133 = vxpose.xlu0.b32.cont [9/16] %v5101, 128
      %5134 = vxpose.xlu0.b32.cont [10/16] %v5102, 128
      %5135 = vxpose.xlu0.b32.cont [11/16] %v5103, 128
      %5136 = vxpose.xlu0.b32.cont [12/16] %v5104, 128
      %5137 = vxpose.xlu0.b32.cont [13/16] %v5105, 128
      %5138 = vxpose.xlu0.b32.cont [14/16] %v5106, 128
      %5139 = vxpose.xlu0.b32.cont [15/16] %v5107, 128
      %5140 = vxpose.xlu0.b32.end [16/16] %v5108, 128
      %v5141 = vpop.trf.xlu0
      %v5142 = vpop.trf.xlu0
      %v5143 = vpop.trf.xlu0
      %v5144 = vpop.trf.xlu0
      %v5145 = vpop.trf.xlu0
      %v5146 = vpop.trf.xlu0
      %v5147 = vpop.trf.xlu0
      %v5148 = vpop.trf.xlu0
      %v5149 = vpop.trf.xlu0
      %v5150 = vpop.trf.xlu0
      %v5151 = vpop.trf.xlu0
      %v5152 = vpop.trf.xlu0
      %v5153 = vpop.trf.xlu0
      %v5154 = vpop.trf.xlu0
      %v5155 = vpop.trf.xlu0
      %v5156 = vpop.trf.xlu0
      %5157 = vxpose.xlu0.b32.start [1/16] %v5109, 128
      %5158 = vxpose.xlu0.b32.cont [2/16] %v5110, 128
      %5159 = vxpose.xlu0.b32.cont [3/16] %v5111, 128
      %5160 = vxpose.xlu0.b32.cont [4/16] %v5112, 128
      %5161 = vxpose.xlu0.b32.cont [5/16] %v5113, 128
      %5162 = vxpose.xlu0.b32.cont [6/16] %v5114, 128
      %5163 = vxpose.xlu0.b32.cont [7/16] %v5115, 128
      %5164 = vxpose.xlu0.b32.cont [8/16] %v5116, 128
      %5165 = vxpose.xlu0.b32.cont [9/16] %v5117, 128
      %5166 = vxpose.xlu0.b32.cont [10/16] %v5118, 128
      %5167 = vxpose.xlu0.b32.cont [11/16] %v5119, 128
      %5168 = vxpose.xlu0.b32.cont [12/16] %v5120, 128
      %5169 = vxpose.xlu0.b32.cont [13/16] %v5121, 128
      %5170 = vxpose.xlu0.b32.cont [14/16] %v5122, 128
      %5171 = vxpose.xlu0.b32.cont [15/16] %v5123, 128
      %5172 = vxpose.xlu0.b32.end [16/16] %v5124, 128
      %v5173 = vpop.trf.xlu0
      %v5174 = vpop.trf.xlu0
      %v5175 = vpop.trf.xlu0
      %v5176 = vpop.trf.xlu0
      %v5177 = vpop.trf.xlu0
      %v5178 = vpop.trf.xlu0
      %v5179 = vpop.trf.xlu0
      %v5180 = vpop.trf.xlu0
      %v5181 = vpop.trf.xlu0
      %v5182 = vpop.trf.xlu0
      %v5183 = vpop.trf.xlu0
      %v5184 = vpop.trf.xlu0
      %v5185 = vpop.trf.xlu0
      %v5186 = vpop.trf.xlu0
      %v5187 = vpop.trf.xlu0
      %v5188 = vpop.trf.xlu0
      %5189 = vst [vmem:[%s414] sm:$0xff] %v5141
      %5190 = vst [vmem:[%s414 + $0x8] sm:$0xff] %v5173
      %p5191 = scmp.lt.s32.totalorder %s24, 1
      %s5192 = scalar_select %p5191, %s24, 1
      %s5193 = smul.addr %s5192, 2
      %s5194 = smul.addr %s5193, 8
      %s5195 = scalar_lea.vmem %s12, %s5194
      // Predicated region
      $region69: #{ice_se_basic_block.1} parent=67 // pred_check
        %p5196 = pneg %p299
      $region70: #{ice_se_basic_block.1} parent=67 // pred_check_branch
        %5198 = sbr.rel (%p5196) target = $region72
      $region71: #{ice_se_basic_block.1} parent=67 // pred_region
        _
      $region72: #{ice_se_basic_block.1} parent=67 // pred_fallthru
        _
    $region68: #{ice_se_basic_block.1} parent=5 // pred_fallthru
      _
    %p5199 = scmp.le.s32.totalorder 2, %s19
    // Predicated region
    $region73: #{ice_se_basic_block.1} parent=5 // pred_check
      %p5200 = pneg %p5199
    $region74: #{ice_se_basic_block.1} parent=5 // pred_check_branch
      %5202 = sbr.rel (%p5200) target = $region76
    $region75: #{ice_se_basic_block.1} parent=5 // pred_region
      %s5203 = ssub.s32 %s19, 2
      // Predicated region
      $region77: #{ice_se_basic_block.1} parent=75 // pred_check
        %p5204 = pneg %p305
      $region78: #{ice_se_basic_block.1} parent=75 // pred_check_branch
        %5206 = sbr.rel (%p5204) target = $region80
      $region79: #{ice_se_basic_block.1} parent=75 // pred_region
        %p5207 = scmp.lt.s32.totalorder %s25, 1
        %s5208 = scalar_select %p5207, %s25, 1
        %s5209 = smul.addr %s5208, 2
        %s5210 = smul.addr %s5209, 8
        %s5211 = scalar_lea.vmem %s12, %s5210
      $region80: #{ice_se_basic_block.1} parent=75 // pred_fallthru
        _
    $region76: #{ice_se_basic_block.1} parent=5 // pred_fallthru
      _
  $region6: #{ice_se_basic_block.1} parent=0 // loop_footer
    %s23 = sadd.s32 1, %s19
  $region7: #{ice_se_basic_block.1} parent=0 // loop_footer_branch
    %18 = sbr.rel target = $region3
  $region8: #{ice_se_basic_block.1} parent=0 // loop_exit
    _

</llo_original>
